<compile_context>
chip_gen: v7x
topology: tpu7x:2x2x1
jax: 0.10.0
libtpu: 0.0.40
codegen_flags: <defaults>
</compile_context>

<pallas_src>
import math
from functools import partial

import jax
import jax.numpy as jnp
from jax import lax
from jax.experimental import pallas as pl
from jax.experimental.pallas import tpu as pltpu

_NEG_INF = -1e9
_LN_EPS = 1e-5  # PyTorch nn.LayerNorm default


# ----------------------------------------------------------------------------
# Node-tile selection
# ----------------------------------------------------------------------------

def _pick_node_tile(N, T, D, K, itemsize=4, budget_bytes=8 << 20, r_cap=512):
    """Largest divisor of N whose per-step VMEM footprint fits the budget.

    The per-head attention is computed as one (R, R) block-diagonal matmul
    (R = TN*T), so capping R also bounds the wasted off-diagonal flops.
    """
    best = 1
    for tn in range(1, N + 1):
        if N % tn:
            continue
        R = tn * T
        if R > r_cap:
            break
        if (R % 8) and tn != N:          # (8,128) sublane rule for the block
            continue
        io = 3 * R * D * itemsize * 2            # q, kv, out blocks (dbl buf)
        bias = R * R * itemsize * 2              # additive mask block
        scratch = (R * K * D + 4 * R * D + 2 * R * R) * itemsize
        if io + bias + scratch <= budget_bytes:
            best = tn
    return best


# ----------------------------------------------------------------------------
# Fused layer kernel: causal-conv q/k + linear v + MHA + output linear (+ LN)
# ----------------------------------------------------------------------------

def _make_layer_kernel(TN, T, D, h, K, apply_ln, compute_dtype):
    dk = D // h
    R = TN * T
    inv_sqrt_dk = 1.0 / math.sqrt(dk)
    cdt = compute_dtype

    def kernel(q_ref, kv_ref, bias_ref,
               wq_ref, bq_ref, wk_ref, bk_ref,
               wv_ref, bv_ref, wo_ref, bo_ref,
               g_ref, beta_ref, o_ref):
        xq = q_ref[0, 0]          # (R, D)  query stream block
        xkv = kv_ref[0, 0]        # (R, D)  memory block (key == value source)
        bias = bias_ref[0]        # (R, R)  additive: 0 = keep, -1e9 = masked

        def causal_conv(x2d, w_ref, b_ref):
            # tap k reads x[:, t - (K-1) + k, :] (zero when index < 0).
            # Build the im2col slab (R, K*D) in registers and do ONE matmul.
            x3d = x2d.reshape(TN, T, D)
            cols = []
            for k in range(K):
                s = K - 1 - k
                if s == 0:
                    xs = x3d
                else:
                    xs = jnp.concatenate(
                        [jnp.zeros((TN, s, D), x3d.dtype), x3d[:, :T - s, :]],
                        axis=1)
                cols.append(xs)
            xi = jnp.concatenate(cols, axis=-1).reshape(R, K * D)
            return (jnp.dot(xi.astype(cdt), w_ref[0].astype(cdt),
                            preferred_element_type=jnp.float32)
                    + b_ref[0])

        q2d = causal_conv(xq, wq_ref, bq_ref)                        # (R, D)
        k2d = causal_conv(xkv, wk_ref, bk_ref)                       # (R, D)
        v2d = (jnp.dot(xkv.astype(cdt), wv_ref[0].astype(cdt),
                       preferred_element_type=jnp.float32)
               + bv_ref[0])                                          # (R, D)

        # Per-(node, head) attention, batched over the TN nodes of this block
        # via a block-diagonal additive bias -> two well-shaped matmuls per
        # head instead of 2*TN tiny (T x T) ones.
        # NOTE: a fully-masked row degrades differently than the torch module
        # (uniform over R instead of T); never happens with a causal mask.
        k2dT = k2d.T                                                 # (D, R)
        ctx_heads = []
        for head in range(h):
            sl = slice(head * dk, (head + 1) * dk)
            qh = q2d[:, sl].astype(cdt)                              # (R, dk)
            khT = k2dT[sl, :].astype(cdt)                            # (dk, R)
            vh = v2d[:, sl].astype(cdt)                              # (R, dk)
            s = jnp.dot(qh, khT, preferred_element_type=jnp.float32)
            s = s * inv_sqrt_dk + bias
            s_max = jnp.max(s, axis=-1, keepdims=True)
            e = jnp.exp(s - s_max)
            p = e * pl.reciprocal(jnp.sum(e, axis=-1, keepdims=True),
                                  approx=True)
            ctx_heads.append(jnp.dot(p.astype(cdt), vh,
                                     preferred_element_type=jnp.float32))
        ctx = jnp.concatenate(ctx_heads, axis=-1)                    # (R, D)

        out = (jnp.dot(ctx.astype(cdt), wo_ref[0].astype(cdt),
                       preferred_element_type=jnp.float32)
               + bo_ref[0])                                          # (R, D)

        if apply_ln:  # Decoder's final LayerNorm, fused into the last layer.
            mu = jnp.mean(out, axis=-1, keepdims=True)
            var = jnp.mean(jnp.square(out - mu), axis=-1, keepdims=True)
            out = (out - mu) * lax.rsqrt(var + _LN_EPS) * g_ref[0] \
                + beta_ref[0]

        o_ref[0, 0] = out.astype(o_ref.dtype)

    return kernel


def fused_decoder_layer(lp, q, kv, bias, *, T, h, K, TN,
                        ln_scale, ln_bias, apply_ln=False,
                        compute_dtype=jnp.float32):
    """One decoder layer (BOTH streams) as a single fused Pallas call.

    q, kv : (2, B, N*T, D)   stream-stacked activations / memory
    bias  : (B, R, R)        precomputed additive attention bias, R = TN*T
    lp    : dict of stream-stacked weights, e.g. wq (2, K*D, D), bq (2, 1, D)
    """
    S, B, NT, D = q.shape
    assert kv.shape == q.shape and S == 2
    R = TN * T
    assert NT % R == 0 and D % h == 0 and K <= T

    kernel = _make_layer_kernel(TN, T, D, h, K, apply_ln, compute_dtype)

    x_spec = pl.BlockSpec((1, 1, R, D), lambda s, b, n: (s, b, n, 0))
    bias_spec = pl.BlockSpec((1, R, R), lambda s, b, n: (b, 0, 0))

    def w_spec(arr):
        blk = (1,) + arr.shape[1:]
        nz = arr.ndim - 1
        return pl.BlockSpec(blk, lambda s, b, n, _nz=nz: (s,) + (0,) * _nz)

    in_specs = [
        x_spec, x_spec, bias_spec,
        w_spec(lp["wq"]), w_spec(lp["bq"]),
        w_spec(lp["wk"]), w_spec(lp["bk"]),
        w_spec(lp["wv"]), w_spec(lp["bv"]),
        w_spec(lp["wo"]), w_spec(lp["bo"]),
        w_spec(ln_scale), w_spec(ln_bias),
    ]

    return pl.pallas_call(
        kernel,
        out_shape=jax.ShapeDtypeStruct((S, B, NT, D), jnp.float32),
        grid=(S, B, NT // R),
        in_specs=in_specs,
        out_specs=x_spec,
        compiler_params=pltpu.CompilerParams(
            dimension_semantics=("parallel", "parallel", "parallel")),
    )(q, kv, bias,
      lp["wq"], lp["bq"], lp["wk"], lp["bk"],
      lp["wv"], lp["bv"], lp["wo"], lp["bo"],
      ln_scale, ln_bias)


# ----------------------------------------------------------------------------
# Decoder forward
# ----------------------------------------------------------------------------

@partial(jax.jit, static_argnames=("h", "kernel_size"))
def decoder_forward(params, x, x2, memory, memory2, mask, h, kernel_size):
    # TODO(synk): the DecoderLayer internals are not part of the provided spec;
    # each layer here applies the (previously validated) attention-aware
    # temporal-context block with query = stream and key = value = memory to
    # both streams.  The final Decoder LayerNorms are fused into the last
    # layer's Pallas kernel (apply_ln=True), so no extra launch is needed.
    B, N, T, D = x.shape
    K = kernel_size
    TN = _pick_node_tile(N, T, D, K)
    R = TN * T

    if mask is None:
        mask = jnp.ones((B, T, T), jnp.float32)
    mask = mask.astype(jnp.float32)

    # Precompute the additive attention bias once for the whole forward:
    # keep = (same node within the TN-node block) AND (user mask != 0).
    node_keep = jnp.kron(jnp.eye(TN, dtype=jnp.float32),
                         jnp.ones((T, T), jnp.float32))             # (R, R)
    mask_full = jnp.tile(mask, (1, TN, TN))                         # (B, R, R)
    keep = jnp.logical_and(node_keep[None, :, :] != 0, mask_full != 0)
    bias = jnp.where(keep, 0.0, _NEG_INF).astype(jnp.float32)

    # Stack the two independent streams once; layers chain on the stacked slab.
    q = jnp.stack([x.reshape(B, N * T, D), x2.reshape(B, N * T, D)])
    kv = jnp.stack([memory.reshape(B, N * T, D),
                    memory2.reshape(B, N * T, D)])
    ln_g = jnp.stack([params["norm1_g"], params["norm2_g"]])        # (2, 1, D)
    ln_b = jnp.stack([params["norm1_b"], params["norm2_b"]])

    layers = params["layers"]
    n_layers = len(layers)
    for li, lp in enumerate(layers):
        q = fused_decoder_layer(
            lp, q, kv, bias, T=T, h=h, K=K, TN=TN,
            ln_scale=ln_g, ln_bias=ln_b, apply_ln=(li == n_layers - 1))

    return q[0].reshape(B, N, T, D), q[1].reshape(B, N, T, D)


# ----------------------------------------------------------------------------
# Parameter init (PyTorch shapes) + pure-JAX reference for validation
# ----------------------------------------------------------------------------

def init_decoder_params(rng, d_model, kernel_size, n_layers):
    D, K = d_model, kernel_size
    s = 1.0 / math.sqrt(D)

    def u(key, shape):
        return jax.random.uniform(key, shape, jnp.float32, -s, s)

    def stream_params(key):
        ks = jax.random.split(key, 8)
        return {
            # Conv2d(d_model, d_model, (1, K)): weight (O, I, 1, K), bias (O,)
            "conv_q_w": u(ks[0], (D, D, 1, K)), "conv_q_b": u(ks[1], (D,)),
            "conv_k_w": u(ks[2], (D, D, 1, K)), "conv_k_b": u(ks[3], (D,)),
            # Linear(d_model, d_model): weight (O, I), bias (O,)
            "lin_v_w": u(ks[4], (D, D)), "lin_v_b": u(ks[5], (D,)),
            "lin_o_w": u(ks[6], (D, D)), "lin_o_b": u(ks[7], (D,)),
        }

    keys = jax.random.split(rng, 2 * n_layers)
    pt = {
        "layers": [{"s1": stream_params(keys[2 * i]),
                    "s2": stream_params(keys[2 * i + 1])}
                   for i in range(n_layers)],
        # nn.LayerNorm default init: weight = 1, bias = 0
        "norm1_g": jnp.ones((D,), jnp.float32),
        "norm1_b": jnp.zeros((D,), jnp.float32),
        "norm2_g": jnp.ones((D,), jnp.float32),
        "norm2_b": jnp.zeros((D,), jnp.float32),
    }

    def conv_to_cat(w):   # (O, I, 1, K) -> im2col weight (K*I, O)
        return jnp.transpose(w[:, :, 0, :], (2, 1, 0)).reshape(K * D, D)

    def stream_kernel(sp):
        return {
            "wq": conv_to_cat(sp["conv_q_w"]), "bq": sp["conv_q_b"].reshape(1, D),
            "wk": conv_to_cat(sp["conv_k_w"]), "bk": sp["conv_k_b"].reshape(1, D),
            "wv": sp["lin_v_w"].T, "bv": sp["lin_v_b"].reshape(1, D),
            "wo": sp["lin_o_w"].T, "bo": sp["lin_o_b"].reshape(1, D),
        }

    def stacked_layer(l):
        s1 = stream_kernel(l["s1"])
        s2 = stream_kernel(l["s2"])
        return {k: jnp.stack([s1[k], s2[k]]) for k in s1}

    kern = {
        "layers": [stacked_layer(l) for l in pt["layers"]],
        "norm1_g": pt["norm1_g"].reshape(1, D),
        "norm1_b": pt["norm1_b"].reshape(1, D),
        "norm2_g": pt["norm2_g"].reshape(1, D),
        "norm2_b": pt["norm2_b"].reshape(1, D),
    }
    return pt, kern


def _ref_layer(sp, q_in, k_in, v_in, mask, h, K):
    B, N, T, D = q_in.shape
    dk = D // h
    pad = K - 1

    def conv_branch(x, w, b):
        x_nchw = jnp.transpose(x, (0, 3, 1, 2))                     # (B, D, N, T)
        y = lax.conv_general_dilated(
            x_nchw, w, window_strides=(1, 1),
            padding=((0, 0), (pad, pad)),
            dimension_numbers=("NCHW", "OIHW", "NCHW"))
        y = y + b[None, :, None, None]
        y = y[:, :, :, :T]                                          # trim right pad
        return jnp.transpose(y, (0, 2, 3, 1))                       # (B, N, T, D)

    q = conv_branch(q_in, sp["conv_q_w"], sp["conv_q_b"])
    k = conv_branch(k_in, sp["conv_k_w"], sp["conv_k_b"])
    v = v_in @ sp["lin_v_w"].T + sp["lin_v_b"]

    def split(x):
        return x.reshape(B, N, T, h, dk).transpose(0, 1, 3, 2, 4)

    qh, kh, vh = split(q), split(k), split(v)
    s = jnp.einsum("bnhtd,bnhsd->bnhts", qh, kh) / math.sqrt(dk)
    s = jnp.where(mask[:, None, None, :, :] == 0, _NEG_INF, s)
    p = jax.nn.softmax(s, axis=-1)
    ctx = jnp.einsum("bnhts,bnhsd->bnhtd", p, vh)
    ctx = ctx.transpose(0, 1, 3, 2, 4).reshape(B, N, T, D)
    return ctx @ sp["lin_o_w"].T + sp["lin_o_b"]


def _ref_layernorm(x, g, b):
    mu = jnp.mean(x, axis=-1, keepdims=True)
    var = jnp.mean(jnp.square(x - mu), axis=-1, keepdims=True)
    return (x - mu) / jnp.sqrt(var + _LN_EPS) * g + b


def reference_decoder(pt, x, x2, memory, memory2, mask, h, K):
    for lp in pt["layers"]:
        x = _ref_layer(lp["s1"], x, memory, memory, mask, h, K)
        x2 = _ref_layer(lp["s2"], x2, memory2, memory2, mask, h, K)
    return (_ref_layernorm(x, pt["norm1_g"], pt["norm1_b"]),
            _ref_layernorm(x2, pt["norm2_g"], pt["norm2_b"]))


# ----------------------------------------------------------------------------

if __name__ == "__main__":
    B, N, T, d_model, h, K, n_layers = 2, 4, 8, 32, 4, 3, 2

    root = jax.random.PRNGKey(0)
    kx, kx2, km, km2, kp = jax.random.split(root, 5)
    x = jax.random.normal(kx, (B, N, T, d_model), jnp.float32)
    x2 = jax.random.normal(kx2, (B, N, T, d_model), jnp.float32)
    memory = jax.random.normal(km, (B, N, T, d_model), jnp.float32)
    memory2 = jax.random.normal(km2, (B, N, T, d_model), jnp.float32)
    # causal mask (batch, T, T): 1 = keep, 0 = masked
    mask = jnp.broadcast_to(jnp.tril(jnp.ones((T, T), jnp.float32)), (B, T, T))

    pt_params, kern_params = init_decoder_params(kp, d_model, K, n_layers)

    out1, out2 = decoder_forward(kern_params, x, x2, memory, memory2, mask,
                                 h=h, kernel_size=K)
    out1, out2 = jax.block_until_ready((out1, out2))

    ref1, ref2 = reference_decoder(pt_params, x, x2, memory, memory2, mask, h, K)

    assert out1.shape == (B, N, T, d_model), out1.shape
    assert out2.shape == (B, N, T, d_model), out2.shape
    err1 = float(jnp.max(jnp.abs(out1 - ref1)))
    err2 = float(jnp.max(jnp.abs(out2 - ref2)))
    assert bool(jnp.allclose(out1, ref1, atol=2e-2, rtol=2e-2)), \
        f"stream1 mismatch, max abs err = {err1}"
    assert bool(jnp.allclose(out2, ref2, atol=2e-2, rtol=2e-2)), \
        f"stream2 mismatch, max abs err = {err2}"

    print("KERNEL_OK")
</pallas_src>

<mosaic_0001>
module attributes {stable_mosaic.version = 11 : i64} {
  func.func @kernel(%arg0: i32, %arg1: i32, %arg2: i32, %arg3: memref<1x1x32x32xf32, #tpu.memory_space<vmem>>, %arg4: memref<1x1x32x32xf32, #tpu.memory_space<vmem>>, %arg5: memref<1x32x32xf32, #tpu.memory_space<vmem>>, %arg6: memref<1x96x32xf32, #tpu.memory_space<vmem>>, %arg7: memref<1x1x32xf32, #tpu.memory_space<vmem>>, %arg8: memref<1x96x32xf32, #tpu.memory_space<vmem>>, %arg9: memref<1x1x32xf32, #tpu.memory_space<vmem>>, %arg10: memref<1x32x32xf32, #tpu.memory_space<vmem>>, %arg11: memref<1x1x32xf32, #tpu.memory_space<vmem>>, %arg12: memref<1x32x32xf32, #tpu.memory_space<vmem>>, %arg13: memref<1x1x32xf32, #tpu.memory_space<vmem>>, %arg14: memref<1x1x32xf32, #tpu.memory_space<vmem>>, %arg15: memref<1x1x32xf32, #tpu.memory_space<vmem>>, %arg16: memref<1x1x32x32xf32, #tpu.memory_space<vmem>>) attributes {dimension_semantics = [#tpu.dimension_semantics<parallel>, #tpu.dimension_semantics<parallel>, #tpu.dimension_semantics<parallel>], iteration_bounds = array<i64: 2, 2, 1>, scalar_prefetch = 0 : i64, scratch_operands = 0 : i64, tpu.core_type = #tpu.core_type<tc>, window_params = [{transform_indices = @transform_0, window_bounds = array<i64: 1, 1, 32, 32>}, {transform_indices = @transform_1, window_bounds = array<i64: 1, 1, 32, 32>}, {transform_indices = @transform_2, window_bounds = array<i64: 1, 32, 32>}, {transform_indices = @transform_3, window_bounds = array<i64: 1, 96, 32>}, {transform_indices = @transform_4, window_bounds = array<i64: 1, 1, 32>}, {transform_indices = @transform_5, window_bounds = array<i64: 1, 96, 32>}, {transform_indices = @transform_6, window_bounds = array<i64: 1, 1, 32>}, {transform_indices = @transform_7, window_bounds = array<i64: 1, 32, 32>}, {transform_indices = @transform_8, window_bounds = array<i64: 1, 1, 32>}, {transform_indices = @transform_9, window_bounds = array<i64: 1, 32, 32>}, {transform_indices = @transform_10, window_bounds = array<i64: 1, 1, 32>}, {transform_indices = @transform_11, window_bounds = array<i64: 1, 1, 32>}, {transform_indices = @transform_12, window_bounds = array<i64: 1, 1, 32>}, {transform_indices = @transform_13, window_bounds = array<i64: 1, 1, 32, 32>}]} {
    %c0 = arith.constant 0 : index
    %c0_0 = arith.constant 0 : index
    %c0_1 = arith.constant 0 : index
    %c0_2 = arith.constant 0 : index
    %0 = vector.load %arg3[%c0, %c0_0, %c0_1, %c0_2] : memref<1x1x32x32xf32, #tpu.memory_space<vmem>>, vector<1x1x32x32xf32>
    %1 = vector.shape_cast %0 : vector<1x1x32x32xf32> to vector<32x32xf32>
    %c0_3 = arith.constant 0 : index
    %c0_4 = arith.constant 0 : index
    %c0_5 = arith.constant 0 : index
    %c0_6 = arith.constant 0 : index
    %2 = vector.load %arg4[%c0_3, %c0_4, %c0_5, %c0_6] : memref<1x1x32x32xf32, #tpu.memory_space<vmem>>, vector<1x1x32x32xf32>
    %3 = vector.shape_cast %2 : vector<1x1x32x32xf32> to vector<32x32xf32>
    %c0_7 = arith.constant 0 : index
    %c0_8 = arith.constant 0 : index
    %c0_9 = arith.constant 0 : index
    %4 = vector.load %arg5[%c0_7, %c0_8, %c0_9] : memref<1x32x32xf32, #tpu.memory_space<vmem>>, vector<1x32x32xf32>
    %5 = vector.shape_cast %4 : vector<1x32x32xf32> to vector<32x32xf32>
    %6 = vector.shape_cast %1 : vector<32x32xf32> to vector<4x8x32xf32>
    %cst = arith.constant 0.000000e+00 : f32
    %7 = vector.broadcast %cst : f32 to vector<4x2x32xf32>
    %8 = vector.extract_strided_slice %6 {offsets = [0, 0, 0], sizes = [4, 6, 32], strides = [1, 1, 1]} : vector<4x8x32xf32> to vector<4x6x32xf32>
    %9 = tpu.concatenate %7, %8 in 1 : vector<4x2x32xf32>, vector<4x6x32xf32> -> vector<4x8x32xf32>
    %cst_10 = arith.constant 0.000000e+00 : f32
    %10 = vector.broadcast %cst_10 : f32 to vector<4x1x32xf32>
    %11 = vector.extract_strided_slice %6 {offsets = [0, 0, 0], sizes = [4, 7, 32], strides = [1, 1, 1]} : vector<4x8x32xf32> to vector<4x7x32xf32>
    %12 = tpu.concatenate %10, %11 in 1 : vector<4x1x32xf32>, vector<4x7x32xf32> -> vector<4x8x32xf32>
    %13 = tpu.concatenate %9, %12, %6 in 2 : vector<4x8x32xf32>, vector<4x8x32xf32>, vector<4x8x32xf32> -> vector<4x8x96xf32>
    %14 = vector.shape_cast %13 : vector<4x8x96xf32> to vector<32x96xf32>
    %c0_11 = arith.constant 0 : index
    %c0_12 = arith.constant 0 : index
    %c0_13 = arith.constant 0 : index
    %15 = vector.load %arg6[%c0_11, %c0_12, %c0_13] : memref<1x96x32xf32, #tpu.memory_space<vmem>>, vector<1x96x32xf32>
    %16 = vector.shape_cast %15 : vector<1x96x32xf32> to vector<96x32xf32>
    %cst_14 = arith.constant dense<0.000000e+00> : vector<32x32xf32>
    %17 = tpu.matmul %14, %16, %cst_14 {dimension_numbers = #tpu.dot_dimension_numbers<[1], [0], [0], [1], [0, 0, 1, 1], [], []>} : vector<32x96xf32>, vector<96x32xf32>, vector<32x32xf32> -> vector<32x32xf32>
    %c0_15 = arith.constant 0 : index
    %c0_16 = arith.constant 0 : index
    %c0_17 = arith.constant 0 : index
    %18 = vector.load %arg7[%c0_15, %c0_16, %c0_17] : memref<1x1x32xf32, #tpu.memory_space<vmem>>, vector<1x1x32xf32>
    %19 = vector.shape_cast %18 : vector<1x1x32xf32> to vector<1x32xf32>
    %20 = vector.broadcast %19 : vector<1x32xf32> to vector<32x32xf32>
    %21 = arith.addf %17, %20 : vector<32x32xf32>
    %22 = vector.shape_cast %3 : vector<32x32xf32> to vector<4x8x32xf32>
    %cst_18 = arith.constant 0.000000e+00 : f32
    %23 = vector.broadcast %cst_18 : f32 to vector<4x2x32xf32>
    %24 = vector.extract_strided_slice %22 {offsets = [0, 0, 0], sizes = [4, 6, 32], strides = [1, 1, 1]} : vector<4x8x32xf32> to vector<4x6x32xf32>
    %25 = tpu.concatenate %23, %24 in 1 : vector<4x2x32xf32>, vector<4x6x32xf32> -> vector<4x8x32xf32>
    %cst_19 = arith.constant 0.000000e+00 : f32
    %26 = vector.broadcast %cst_19 : f32 to vector<4x1x32xf32>
    %27 = vector.extract_strided_slice %22 {offsets = [0, 0, 0], sizes = [4, 7, 32], strides = [1, 1, 1]} : vector<4x8x32xf32> to vector<4x7x32xf32>
    %28 = tpu.concatenate %26, %27 in 1 : vector<4x1x32xf32>, vector<4x7x32xf32> -> vector<4x8x32xf32>
    %29 = tpu.concatenate %25, %28, %22 in 2 : vector<4x8x32xf32>, vector<4x8x32xf32>, vector<4x8x32xf32> -> vector<4x8x96xf32>
    %30 = vector.shape_cast %29 : vector<4x8x96xf32> to vector<32x96xf32>
    %c0_20 = arith.constant 0 : index
    %c0_21 = arith.constant 0 : index
    %c0_22 = arith.constant 0 : index
    %31 = vector.load %arg8[%c0_20, %c0_21, %c0_22] : memref<1x96x32xf32, #tpu.memory_space<vmem>>, vector<1x96x32xf32>
    %32 = vector.shape_cast %31 : vector<1x96x32xf32> to vector<96x32xf32>
    %cst_23 = arith.constant dense<0.000000e+00> : vector<32x32xf32>
    %33 = tpu.matmul %30, %32, %cst_23 {dimension_numbers = #tpu.dot_dimension_numbers<[1], [0], [0], [1], [0, 0, 1, 1], [], []>} : vector<32x96xf32>, vector<96x32xf32>, vector<32x32xf32> -> vector<32x32xf32>
    %c0_24 = arith.constant 0 : index
    %c0_25 = arith.constant 0 : index
    %c0_26 = arith.constant 0 : index
    %34 = vector.load %arg9[%c0_24, %c0_25, %c0_26] : memref<1x1x32xf32, #tpu.memory_space<vmem>>, vector<1x1x32xf32>
    %35 = vector.shape_cast %34 : vector<1x1x32xf32> to vector<1x32xf32>
    %36 = vector.broadcast %35 : vector<1x32xf32> to vector<32x32xf32>
    %37 = arith.addf %33, %36 : vector<32x32xf32>
    %c0_27 = arith.constant 0 : index
    %c0_28 = arith.constant 0 : index
    %c0_29 = arith.constant 0 : index
    %38 = vector.load %arg10[%c0_27, %c0_28, %c0_29] : memref<1x32x32xf32, #tpu.memory_space<vmem>>, vector<1x32x32xf32>
    %39 = vector.shape_cast %38 : vector<1x32x32xf32> to vector<32x32xf32>
    %cst_30 = arith.constant dense<0.000000e+00> : vector<32x32xf32>
    %40 = tpu.matmul %3, %39, %cst_30 {dimension_numbers = #tpu.dot_dimension_numbers<[1], [0], [0], [1], [0, 0, 1, 1], [], []>} : vector<32x32xf32>, vector<32x32xf32>, vector<32x32xf32> -> vector<32x32xf32>
    %c0_31 = arith.constant 0 : index
    %c0_32 = arith.constant 0 : index
    %c0_33 = arith.constant 0 : index
    %41 = vector.load %arg11[%c0_31, %c0_32, %c0_33] : memref<1x1x32xf32, #tpu.memory_space<vmem>>, vector<1x1x32xf32>
    %42 = vector.shape_cast %41 : vector<1x1x32xf32> to vector<1x32xf32>
    %43 = vector.broadcast %42 : vector<1x32xf32> to vector<32x32xf32>
    %44 = arith.addf %40, %43 : vector<32x32xf32>
    %45 = tpu.transpose %37, [1, 0] : vector<32x32xf32> -> vector<32x32xf32>
    %46 = vector.extract_strided_slice %21 {offsets = [0, 0], sizes = [32, 8], strides = [1, 1]} : vector<32x32xf32> to vector<32x8xf32>
    %47 = vector.extract_strided_slice %45 {offsets = [0, 0], sizes = [8, 32], strides = [1, 1]} : vector<32x32xf32> to vector<8x32xf32>
    %48 = vector.extract_strided_slice %44 {offsets = [0, 0], sizes = [32, 8], strides = [1, 1]} : vector<32x32xf32> to vector<32x8xf32>
    %cst_34 = arith.constant dense<0.000000e+00> : vector<32x32xf32>
    %49 = tpu.matmul %46, %47, %cst_34 {dimension_numbers = #tpu.dot_dimension_numbers<[1], [0], [0], [1], [0, 0, 1, 1], [], []>} : vector<32x8xf32>, vector<8x32xf32>, vector<32x32xf32> -> vector<32x32xf32>
    %cst_35 = arith.constant 0.353553385 : f32
    %50 = vector.broadcast %cst_35 : f32 to vector<32x32xf32>
    %51 = arith.mulf %49, %50 : vector<32x32xf32>
    %52 = arith.addf %51, %5 : vector<32x32xf32>
    %cst_36 = arith.constant dense<0xFF800000> : vector<32xf32>
    %53 = vector.multi_reduction <maximumf>, %52, %cst_36 [1] : vector<32x32xf32> to vector<32xf32>
    %54 = vector.shape_cast %53 : vector<32xf32> to vector<32x1xf32>
    %55 = vector.broadcast %54 : vector<32x1xf32> to vector<32x32xf32>
    %56 = arith.subf %52, %55 : vector<32x32xf32>
    %57 = math.exp %56 : vector<32x32xf32>
    %cst_37 = arith.constant dense<0.000000e+00> : vector<32xf32>
    %58 = vector.multi_reduction <add>, %57, %cst_37 [1] : vector<32x32xf32> to vector<32xf32>
    %59 = vector.shape_cast %58 : vector<32xf32> to vector<32x1xf32>
    %60 = tpu.reciprocal %59 {approx = true} : vector<32x1xf32> -> vector<32x1xf32>
    %61 = vector.broadcast %60 : vector<32x1xf32> to vector<32x32xf32>
    %62 = arith.mulf %57, %61 : vector<32x32xf32>
    %cst_38 = arith.constant dense<0.000000e+00> : vector<32x8xf32>
    %63 = tpu.matmul %62, %48, %cst_38 {dimension_numbers = #tpu.dot_dimension_numbers<[1], [0], [0], [1], [0, 0, 1, 1], [], []>} : vector<32x32xf32>, vector<32x8xf32>, vector<32x8xf32> -> vector<32x8xf32>
    %64 = vector.extract_strided_slice %21 {offsets = [0, 8], sizes = [32, 8], strides = [1, 1]} : vector<32x32xf32> to vector<32x8xf32>
    %65 = vector.extract_strided_slice %45 {offsets = [8, 0], sizes = [8, 32], strides = [1, 1]} : vector<32x32xf32> to vector<8x32xf32>
    %66 = vector.extract_strided_slice %44 {offsets = [0, 8], sizes = [32, 8], strides = [1, 1]} : vector<32x32xf32> to vector<32x8xf32>
    %cst_39 = arith.constant dense<0.000000e+00> : vector<32x32xf32>
    %67 = tpu.matmul %64, %65, %cst_39 {dimension_numbers = #tpu.dot_dimension_numbers<[1], [0], [0], [1], [0, 0, 1, 1], [], []>} : vector<32x8xf32>, vector<8x32xf32>, vector<32x32xf32> -> vector<32x32xf32>
    %cst_40 = arith.constant 0.353553385 : f32
    %68 = vector.broadcast %cst_40 : f32 to vector<32x32xf32>
    %69 = arith.mulf %67, %68 : vector<32x32xf32>
    %70 = arith.addf %69, %5 : vector<32x32xf32>
    %cst_41 = arith.constant dense<0xFF800000> : vector<32xf32>
    %71 = vector.multi_reduction <maximumf>, %70, %cst_41 [1] : vector<32x32xf32> to vector<32xf32>
    %72 = vector.shape_cast %71 : vector<32xf32> to vector<32x1xf32>
    %73 = vector.broadcast %72 : vector<32x1xf32> to vector<32x32xf32>
    %74 = arith.subf %70, %73 : vector<32x32xf32>
    %75 = math.exp %74 : vector<32x32xf32>
    %cst_42 = arith.constant dense<0.000000e+00> : vector<32xf32>
    %76 = vector.multi_reduction <add>, %75, %cst_42 [1] : vector<32x32xf32> to vector<32xf32>
    %77 = vector.shape_cast %76 : vector<32xf32> to vector<32x1xf32>
    %78 = tpu.reciprocal %77 {approx = true} : vector<32x1xf32> -> vector<32x1xf32>
    %79 = vector.broadcast %78 : vector<32x1xf32> to vector<32x32xf32>
    %80 = arith.mulf %75, %79 : vector<32x32xf32>
    %cst_43 = arith.constant dense<0.000000e+00> : vector<32x8xf32>
    %81 = tpu.matmul %80, %66, %cst_43 {dimension_numbers = #tpu.dot_dimension_numbers<[1], [0], [0], [1], [0, 0, 1, 1], [], []>} : vector<32x32xf32>, vector<32x8xf32>, vector<32x8xf32> -> vector<32x8xf32>
    %82 = vector.extract_strided_slice %21 {offsets = [0, 16], sizes = [32, 8], strides = [1, 1]} : vector<32x32xf32> to vector<32x8xf32>
    %83 = vector.extract_strided_slice %45 {offsets = [16, 0], sizes = [8, 32], strides = [1, 1]} : vector<32x32xf32> to vector<8x32xf32>
    %84 = vector.extract_strided_slice %44 {offsets = [0, 16], sizes = [32, 8], strides = [1, 1]} : vector<32x32xf32> to vector<32x8xf32>
    %cst_44 = arith.constant dense<0.000000e+00> : vector<32x32xf32>
    %85 = tpu.matmul %82, %83, %cst_44 {dimension_numbers = #tpu.dot_dimension_numbers<[1], [0], [0], [1], [0, 0, 1, 1], [], []>} : vector<32x8xf32>, vector<8x32xf32>, vector<32x32xf32> -> vector<32x32xf32>
    %cst_45 = arith.constant 0.353553385 : f32
    %86 = vector.broadcast %cst_45 : f32 to vector<32x32xf32>
    %87 = arith.mulf %85, %86 : vector<32x32xf32>
    %88 = arith.addf %87, %5 : vector<32x32xf32>
    %cst_46 = arith.constant dense<0xFF800000> : vector<32xf32>
    %89 = vector.multi_reduction <maximumf>, %88, %cst_46 [1] : vector<32x32xf32> to vector<32xf32>
    %90 = vector.shape_cast %89 : vector<32xf32> to vector<32x1xf32>
    %91 = vector.broadcast %90 : vector<32x1xf32> to vector<32x32xf32>
    %92 = arith.subf %88, %91 : vector<32x32xf32>
    %93 = math.exp %92 : vector<32x32xf32>
    %cst_47 = arith.constant dense<0.000000e+00> : vector<32xf32>
    %94 = vector.multi_reduction <add>, %93, %cst_47 [1] : vector<32x32xf32> to vector<32xf32>
    %95 = vector.shape_cast %94 : vector<32xf32> to vector<32x1xf32>
    %96 = tpu.reciprocal %95 {approx = true} : vector<32x1xf32> -> vector<32x1xf32>
    %97 = vector.broadcast %96 : vector<32x1xf32> to vector<32x32xf32>
    %98 = arith.mulf %93, %97 : vector<32x32xf32>
    %cst_48 = arith.constant dense<0.000000e+00> : vector<32x8xf32>
    %99 = tpu.matmul %98, %84, %cst_48 {dimension_numbers = #tpu.dot_dimension_numbers<[1], [0], [0], [1], [0, 0, 1, 1], [], []>} : vector<32x32xf32>, vector<32x8xf32>, vector<32x8xf32> -> vector<32x8xf32>
    %100 = vector.extract_strided_slice %21 {offsets = [0, 24], sizes = [32, 8], strides = [1, 1]} : vector<32x32xf32> to vector<32x8xf32>
    %101 = vector.extract_strided_slice %45 {offsets = [24, 0], sizes = [8, 32], strides = [1, 1]} : vector<32x32xf32> to vector<8x32xf32>
    %102 = vector.extract_strided_slice %44 {offsets = [0, 24], sizes = [32, 8], strides = [1, 1]} : vector<32x32xf32> to vector<32x8xf32>
    %cst_49 = arith.constant dense<0.000000e+00> : vector<32x32xf32>
    %103 = tpu.matmul %100, %101, %cst_49 {dimension_numbers = #tpu.dot_dimension_numbers<[1], [0], [0], [1], [0, 0, 1, 1], [], []>} : vector<32x8xf32>, vector<8x32xf32>, vector<32x32xf32> -> vector<32x32xf32>
    %cst_50 = arith.constant 0.353553385 : f32
    %104 = vector.broadcast %cst_50 : f32 to vector<32x32xf32>
    %105 = arith.mulf %103, %104 : vector<32x32xf32>
    %106 = arith.addf %105, %5 : vector<32x32xf32>
    %cst_51 = arith.constant dense<0xFF800000> : vector<32xf32>
    %107 = vector.multi_reduction <maximumf>, %106, %cst_51 [1] : vector<32x32xf32> to vector<32xf32>
    %108 = vector.shape_cast %107 : vector<32xf32> to vector<32x1xf32>
    %109 = vector.broadcast %108 : vector<32x1xf32> to vector<32x32xf32>
    %110 = arith.subf %106, %109 : vector<32x32xf32>
    %111 = math.exp %110 : vector<32x32xf32>
    %cst_52 = arith.constant dense<0.000000e+00> : vector<32xf32>
    %112 = vector.multi_reduction <add>, %111, %cst_52 [1] : vector<32x32xf32> to vector<32xf32>
    %113 = vector.shape_cast %112 : vector<32xf32> to vector<32x1xf32>
    %114 = tpu.reciprocal %113 {approx = true} : vector<32x1xf32> -> vector<32x1xf32>
    %115 = vector.broadcast %114 : vector<32x1xf32> to vector<32x32xf32>
    %116 = arith.mulf %111, %115 : vector<32x32xf32>
    %cst_53 = arith.constant dense<0.000000e+00> : vector<32x8xf32>
    %117 = tpu.matmul %116, %102, %cst_53 {dimension_numbers = #tpu.dot_dimension_numbers<[1], [0], [0], [1], [0, 0, 1, 1], [], []>} : vector<32x32xf32>, vector<32x8xf32>, vector<32x8xf32> -> vector<32x8xf32>
    %118 = tpu.concatenate %63, %81, %99, %117 in 1 : vector<32x8xf32>, vector<32x8xf32>, vector<32x8xf32>, vector<32x8xf32> -> vector<32x32xf32>
    %c0_54 = arith.constant 0 : index
    %c0_55 = arith.constant 0 : index
    %c0_56 = arith.constant 0 : index
    %119 = vector.load %arg12[%c0_54, %c0_55, %c0_56] : memref<1x32x32xf32, #tpu.memory_space<vmem>>, vector<1x32x32xf32>
    %120 = vector.shape_cast %119 : vector<1x32x32xf32> to vector<32x32xf32>
    %cst_57 = arith.constant dense<0.000000e+00> : vector<32x32xf32>
    %121 = tpu.matmul %118, %120, %cst_57 {dimension_numbers = #tpu.dot_dimension_numbers<[1], [0], [0], [1], [0, 0, 1, 1], [], []>} : vector<32x32xf32>, vector<32x32xf32>, vector<32x32xf32> -> vector<32x32xf32>
    %c0_58 = arith.constant 0 : index
    %c0_59 = arith.constant 0 : index
    %c0_60 = arith.constant 0 : index
    %122 = vector.load %arg13[%c0_58, %c0_59, %c0_60] : memref<1x1x32xf32, #tpu.memory_space<vmem>>, vector<1x1x32xf32>
    %123 = vector.shape_cast %122 : vector<1x1x32xf32> to vector<1x32xf32>
    %124 = vector.broadcast %123 : vector<1x32xf32> to vector<32x32xf32>
    %125 = arith.addf %121, %124 : vector<32x32xf32>
    %c0_61 = arith.constant 0 : index
    %c0_62 = arith.constant 0 : index
    %c0_63 = arith.constant 0 : index
    %c0_64 = arith.constant 0 : index
    %126 = vector.load %arg16[%c0_61, %c0_62, %c0_63, %c0_64] : memref<1x1x32x32xf32, #tpu.memory_space<vmem>>, vector<1x1x32x32xf32>
    %127 = vector.shape_cast %126 : vector<1x1x32x32xf32> to vector<32x32xf32>
    %128 = vector.shape_cast %125 : vector<32x32xf32> to vector<1x1x32x32xf32>
    tpu.vector_store %arg16[%c0_61, %c0_62, %c0_63, %c0_64], %128 {strides = array<i32>} : memref<1x1x32x32xf32, #tpu.memory_space<vmem>>, vector<1x1x32x32xf32>,
    return
  }
  func.func @transform_0(%arg0: i32, %arg1: i32, %arg2: i32) -> (i32, i32, i32, i32) {
    %c0_i32 = arith.constant 0 : i32
    %c0_i32_0 = arith.constant 0 : i32
    return %arg0, %arg1, %arg2, %c0_i32 : i32, i32, i32, i32
  }
  func.func @transform_1(%arg0: i32, %arg1: i32, %arg2: i32) -> (i32, i32, i32, i32) {
    %c0_i32 = arith.constant 0 : i32
    %c0_i32_0 = arith.constant 0 : i32
    return %arg0, %arg1, %arg2, %c0_i32 : i32, i32, i32, i32
  }
  func.func @transform_2(%arg0: i32, %arg1: i32, %arg2: i32) -> (i32, i32, i32) {
    %c0_i32 = arith.constant 0 : i32
    %c0_i32_0 = arith.constant 0 : i32
    %c0_i32_1 = arith.constant 0 : i32
    return %arg1, %c0_i32, %c0_i32_0 : i32, i32, i32
  }
  func.func @transform_3(%arg0: i32, %arg1: i32, %arg2: i32) -> (i32, i32, i32) {
    %c0_i32 = arith.constant 0 : i32
    %c0_i32_0 = arith.constant 0 : i32
    %c0_i32_1 = arith.constant 0 : i32
    return %arg0, %c0_i32, %c0_i32_0 : i32, i32, i32
  }
  func.func @transform_4(%arg0: i32, %arg1: i32, %arg2: i32) -> (i32, i32, i32) {
    %c0_i32 = arith.constant 0 : i32
    %c0_i32_0 = arith.constant 0 : i32
    %c0_i32_1 = arith.constant 0 : i32
    return %arg0, %c0_i32, %c0_i32_0 : i32, i32, i32
  }
  func.func @transform_5(%arg0: i32, %arg1: i32, %arg2: i32) -> (i32, i32, i32) {
    %c0_i32 = arith.constant 0 : i32
    %c0_i32_0 = arith.constant 0 : i32
    %c0_i32_1 = arith.constant 0 : i32
    return %arg0, %c0_i32, %c0_i32_0 : i32, i32, i32
  }
  func.func @transform_6(%arg0: i32, %arg1: i32, %arg2: i32) -> (i32, i32, i32) {
    %c0_i32 = arith.constant 0 : i32
    %c0_i32_0 = arith.constant 0 : i32
    %c0_i32_1 = arith.constant 0 : i32
    return %arg0, %c0_i32, %c0_i32_0 : i32, i32, i32
  }
  func.func @transform_7(%arg0: i32, %arg1: i32, %arg2: i32) -> (i32, i32, i32) {
    %c0_i32 = arith.constant 0 : i32
    %c0_i32_0 = arith.constant 0 : i32
    %c0_i32_1 = arith.constant 0 : i32
    return %arg0, %c0_i32, %c0_i32_0 : i32, i32, i32
  }
  func.func @transform_8(%arg0: i32, %arg1: i32, %arg2: i32) -> (i32, i32, i32) {
    %c0_i32 = arith.constant 0 : i32
    %c0_i32_0 = arith.constant 0 : i32
    %c0_i32_1 = arith.constant 0 : i32
    return %arg0, %c0_i32, %c0_i32_0 : i32, i32, i32
  }
  func.func @transform_9(%arg0: i32, %arg1: i32, %arg2: i32) -> (i32, i32, i32) {
    %c0_i32 = arith.constant 0 : i32
    %c0_i32_0 = arith.constant 0 : i32
    %c0_i32_1 = arith.constant 0 : i32
    return %arg0, %c0_i32, %c0_i32_0 : i32, i32, i32
  }
  func.func @transform_10(%arg0: i32, %arg1: i32, %arg2: i32) -> (i32, i32, i32) {
    %c0_i32 = arith.constant 0 : i32
    %c0_i32_0 = arith.constant 0 : i32
    %c0_i32_1 = arith.constant 0 : i32
    return %arg0, %c0_i32, %c0_i32_0 : i32, i32, i32
  }
  func.func @transform_11(%arg0: i32, %arg1: i32, %arg2: i32) -> (i32, i32, i32) {
    %c0_i32 = arith.constant 0 : i32
    %c0_i32_0 = arith.constant 0 : i32
    %c0_i32_1 = arith.constant 0 : i32
    return %arg0, %c0_i32, %c0_i32_0 : i32, i32, i32
  }
  func.func @transform_12(%arg0: i32, %arg1: i32, %arg2: i32) -> (i32, i32, i32) {
    %c0_i32 = arith.constant 0 : i32
    %c0_i32_0 = arith.constant 0 : i32
    %c0_i32_1 = arith.constant 0 : i32
    return %arg0, %c0_i32, %c0_i32_0 : i32, i32, i32
  }
  func.func @transform_13(%arg0: i32, %arg1: i32, %arg2: i32) -> (i32, i32, i32, i32) {
    %c0_i32 = arith.constant 0 : i32
    %c0_i32_0 = arith.constant 0 : i32
    return %arg0, %arg1, %arg2, %c0_i32 : i32, i32, i32, i32
  }
}

module attributes {stable_mosaic.version = 11 : i64} {
  func.func @kernel(%arg0: i32, %arg1: i32, %arg2: i32, %arg3: memref<1x1x32x32xf32, #tpu.memory_space<vmem>>, %arg4: memref<1x1x32x32xf32, #tpu.memory_space<vmem>>, %arg5: memref<1x32x32xf32, #tpu.memory_space<vmem>>, %arg6: memref<1x96x32xf32, #tpu.memory_space<vmem>>, %arg7: memref<1x1x32xf32, #tpu.memory_space<vmem>>, %arg8: memref<1x96x32xf32, #tpu.memory_space<vmem>>, %arg9: memref<1x1x32xf32, #tpu.memory_space<vmem>>, %arg10: memref<1x32x32xf32, #tpu.memory_space<vmem>>, %arg11: memref<1x1x32xf32, #tpu.memory_space<vmem>>, %arg12: memref<1x32x32xf32, #tpu.memory_space<vmem>>, %arg13: memref<1x1x32xf32, #tpu.memory_space<vmem>>, %arg14: memref<1x1x32xf32, #tpu.memory_space<vmem>>, %arg15: memref<1x1x32xf32, #tpu.memory_space<vmem>>, %arg16: memref<1x1x32x32xf32, #tpu.memory_space<vmem>>) attributes {dimension_semantics = [#tpu.dimension_semantics<parallel>, #tpu.dimension_semantics<parallel>, #tpu.dimension_semantics<parallel>], iteration_bounds = array<i64: 2, 2, 1>, scalar_prefetch = 0 : i64, scratch_operands = 0 : i64, tpu.core_type = #tpu.core_type<tc>, window_params = [{transform_indices = @transform_0, window_bounds = array<i64: 1, 1, 32, 32>}, {transform_indices = @transform_1, window_bounds = array<i64: 1, 1, 32, 32>}, {transform_indices = @transform_2, window_bounds = array<i64: 1, 32, 32>}, {transform_indices = @transform_3, window_bounds = array<i64: 1, 96, 32>}, {transform_indices = @transform_4, window_bounds = array<i64: 1, 1, 32>}, {transform_indices = @transform_5, window_bounds = array<i64: 1, 96, 32>}, {transform_indices = @transform_6, window_bounds = array<i64: 1, 1, 32>}, {transform_indices = @transform_7, window_bounds = array<i64: 1, 32, 32>}, {transform_indices = @transform_8, window_bounds = array<i64: 1, 1, 32>}, {transform_indices = @transform_9, window_bounds = array<i64: 1, 32, 32>}, {transform_indices = @transform_10, window_bounds = array<i64: 1, 1, 32>}, {transform_indices = @transform_11, window_bounds = array<i64: 1, 1, 32>}, {transform_indices = @transform_12, window_bounds = array<i64: 1, 1, 32>}, {transform_indices = @transform_13, window_bounds = array<i64: 1, 1, 32, 32>}]} {
    %c0 = arith.constant 0 : index
    %c0_0 = arith.constant 0 : index
    %c0_1 = arith.constant 0 : index
    %c0_2 = arith.constant 0 : index
    %0 = vector.load %arg3[%c0, %c0_0, %c0_1, %c0_2] : memref<1x1x32x32xf32, #tpu.memory_space<vmem>>, vector<1x1x32x32xf32>
    %1 = vector.shape_cast %0 : vector<1x1x32x32xf32> to vector<32x32xf32>
    %c0_3 = arith.constant 0 : index
    %c0_4 = arith.constant 0 : index
    %c0_5 = arith.constant 0 : index
    %c0_6 = arith.constant 0 : index
    %2 = vector.load %arg4[%c0_3, %c0_4, %c0_5, %c0_6] : memref<1x1x32x32xf32, #tpu.memory_space<vmem>>, vector<1x1x32x32xf32>
    %3 = vector.shape_cast %2 : vector<1x1x32x32xf32> to vector<32x32xf32>
    %c0_7 = arith.constant 0 : index
    %c0_8 = arith.constant 0 : index
    %c0_9 = arith.constant 0 : index
    %4 = vector.load %arg5[%c0_7, %c0_8, %c0_9] : memref<1x32x32xf32, #tpu.memory_space<vmem>>, vector<1x32x32xf32>
    %5 = vector.shape_cast %4 : vector<1x32x32xf32> to vector<32x32xf32>
    %6 = vector.shape_cast %1 : vector<32x32xf32> to vector<4x8x32xf32>
    %cst = arith.constant 0.000000e+00 : f32
    %7 = vector.broadcast %cst : f32 to vector<4x2x32xf32>
    %8 = vector.extract_strided_slice %6 {offsets = [0, 0, 0], sizes = [4, 6, 32], strides = [1, 1, 1]} : vector<4x8x32xf32> to vector<4x6x32xf32>
    %9 = tpu.concatenate %7, %8 in 1 : vector<4x2x32xf32>, vector<4x6x32xf32> -> vector<4x8x32xf32>
    %cst_10 = arith.constant 0.000000e+00 : f32
    %10 = vector.broadcast %cst_10 : f32 to vector<4x1x32xf32>
    %11 = vector.extract_strided_slice %6 {offsets = [0, 0, 0], sizes = [4, 7, 32], strides = [1, 1, 1]} : vector<4x8x32xf32> to vector<4x7x32xf32>
    %12 = tpu.concatenate %10, %11 in 1 : vector<4x1x32xf32>, vector<4x7x32xf32> -> vector<4x8x32xf32>
    %13 = tpu.concatenate %9, %12, %6 in 2 : vector<4x8x32xf32>, vector<4x8x32xf32>, vector<4x8x32xf32> -> vector<4x8x96xf32>
    %14 = vector.shape_cast %13 : vector<4x8x96xf32> to vector<32x96xf32>
    %c0_11 = arith.constant 0 : index
    %c0_12 = arith.constant 0 : index
    %c0_13 = arith.constant 0 : index
    %15 = vector.load %arg6[%c0_11, %c0_12, %c0_13] : memref<1x96x32xf32, #tpu.memory_space<vmem>>, vector<1x96x32xf32>
    %16 = vector.shape_cast %15 : vector<1x96x32xf32> to vector<96x32xf32>
    %cst_14 = arith.constant dense<0.000000e+00> : vector<32x32xf32>
    %17 = tpu.matmul %14, %16, %cst_14 {dimension_numbers = #tpu.dot_dimension_numbers<[1], [0], [0], [1], [0, 0, 1, 1], [], []>} : vector<32x96xf32>, vector<96x32xf32>, vector<32x32xf32> -> vector<32x32xf32>
    %c0_15 = arith.constant 0 : index
    %c0_16 = arith.constant 0 : index
    %c0_17 = arith.constant 0 : index
    %18 = vector.load %arg7[%c0_15, %c0_16, %c0_17] : memref<1x1x32xf32, #tpu.memory_space<vmem>>, vector<1x1x32xf32>
    %19 = vector.shape_cast %18 : vector<1x1x32xf32> to vector<1x32xf32>
    %20 = vector.broadcast %19 : vector<1x32xf32> to vector<32x32xf32>
    %21 = arith.addf %17, %20 : vector<32x32xf32>
    %22 = vector.shape_cast %3 : vector<32x32xf32> to vector<4x8x32xf32>
    %cst_18 = arith.constant 0.000000e+00 : f32
    %23 = vector.broadcast %cst_18 : f32 to vector<4x2x32xf32>
    %24 = vector.extract_strided_slice %22 {offsets = [0, 0, 0], sizes = [4, 6, 32], strides = [1, 1, 1]} : vector<4x8x32xf32> to vector<4x6x32xf32>
    %25 = tpu.concatenate %23, %24 in 1 : vector<4x2x32xf32>, vector<4x6x32xf32> -> vector<4x8x32xf32>
    %cst_19 = arith.constant 0.000000e+00 : f32
    %26 = vector.broadcast %cst_19 : f32 to vector<4x1x32xf32>
    %27 = vector.extract_strided_slice %22 {offsets = [0, 0, 0], sizes = [4, 7, 32], strides = [1, 1, 1]} : vector<4x8x32xf32> to vector<4x7x32xf32>
    %28 = tpu.concatenate %26, %27 in 1 : vector<4x1x32xf32>, vector<4x7x32xf32> -> vector<4x8x32xf32>
    %29 = tpu.concatenate %25, %28, %22 in 2 : vector<4x8x32xf32>, vector<4x8x32xf32>, vector<4x8x32xf32> -> vector<4x8x96xf32>
    %30 = vector.shape_cast %29 : vector<4x8x96xf32> to vector<32x96xf32>
    %c0_20 = arith.constant 0 : index
    %c0_21 = arith.constant 0 : index
    %c0_22 = arith.constant 0 : index
    %31 = vector.load %arg8[%c0_20, %c0_21, %c0_22] : memref<1x96x32xf32, #tpu.memory_space<vmem>>, vector<1x96x32xf32>
    %32 = vector.shape_cast %31 : vector<1x96x32xf32> to vector<96x32xf32>
    %cst_23 = arith.constant dense<0.000000e+00> : vector<32x32xf32>
    %33 = tpu.matmul %30, %32, %cst_23 {dimension_numbers = #tpu.dot_dimension_numbers<[1], [0], [0], [1], [0, 0, 1, 1], [], []>} : vector<32x96xf32>, vector<96x32xf32>, vector<32x32xf32> -> vector<32x32xf32>
    %c0_24 = arith.constant 0 : index
    %c0_25 = arith.constant 0 : index
    %c0_26 = arith.constant 0 : index
    %34 = vector.load %arg9[%c0_24, %c0_25, %c0_26] : memref<1x1x32xf32, #tpu.memory_space<vmem>>, vector<1x1x32xf32>
    %35 = vector.shape_cast %34 : vector<1x1x32xf32> to vector<1x32xf32>
    %36 = vector.broadcast %35 : vector<1x32xf32> to vector<32x32xf32>
    %37 = arith.addf %33, %36 : vector<32x32xf32>
    %c0_27 = arith.constant 0 : index
    %c0_28 = arith.constant 0 : index
    %c0_29 = arith.constant 0 : index
    %38 = vector.load %arg10[%c0_27, %c0_28, %c0_29] : memref<1x32x32xf32, #tpu.memory_space<vmem>>, vector<1x32x32xf32>
    %39 = vector.shape_cast %38 : vector<1x32x32xf32> to vector<32x32xf32>
    %cst_30 = arith.constant dense<0.000000e+00> : vector<32x32xf32>
    %40 = tpu.matmul %3, %39, %cst_30 {dimension_numbers = #tpu.dot_dimension_numbers<[1], [0], [0], [1], [0, 0, 1, 1], [], []>} : vector<32x32xf32>, vector<32x32xf32>, vector<32x32xf32> -> vector<32x32xf32>
    %c0_31 = arith.constant 0 : index
    %c0_32 = arith.constant 0 : index
    %c0_33 = arith.constant 0 : index
    %41 = vector.load %arg11[%c0_31, %c0_32, %c0_33] : memref<1x1x32xf32, #tpu.memory_space<vmem>>, vector<1x1x32xf32>
    %42 = vector.shape_cast %41 : vector<1x1x32xf32> to vector<1x32xf32>
    %43 = vector.broadcast %42 : vector<1x32xf32> to vector<32x32xf32>
    %44 = arith.addf %40, %43 : vector<32x32xf32>
    %45 = tpu.transpose %37, [1, 0] : vector<32x32xf32> -> vector<32x32xf32>
    %46 = vector.extract_strided_slice %21 {offsets = [0, 0], sizes = [32, 8], strides = [1, 1]} : vector<32x32xf32> to vector<32x8xf32>
    %47 = vector.extract_strided_slice %45 {offsets = [0, 0], sizes = [8, 32], strides = [1, 1]} : vector<32x32xf32> to vector<8x32xf32>
    %48 = vector.extract_strided_slice %44 {offsets = [0, 0], sizes = [32, 8], strides = [1, 1]} : vector<32x32xf32> to vector<32x8xf32>
    %cst_34 = arith.constant dense<0.000000e+00> : vector<32x32xf32>
    %49 = tpu.matmul %46, %47, %cst_34 {dimension_numbers = #tpu.dot_dimension_numbers<[1], [0], [0], [1], [0, 0, 1, 1], [], []>} : vector<32x8xf32>, vector<8x32xf32>, vector<32x32xf32> -> vector<32x32xf32>
    %cst_35 = arith.constant 0.353553385 : f32
    %50 = vector.broadcast %cst_35 : f32 to vector<32x32xf32>
    %51 = arith.mulf %49, %50 : vector<32x32xf32>
    %52 = arith.addf %51, %5 : vector<32x32xf32>
    %cst_36 = arith.constant dense<0xFF800000> : vector<32xf32>
    %53 = vector.multi_reduction <maximumf>, %52, %cst_36 [1] : vector<32x32xf32> to vector<32xf32>
    %54 = vector.shape_cast %53 : vector<32xf32> to vector<32x1xf32>
    %55 = vector.broadcast %54 : vector<32x1xf32> to vector<32x32xf32>
    %56 = arith.subf %52, %55 : vector<32x32xf32>
    %57 = math.exp %56 : vector<32x32xf32>
    %cst_37 = arith.constant dense<0.000000e+00> : vector<32xf32>
    %58 = vector.multi_reduction <add>, %57, %cst_37 [1] : vector<32x32xf32> to vector<32xf32>
    %59 = vector.shape_cast %58 : vector<32xf32> to vector<32x1xf32>
    %60 = tpu.reciprocal %59 {approx = true} : vector<32x1xf32> -> vector<32x1xf32>
    %61 = vector.broadcast %60 : vector<32x1xf32> to vector<32x32xf32>
    %62 = arith.mulf %57, %61 : vector<32x32xf32>
    %cst_38 = arith.constant dense<0.000000e+00> : vector<32x8xf32>
    %63 = tpu.matmul %62, %48, %cst_38 {dimension_numbers = #tpu.dot_dimension_numbers<[1], [0], [0], [1], [0, 0, 1, 1], [], []>} : vector<32x32xf32>, vector<32x8xf32>, vector<32x8xf32> -> vector<32x8xf32>
    %64 = vector.extract_strided_slice %21 {offsets = [0, 8], sizes = [32, 8], strides = [1, 1]} : vector<32x32xf32> to vector<32x8xf32>
    %65 = vector.extract_strided_slice %45 {offsets = [8, 0], sizes = [8, 32], strides = [1, 1]} : vector<32x32xf32> to vector<8x32xf32>
    %66 = vector.extract_strided_slice %44 {offsets = [0, 8], sizes = [32, 8], strides = [1, 1]} : vector<32x32xf32> to vector<32x8xf32>
    %cst_39 = arith.constant dense<0.000000e+00> : vector<32x32xf32>
    %67 = tpu.matmul %64, %65, %cst_39 {dimension_numbers = #tpu.dot_dimension_numbers<[1], [0], [0], [1], [0, 0, 1, 1], [], []>} : vector<32x8xf32>, vector<8x32xf32>, vector<32x32xf32> -> vector<32x32xf32>
    %cst_40 = arith.constant 0.353553385 : f32
    %68 = vector.broadcast %cst_40 : f32 to vector<32x32xf32>
    %69 = arith.mulf %67, %68 : vector<32x32xf32>
    %70 = arith.addf %69, %5 : vector<32x32xf32>
    %cst_41 = arith.constant dense<0xFF800000> : vector<32xf32>
    %71 = vector.multi_reduction <maximumf>, %70, %cst_41 [1] : vector<32x32xf32> to vector<32xf32>
    %72 = vector.shape_cast %71 : vector<32xf32> to vector<32x1xf32>
    %73 = vector.broadcast %72 : vector<32x1xf32> to vector<32x32xf32>
    %74 = arith.subf %70, %73 : vector<32x32xf32>
    %75 = math.exp %74 : vector<32x32xf32>
    %cst_42 = arith.constant dense<0.000000e+00> : vector<32xf32>
    %76 = vector.multi_reduction <add>, %75, %cst_42 [1] : vector<32x32xf32> to vector<32xf32>
    %77 = vector.shape_cast %76 : vector<32xf32> to vector<32x1xf32>
    %78 = tpu.reciprocal %77 {approx = true} : vector<32x1xf32> -> vector<32x1xf32>
    %79 = vector.broadcast %78 : vector<32x1xf32> to vector<32x32xf32>
    %80 = arith.mulf %75, %79 : vector<32x32xf32>
    %cst_43 = arith.constant dense<0.000000e+00> : vector<32x8xf32>
    %81 = tpu.matmul %80, %66, %cst_43 {dimension_numbers = #tpu.dot_dimension_numbers<[1], [0], [0], [1], [0, 0, 1, 1], [], []>} : vector<32x32xf32>, vector<32x8xf32>, vector<32x8xf32> -> vector<32x8xf32>
    %82 = vector.extract_strided_slice %21 {offsets = [0, 16], sizes = [32, 8], strides = [1, 1]} : vector<32x32xf32> to vector<32x8xf32>
    %83 = vector.extract_strided_slice %45 {offsets = [16, 0], sizes = [8, 32], strides = [1, 1]} : vector<32x32xf32> to vector<8x32xf32>
    %84 = vector.extract_strided_slice %44 {offsets = [0, 16], sizes = [32, 8], strides = [1, 1]} : vector<32x32xf32> to vector<32x8xf32>
    %cst_44 = arith.constant dense<0.000000e+00> : vector<32x32xf32>
    %85 = tpu.matmul %82, %83, %cst_44 {dimension_numbers = #tpu.dot_dimension_numbers<[1], [0], [0], [1], [0, 0, 1, 1], [], []>} : vector<32x8xf32>, vector<8x32xf32>, vector<32x32xf32> -> vector<32x32xf32>
    %cst_45 = arith.constant 0.353553385 : f32
    %86 = vector.broadcast %cst_45 : f32 to vector<32x32xf32>
    %87 = arith.mulf %85, %86 : vector<32x32xf32>
    %88 = arith.addf %87, %5 : vector<32x32xf32>
    %cst_46 = arith.constant dense<0xFF800000> : vector<32xf32>
    %89 = vector.multi_reduction <maximumf>, %88, %cst_46 [1] : vector<32x32xf32> to vector<32xf32>
    %90 = vector.shape_cast %89 : vector<32xf32> to vector<32x1xf32>
    %91 = vector.broadcast %90 : vector<32x1xf32> to vector<32x32xf32>
    %92 = arith.subf %88, %91 : vector<32x32xf32>
    %93 = math.exp %92 : vector<32x32xf32>
    %cst_47 = arith.constant dense<0.000000e+00> : vector<32xf32>
    %94 = vector.multi_reduction <add>, %93, %cst_47 [1] : vector<32x32xf32> to vector<32xf32>
    %95 = vector.shape_cast %94 : vector<32xf32> to vector<32x1xf32>
    %96 = tpu.reciprocal %95 {approx = true} : vector<32x1xf32> -> vector<32x1xf32>
    %97 = vector.broadcast %96 : vector<32x1xf32> to vector<32x32xf32>
    %98 = arith.mulf %93, %97 : vector<32x32xf32>
    %cst_48 = arith.constant dense<0.000000e+00> : vector<32x8xf32>
    %99 = tpu.matmul %98, %84, %cst_48 {dimension_numbers = #tpu.dot_dimension_numbers<[1], [0], [0], [1], [0, 0, 1, 1], [], []>} : vector<32x32xf32>, vector<32x8xf32>, vector<32x8xf32> -> vector<32x8xf32>
    %100 = vector.extract_strided_slice %21 {offsets = [0, 24], sizes = [32, 8], strides = [1, 1]} : vector<32x32xf32> to vector<32x8xf32>
    %101 = vector.extract_strided_slice %45 {offsets = [24, 0], sizes = [8, 32], strides = [1, 1]} : vector<32x32xf32> to vector<8x32xf32>
    %102 = vector.extract_strided_slice %44 {offsets = [0, 24], sizes = [32, 8], strides = [1, 1]} : vector<32x32xf32> to vector<32x8xf32>
    %cst_49 = arith.constant dense<0.000000e+00> : vector<32x32xf32>
    %103 = tpu.matmul %100, %101, %cst_49 {dimension_numbers = #tpu.dot_dimension_numbers<[1], [0], [0], [1], [0, 0, 1, 1], [], []>} : vector<32x8xf32>, vector<8x32xf32>, vector<32x32xf32> -> vector<32x32xf32>
    %cst_50 = arith.constant 0.353553385 : f32
    %104 = vector.broadcast %cst_50 : f32 to vector<32x32xf32>
    %105 = arith.mulf %103, %104 : vector<32x32xf32>
    %106 = arith.addf %105, %5 : vector<32x32xf32>
    %cst_51 = arith.constant dense<0xFF800000> : vector<32xf32>
    %107 = vector.multi_reduction <maximumf>, %106, %cst_51 [1] : vector<32x32xf32> to vector<32xf32>
    %108 = vector.shape_cast %107 : vector<32xf32> to vector<32x1xf32>
    %109 = vector.broadcast %108 : vector<32x1xf32> to vector<32x32xf32>
    %110 = arith.subf %106, %109 : vector<32x32xf32>
    %111 = math.exp %110 : vector<32x32xf32>
    %cst_52 = arith.constant dense<0.000000e+00> : vector<32xf32>
    %112 = vector.multi_reduction <add>, %111, %cst_52 [1] : vector<32x32xf32> to vector<32xf32>
    %113 = vector.shape_cast %112 : vector<32xf32> to vector<32x1xf32>
    %114 = tpu.reciprocal %113 {approx = true} : vector<32x1xf32> -> vector<32x1xf32>
    %115 = vector.broadcast %114 : vector<32x1xf32> to vector<32x32xf32>
    %116 = arith.mulf %111, %115 : vector<32x32xf32>
    %cst_53 = arith.constant dense<0.000000e+00> : vector<32x8xf32>
    %117 = tpu.matmul %116, %102, %cst_53 {dimension_numbers = #tpu.dot_dimension_numbers<[1], [0], [0], [1], [0, 0, 1, 1], [], []>} : vector<32x32xf32>, vector<32x8xf32>, vector<32x8xf32> -> vector<32x8xf32>
    %118 = tpu.concatenate %63, %81, %99, %117 in 1 : vector<32x8xf32>, vector<32x8xf32>, vector<32x8xf32>, vector<32x8xf32> -> vector<32x32xf32>
    %c0_54 = arith.constant 0 : index
    %c0_55 = arith.constant 0 : index
    %c0_56 = arith.constant 0 : index
    %119 = vector.load %arg12[%c0_54, %c0_55, %c0_56] : memref<1x32x32xf32, #tpu.memory_space<vmem>>, vector<1x32x32xf32>
    %120 = vector.shape_cast %119 : vector<1x32x32xf32> to vector<32x32xf32>
    %cst_57 = arith.constant dense<0.000000e+00> : vector<32x32xf32>
    %121 = tpu.matmul %118, %120, %cst_57 {dimension_numbers = #tpu.dot_dimension_numbers<[1], [0], [0], [1], [0, 0, 1, 1], [], []>} : vector<32x32xf32>, vector<32x32xf32>, vector<32x32xf32> -> vector<32x32xf32>
    %c0_58 = arith.constant 0 : index
    %c0_59 = arith.constant 0 : index
    %c0_60 = arith.constant 0 : index
    %122 = vector.load %arg13[%c0_58, %c0_59, %c0_60] : memref<1x1x32xf32, #tpu.memory_space<vmem>>, vector<1x1x32xf32>
    %123 = vector.shape_cast %122 : vector<1x1x32xf32> to vector<1x32xf32>
    %124 = vector.broadcast %123 : vector<1x32xf32> to vector<32x32xf32>
    %125 = arith.addf %121, %124 : vector<32x32xf32>
    %cst_61 = arith.constant dense<0.000000e+00> : vector<32xf32>
    %126 = vector.multi_reduction <add>, %125, %cst_61 [1] : vector<32x32xf32> to vector<32xf32>
    %127 = vector.shape_cast %126 : vector<32xf32> to vector<32x1xf32>
    %cst_62 = arith.constant 3.200000e+01 : f32
    %128 = vector.broadcast %cst_62 : f32 to vector<32x1xf32>
    %129 = arith.divf %127, %128 : vector<32x1xf32>
    %130 = vector.broadcast %129 : vector<32x1xf32> to vector<32x32xf32>
    %131 = arith.subf %125, %130 : vector<32x32xf32>
    %132 = arith.mulf %131, %131 : vector<32x32xf32>
    %cst_63 = arith.constant dense<0.000000e+00> : vector<32xf32>
    %133 = vector.multi_reduction <add>, %132, %cst_63 [1] : vector<32x32xf32> to vector<32xf32>
    %134 = vector.shape_cast %133 : vector<32xf32> to vector<32x1xf32>
    %cst_64 = arith.constant 3.200000e+01 : f32
    %135 = vector.broadcast %cst_64 : f32 to vector<32x1xf32>
    %136 = arith.divf %134, %135 : vector<32x1xf32>
    %137 = vector.broadcast %129 : vector<32x1xf32> to vector<32x32xf32>
    %138 = arith.subf %125, %137 : vector<32x32xf32>
    %cst_65 = arith.constant 9.99999974E-6 : f32
    %139 = vector.broadcast %cst_65 : f32 to vector<32x1xf32>
    %140 = arith.addf %136, %139 : vector<32x1xf32>
    %141 = math.rsqrt %140 : vector<32x1xf32>
    %142 = vector.broadcast %141 : vector<32x1xf32> to vector<32x32xf32>
    %143 = arith.mulf %138, %142 : vector<32x32xf32>
    %c0_66 = arith.constant 0 : index
    %c0_67 = arith.constant 0 : index
    %c0_68 = arith.constant 0 : index
    %144 = vector.load %arg14[%c0_66, %c0_67, %c0_68] : memref<1x1x32xf32, #tpu.memory_space<vmem>>, vector<1x1x32xf32>
    %145 = vector.shape_cast %144 : vector<1x1x32xf32> to vector<1x32xf32>
    %146 = vector.broadcast %145 : vector<1x32xf32> to vector<32x32xf32>
    %147 = arith.mulf %143, %146 : vector<32x32xf32>
    %c0_69 = arith.constant 0 : index
    %c0_70 = arith.constant 0 : index
    %c0_71 = arith.constant 0 : index
    %148 = vector.load %arg15[%c0_69, %c0_70, %c0_71] : memref<1x1x32xf32, #tpu.memory_space<vmem>>, vector<1x1x32xf32>
    %149 = vector.shape_cast %148 : vector<1x1x32xf32> to vector<1x32xf32>
    %150 = vector.broadcast %149 : vector<1x32xf32> to vector<32x32xf32>
    %151 = arith.addf %147, %150 : vector<32x32xf32>
    %c0_72 = arith.constant 0 : index
    %c0_73 = arith.constant 0 : index
    %c0_74 = arith.constant 0 : index
    %c0_75 = arith.constant 0 : index
    %152 = vector.load %arg16[%c0_72, %c0_73, %c0_74, %c0_75] : memref<1x1x32x32xf32, #tpu.memory_space<vmem>>, vector<1x1x32x32xf32>
    %153 = vector.shape_cast %152 : vector<1x1x32x32xf32> to vector<32x32xf32>
    %154 = vector.shape_cast %151 : vector<32x32xf32> to vector<1x1x32x32xf32>
    tpu.vector_store %arg16[%c0_72, %c0_73, %c0_74, %c0_75], %154 {strides = array<i32>} : memref<1x1x32x32xf32, #tpu.memory_space<vmem>>, vector<1x1x32x32xf32>,
    return
  }
  func.func @transform_0(%arg0: i32, %arg1: i32, %arg2: i32) -> (i32, i32, i32, i32) {
    %c0_i32 = arith.constant 0 : i32
    %c0_i32_0 = arith.constant 0 : i32
    return %arg0, %arg1, %arg2, %c0_i32 : i32, i32, i32, i32
  }
  func.func @transform_1(%arg0: i32, %arg1: i32, %arg2: i32) -> (i32, i32, i32, i32) {
    %c0_i32 = arith.constant 0 : i32
    %c0_i32_0 = arith.constant 0 : i32
    return %arg0, %arg1, %arg2, %c0_i32 : i32, i32, i32, i32
  }
  func.func @transform_2(%arg0: i32, %arg1: i32, %arg2: i32) -> (i32, i32, i32) {
    %c0_i32 = arith.constant 0 : i32
    %c0_i32_0 = arith.constant 0 : i32
    %c0_i32_1 = arith.constant 0 : i32
    return %arg1, %c0_i32, %c0_i32_0 : i32, i32, i32
  }
  func.func @transform_3(%arg0: i32, %arg1: i32, %arg2: i32) -> (i32, i32, i32) {
    %c0_i32 = arith.constant 0 : i32
    %c0_i32_0 = arith.constant 0 : i32
    %c0_i32_1 = arith.constant 0 : i32
    return %arg0, %c0_i32, %c0_i32_0 : i32, i32, i32
  }
  func.func @transform_4(%arg0: i32, %arg1: i32, %arg2: i32) -> (i32, i32, i32) {
    %c0_i32 = arith.constant 0 : i32
    %c0_i32_0 = arith.constant 0 : i32
    %c0_i32_1 = arith.constant 0 : i32
    return %arg0, %c0_i32, %c0_i32_0 : i32, i32, i32
  }
  func.func @transform_5(%arg0: i32, %arg1: i32, %arg2: i32) -> (i32, i32, i32) {
    %c0_i32 = arith.constant 0 : i32
    %c0_i32_0 = arith.constant 0 : i32
    %c0_i32_1 = arith.constant 0 : i32
    return %arg0, %c0_i32, %c0_i32_0 : i32, i32, i32
  }
  func.func @transform_6(%arg0: i32, %arg1: i32, %arg2: i32) -> (i32, i32, i32) {
    %c0_i32 = arith.constant 0 : i32
    %c0_i32_0 = arith.constant 0 : i32
    %c0_i32_1 = arith.constant 0 : i32
    return %arg0, %c0_i32, %c0_i32_0 : i32, i32, i32
  }
  func.func @transform_7(%arg0: i32, %arg1: i32, %arg2: i32) -> (i32, i32, i32) {
    %c0_i32 = arith.constant 0 : i32
    %c0_i32_0 = arith.constant 0 : i32
    %c0_i32_1 = arith.constant 0 : i32
    return %arg0, %c0_i32, %c0_i32_0 : i32, i32, i32
  }
  func.func @transform_8(%arg0: i32, %arg1: i32, %arg2: i32) -> (i32, i32, i32) {
    %c0_i32 = arith.constant 0 : i32
    %c0_i32_0 = arith.constant 0 : i32
    %c0_i32_1 = arith.constant 0 : i32
    return %arg0, %c0_i32, %c0_i32_0 : i32, i32, i32
  }
  func.func @transform_9(%arg0: i32, %arg1: i32, %arg2: i32) -> (i32, i32, i32) {
    %c0_i32 = arith.constant 0 : i32
    %c0_i32_0 = arith.constant 0 : i32
    %c0_i32_1 = arith.constant 0 : i32
    return %arg0, %c0_i32, %c0_i32_0 : i32, i32, i32
  }
  func.func @transform_10(%arg0: i32, %arg1: i32, %arg2: i32) -> (i32, i32, i32) {
    %c0_i32 = arith.constant 0 : i32
    %c0_i32_0 = arith.constant 0 : i32
    %c0_i32_1 = arith.constant 0 : i32
    return %arg0, %c0_i32, %c0_i32_0 : i32, i32, i32
  }
  func.func @transform_11(%arg0: i32, %arg1: i32, %arg2: i32) -> (i32, i32, i32) {
    %c0_i32 = arith.constant 0 : i32
    %c0_i32_0 = arith.constant 0 : i32
    %c0_i32_1 = arith.constant 0 : i32
    return %arg0, %c0_i32, %c0_i32_0 : i32, i32, i32
  }
  func.func @transform_12(%arg0: i32, %arg1: i32, %arg2: i32) -> (i32, i32, i32) {
    %c0_i32 = arith.constant 0 : i32
    %c0_i32_0 = arith.constant 0 : i32
    %c0_i32_1 = arith.constant 0 : i32
    return %arg0, %c0_i32, %c0_i32_0 : i32, i32, i32
  }
  func.func @transform_13(%arg0: i32, %arg1: i32, %arg2: i32) -> (i32, i32, i32, i32) {
    %c0_i32 = arith.constant 0 : i32
    %c0_i32_0 = arith.constant 0 : i32
    return %arg0, %arg1, %arg2, %c0_i32 : i32, i32, i32, i32
  }
}

</mosaic_0001>

<llo_original>
// kernel: decoder_forward.2
$region0: #{decoder_forward.2}
  #allocation0 [shape = 'u32[]', space=smem, size = 0x4, offset = 0x4, fixed_abs, tag = 'smem constant byte address 0x4 - core index']
  #allocation1 [shape = 'u32[144,128]{1,0:T(1,128)}', space=vmem, size = 0x12000, scoped, tag = 'internal scratch']
  %s0 = inlined_call_operand.vmem [shape: f32[2,2,32,32], index: 0, kind: input, shape index: {}]
  %s1 = inlined_call_operand.vmem [shape: f32[2,2,32,32], index: 1, kind: input, shape index: {}]
  %s2 = inlined_call_operand.vmem [shape: f32[2,32,32], index: 2, kind: input, shape index: {}]
  %s3 = inlined_call_operand.vmem [shape: f32[2,96,32], index: 3, kind: input, shape index: {}]
  %s4 = inlined_call_operand.vmem [shape: f32[2,1,32], index: 4, kind: input, shape index: {}]
  %s5 = inlined_call_operand.vmem [shape: f32[2,96,32], index: 5, kind: input, shape index: {}]
  %s6 = inlined_call_operand.vmem [shape: f32[2,1,32], index: 6, kind: input, shape index: {}]
  %s7 = inlined_call_operand.vmem [shape: f32[2,32,32], index: 7, kind: input, shape index: {}]
  %s8 = inlined_call_operand.vmem [shape: f32[2,1,32], index: 8, kind: input, shape index: {}]
  %s9 = inlined_call_operand.vmem [shape: f32[2,32,32], index: 9, kind: input, shape index: {}]
  %s10 = inlined_call_operand.vmem [shape: f32[2,1,32], index: 10, kind: input, shape index: {}]
  %s11 = inlined_call_operand.vmem [shape: f32[2,1,32], index: 11, kind: input, shape index: {}]
  %s12 = inlined_call_operand.vmem [shape: f32[2,1,32], index: 12, kind: input, shape index: {}]
  %s13 = inlined_call_operand.vmem [shape: f32[2,2,32,32], index: 13, kind: output, shape index: {}]
  %s14 = sld [smem:[#allocation0]]
  $region85: #{decoder_forward.2} parent=0
    _
  %s16 = ssub.s32 1, %s14
  %s17 = scalar_select 0, %s16, %s14
  loop: start=0, step=1, limit=6
  $region2: #{decoder_forward.2} parent=0 // loop_pre_header
    _
  $region3: #{decoder_forward.2} parent=0 // loop_header
    %s19 = sphi 0, %s23
    %p20 = scmp.ge.s32.totalorder %s19, 6
    %s26 = sphi 0, %s45
    %s27 = sphi 0, %s41
    %s28 = sphi 0, %s37
    %s29 = sphi 0, %s26
    %s30 = sphi 0, %s27
    %s31 = sphi 0, %s28
    %s32 = sphi 0, %s29
    %s33 = sphi 0, %s30
    %s34 = sphi 0, %s31
    %s52 = sphi 0, %s54
    %s55 = sphi 0, %s52
    %s56 = sphi 0, %s55
    %s72 = sphi 0, %s56
    %s82 = sphi 0, %s84
    %s85 = sphi 0, %s82
    %s86 = sphi 0, %s85
    %s102 = sphi 0, %s86
    %s108 = sphi 0, %s110
    %s111 = sphi 0, %s108
    %s112 = sphi 0, %s111
    %s128 = sphi 0, %s112
    %s134 = sphi 0, %s136
    %s137 = sphi 0, %s134
    %s138 = sphi 0, %s137
    %s154 = sphi 0, %s138
    %s160 = sphi 0, %s162
    %s163 = sphi 0, %s160
    %s164 = sphi 0, %s163
    %s180 = sphi 0, %s164
    %s186 = sphi 0, %s188
    %s189 = sphi 0, %s186
    %s190 = sphi 0, %s189
    %s206 = sphi 0, %s190
    %s212 = sphi 0, %s214
    %s215 = sphi 0, %s212
    %s216 = sphi 0, %s215
    %s232 = sphi 0, %s216
    %s238 = sphi 0, %s240
    %s241 = sphi 0, %s238
    %s242 = sphi 0, %s241
    %s258 = sphi 0, %s242
    %s264 = sphi 0, %s266
    %s267 = sphi 0, %s264
    %s268 = sphi 0, %s267
    %s284 = sphi 0, %s268
    %s290 = sphi 0, %s292
    %s293 = sphi 0, %s290
    %s294 = sphi 0, %s293
    %s310 = sphi 0, %s294
    %s316 = sphi 0, %s318
    %s319 = sphi 0, %s316
    %s320 = sphi 0, %s319
    %s336 = sphi 0, %s320
    %s342 = sphi 0, %s344
    %s345 = sphi 0, %s342
    %s346 = sphi 0, %s345
    %s362 = sphi 0, %s346
    %s368 = sphi 0, %s370
    %s371 = sphi 0, %s368
    %s372 = sphi 0, %s371
    %s388 = sphi 0, %s372
    %s398 = sphi 0, %s400
    %s401 = sphi 0, %s398
    %s402 = sphi 0, %s401
    %s418 = sphi 0, %s402
  $region4: #{decoder_forward.2} parent=0 // loop_header_branch
    %22 = sbr.rel (%p20) target = $region8
  $region5: #{decoder_forward.2} parent=0 // loop_body
    %s24 = ssub.s32 %s19, 1
    %s25 = ssub.s32 %s19, 2
    %s35 = sadd.s32 1, %s28
    %p36 = scmp.ge.s32.totalorder %s35, 1
    %s37 = scalar_select %p36, 0, %s35
    %s38 = sadd.s32 1, %s27
    %s39 = scalar_select %p36, %s38, %s27
    %p40 = scmp.ge.s32.totalorder %s39, 2
    %s41 = scalar_select %p40, 0, %s39
    %s42 = sadd.s32 1, %s26
    %s43 = scalar_select %p40, %s42, %s26
    %p44 = scmp.ge.s32.totalorder %s43, 2
    %s45 = scalar_select %p44, 0, %s43
    %s46 = ssub.s32 %s26, %s45
    %s47 = ssub.s32 %s27, %s41
    %s48 = sor.u32 %s46, %s47
    %s49 = ssub.s32 %s28, %s37
    %s50 = sor.u32 %s48, %s49
    %p51 = scmp.eq.s32.totalorder %s50, 0
    %s53 = sadd.s32 %s52, 1
    %s54 = scalar_select %p51, %s52, %s53
    %p57 = pneg %p51
    %p58 = scmp.eq.s32.totalorder %s19, 3
    %p59 = por %p57, %p58
    %p60 = scmp.ne.s32.totalorder %s52, %s55
    %p61 = scmp.eq.s32.totalorder %s19, 0
    %p62 = por %p60, %p61
    %p63 = scmp.ne.s32.totalorder %s52, %s55
    %p64 = scmp.eq.s32.totalorder %s24, 3
    %p65 = por %p63, %p64
    %p66 = scmp.ne.s32.totalorder %s55, %s56
    %p67 = scmp.eq.s32.totalorder %s24, 0
    %p68 = por %p66, %p67
    %p69 = scmp.ne.s32.totalorder %s55, %s56
    %p70 = scmp.eq.s32.totalorder %s25, 3
    %p71 = por %p69, %p70
    %p73 = scmp.ne.s32.totalorder %s56, %s72
    %p74 = scmp.eq.s32.totalorder %s25, 0
    %p75 = por %p73, %p74
    %s76 = ssub.s32 %s26, %s45
    %s77 = ssub.s32 %s27, %s41
    %s78 = sor.u32 %s76, %s77
    %s79 = ssub.s32 %s28, %s37
    %s80 = sor.u32 %s78, %s79
    %p81 = scmp.eq.s32.totalorder %s80, 0
    %s83 = sadd.s32 %s82, 1
    %s84 = scalar_select %p81, %s82, %s83
    %p87 = pneg %p81
    %p88 = scmp.eq.s32.totalorder %s19, 3
    %p89 = por %p87, %p88
    %p90 = scmp.ne.s32.totalorder %s82, %s85
    %p91 = scmp.eq.s32.totalorder %s19, 0
    %p92 = por %p90, %p91
    %p93 = scmp.ne.s32.totalorder %s82, %s85
    %p94 = scmp.eq.s32.totalorder %s24, 3
    %p95 = por %p93, %p94
    %p96 = scmp.ne.s32.totalorder %s85, %s86
    %p97 = scmp.eq.s32.totalorder %s24, 0
    %p98 = por %p96, %p97
    %p99 = scmp.ne.s32.totalorder %s85, %s86
    %p100 = scmp.eq.s32.totalorder %s25, 3
    %p101 = por %p99, %p100
    %p103 = scmp.ne.s32.totalorder %s86, %s102
    %p104 = scmp.eq.s32.totalorder %s25, 0
    %p105 = por %p103, %p104
    %s106 = ssub.s32 %s27, %s41
    %p107 = scmp.eq.s32.totalorder %s106, 0
    %s109 = sadd.s32 %s108, 1
    %s110 = scalar_select %p107, %s108, %s109
    %p113 = pneg %p107
    %p114 = scmp.eq.s32.totalorder %s19, 3
    %p115 = por %p113, %p114
    %p116 = scmp.ne.s32.totalorder %s108, %s111
    %p117 = scmp.eq.s32.totalorder %s19, 0
    %p118 = por %p116, %p117
    %p119 = scmp.ne.s32.totalorder %s108, %s111
    %p120 = scmp.eq.s32.totalorder %s24, 3
    %p121 = por %p119, %p120
    %p122 = scmp.ne.s32.totalorder %s111, %s112
    %p123 = scmp.eq.s32.totalorder %s24, 0
    %p124 = por %p122, %p123
    %p125 = scmp.ne.s32.totalorder %s111, %s112
    %p126 = scmp.eq.s32.totalorder %s25, 3
    %p127 = por %p125, %p126
    %p129 = scmp.ne.s32.totalorder %s112, %s128
    %p130 = scmp.eq.s32.totalorder %s25, 0
    %p131 = por %p129, %p130
    %s132 = ssub.s32 %s26, %s45
    %p133 = scmp.eq.s32.totalorder %s132, 0
    %s135 = sadd.s32 %s134, 1
    %s136 = scalar_select %p133, %s134, %s135
    %p139 = pneg %p133
    %p140 = scmp.eq.s32.totalorder %s19, 3
    %p141 = por %p139, %p140
    %p142 = scmp.ne.s32.totalorder %s134, %s137
    %p143 = scmp.eq.s32.totalorder %s19, 0
    %p144 = por %p142, %p143
    %p145 = scmp.ne.s32.totalorder %s134, %s137
    %p146 = scmp.eq.s32.totalorder %s24, 3
    %p147 = por %p145, %p146
    %p148 = scmp.ne.s32.totalorder %s137, %s138
    %p149 = scmp.eq.s32.totalorder %s24, 0
    %p150 = por %p148, %p149
    %p151 = scmp.ne.s32.totalorder %s137, %s138
    %p152 = scmp.eq.s32.totalorder %s25, 3
    %p153 = por %p151, %p152
    %p155 = scmp.ne.s32.totalorder %s138, %s154
    %p156 = scmp.eq.s32.totalorder %s25, 0
    %p157 = por %p155, %p156
    %s158 = ssub.s32 %s26, %s45
    %p159 = scmp.eq.s32.totalorder %s158, 0
    %s161 = sadd.s32 %s160, 1
    %s162 = scalar_select %p159, %s160, %s161
    %p165 = pneg %p159
    %p166 = scmp.eq.s32.totalorder %s19, 3
    %p167 = por %p165, %p166
    %p168 = scmp.ne.s32.totalorder %s160, %s163
    %p169 = scmp.eq.s32.totalorder %s19, 0
    %p170 = por %p168, %p169
    %p171 = scmp.ne.s32.totalorder %s160, %s163
    %p172 = scmp.eq.s32.totalorder %s24, 3
    %p173 = por %p171, %p172
    %p174 = scmp.ne.s32.totalorder %s163, %s164
    %p175 = scmp.eq.s32.totalorder %s24, 0
    %p176 = por %p174, %p175
    %p177 = scmp.ne.s32.totalorder %s163, %s164
    %p178 = scmp.eq.s32.totalorder %s25, 3
    %p179 = por %p177, %p178
    %p181 = scmp.ne.s32.totalorder %s164, %s180
    %p182 = scmp.eq.s32.totalorder %s25, 0
    %p183 = por %p181, %p182
    %s184 = ssub.s32 %s26, %s45
    %p185 = scmp.eq.s32.totalorder %s184, 0
    %s187 = sadd.s32 %s186, 1
    %s188 = scalar_select %p185, %s186, %s187
    %p191 = pneg %p185
    %p192 = scmp.eq.s32.totalorder %s19, 3
    %p193 = por %p191, %p192
    %p194 = scmp.ne.s32.totalorder %s186, %s189
    %p195 = scmp.eq.s32.totalorder %s19, 0
    %p196 = por %p194, %p195
    %p197 = scmp.ne.s32.totalorder %s186, %s189
    %p198 = scmp.eq.s32.totalorder %s24, 3
    %p199 = por %p197, %p198
    %p200 = scmp.ne.s32.totalorder %s189, %s190
    %p201 = scmp.eq.s32.totalorder %s24, 0
    %p202 = por %p200, %p201
    %p203 = scmp.ne.s32.totalorder %s189, %s190
    %p204 = scmp.eq.s32.totalorder %s25, 3
    %p205 = por %p203, %p204
    %p207 = scmp.ne.s32.totalorder %s190, %s206
    %p208 = scmp.eq.s32.totalorder %s25, 0
    %p209 = por %p207, %p208
    %s210 = ssub.s32 %s26, %s45
    %p211 = scmp.eq.s32.totalorder %s210, 0
    %s213 = sadd.s32 %s212, 1
    %s214 = scalar_select %p211, %s212, %s213
    %p217 = pneg %p211
    %p218 = scmp.eq.s32.totalorder %s19, 3
    %p219 = por %p217, %p218
    %p220 = scmp.ne.s32.totalorder %s212, %s215
    %p221 = scmp.eq.s32.totalorder %s19, 0
    %p222 = por %p220, %p221
    %p223 = scmp.ne.s32.totalorder %s212, %s215
    %p224 = scmp.eq.s32.totalorder %s24, 3
    %p225 = por %p223, %p224
    %p226 = scmp.ne.s32.totalorder %s215, %s216
    %p227 = scmp.eq.s32.totalorder %s24, 0
    %p228 = por %p226, %p227
    %p229 = scmp.ne.s32.totalorder %s215, %s216
    %p230 = scmp.eq.s32.totalorder %s25, 3
    %p231 = por %p229, %p230
    %p233 = scmp.ne.s32.totalorder %s216, %s232
    %p234 = scmp.eq.s32.totalorder %s25, 0
    %p235 = por %p233, %p234
    %s236 = ssub.s32 %s26, %s45
    %p237 = scmp.eq.s32.totalorder %s236, 0
    %s239 = sadd.s32 %s238, 1
    %s240 = scalar_select %p237, %s238, %s239
    %p243 = pneg %p237
    %p244 = scmp.eq.s32.totalorder %s19, 3
    %p245 = por %p243, %p244
    %p246 = scmp.ne.s32.totalorder %s238, %s241
    %p247 = scmp.eq.s32.totalorder %s19, 0
    %p248 = por %p246, %p247
    %p249 = scmp.ne.s32.totalorder %s238, %s241
    %p250 = scmp.eq.s32.totalorder %s24, 3
    %p251 = por %p249, %p250
    %p252 = scmp.ne.s32.totalorder %s241, %s242
    %p253 = scmp.eq.s32.totalorder %s24, 0
    %p254 = por %p252, %p253
    %p255 = scmp.ne.s32.totalorder %s241, %s242
    %p256 = scmp.eq.s32.totalorder %s25, 3
    %p257 = por %p255, %p256
    %p259 = scmp.ne.s32.totalorder %s242, %s258
    %p260 = scmp.eq.s32.totalorder %s25, 0
    %p261 = por %p259, %p260
    %s262 = ssub.s32 %s26, %s45
    %p263 = scmp.eq.s32.totalorder %s262, 0
    %s265 = sadd.s32 %s264, 1
    %s266 = scalar_select %p263, %s264, %s265
    %p269 = pneg %p263
    %p270 = scmp.eq.s32.totalorder %s19, 3
    %p271 = por %p269, %p270
    %p272 = scmp.ne.s32.totalorder %s264, %s267
    %p273 = scmp.eq.s32.totalorder %s19, 0
    %p274 = por %p272, %p273
    %p275 = scmp.ne.s32.totalorder %s264, %s267
    %p276 = scmp.eq.s32.totalorder %s24, 3
    %p277 = por %p275, %p276
    %p278 = scmp.ne.s32.totalorder %s267, %s268
    %p279 = scmp.eq.s32.totalorder %s24, 0
    %p280 = por %p278, %p279
    %p281 = scmp.ne.s32.totalorder %s267, %s268
    %p282 = scmp.eq.s32.totalorder %s25, 3
    %p283 = por %p281, %p282
    %p285 = scmp.ne.s32.totalorder %s268, %s284
    %p286 = scmp.eq.s32.totalorder %s25, 0
    %p287 = por %p285, %p286
    %s288 = ssub.s32 %s26, %s45
    %p289 = scmp.eq.s32.totalorder %s288, 0
    %s291 = sadd.s32 %s290, 1
    %s292 = scalar_select %p289, %s290, %s291
    %p295 = pneg %p289
    %p296 = scmp.eq.s32.totalorder %s19, 3
    %p297 = por %p295, %p296
    %p298 = scmp.ne.s32.totalorder %s290, %s293
    %p299 = scmp.eq.s32.totalorder %s19, 0
    %p300 = por %p298, %p299
    %p301 = scmp.ne.s32.totalorder %s290, %s293
    %p302 = scmp.eq.s32.totalorder %s24, 3
    %p303 = por %p301, %p302
    %p304 = scmp.ne.s32.totalorder %s293, %s294
    %p305 = scmp.eq.s32.totalorder %s24, 0
    %p306 = por %p304, %p305
    %p307 = scmp.ne.s32.totalorder %s293, %s294
    %p308 = scmp.eq.s32.totalorder %s25, 3
    %p309 = por %p307, %p308
    %p311 = scmp.ne.s32.totalorder %s294, %s310
    %p312 = scmp.eq.s32.totalorder %s25, 0
    %p313 = por %p311, %p312
    %s314 = ssub.s32 %s26, %s45
    %p315 = scmp.eq.s32.totalorder %s314, 0
    %s317 = sadd.s32 %s316, 1
    %s318 = scalar_select %p315, %s316, %s317
    %p321 = pneg %p315
    %p322 = scmp.eq.s32.totalorder %s19, 3
    %p323 = por %p321, %p322
    %p324 = scmp.ne.s32.totalorder %s316, %s319
    %p325 = scmp.eq.s32.totalorder %s19, 0
    %p326 = por %p324, %p325
    %p327 = scmp.ne.s32.totalorder %s316, %s319
    %p328 = scmp.eq.s32.totalorder %s24, 3
    %p329 = por %p327, %p328
    %p330 = scmp.ne.s32.totalorder %s319, %s320
    %p331 = scmp.eq.s32.totalorder %s24, 0
    %p332 = por %p330, %p331
    %p333 = scmp.ne.s32.totalorder %s319, %s320
    %p334 = scmp.eq.s32.totalorder %s25, 3
    %p335 = por %p333, %p334
    %p337 = scmp.ne.s32.totalorder %s320, %s336
    %p338 = scmp.eq.s32.totalorder %s25, 0
    %p339 = por %p337, %p338
    %s340 = ssub.s32 %s26, %s45
    %p341 = scmp.eq.s32.totalorder %s340, 0
    %s343 = sadd.s32 %s342, 1
    %s344 = scalar_select %p341, %s342, %s343
    %p347 = pneg %p341
    %p348 = scmp.eq.s32.totalorder %s19, 3
    %p349 = por %p347, %p348
    %p350 = scmp.ne.s32.totalorder %s342, %s345
    %p351 = scmp.eq.s32.totalorder %s19, 0
    %p352 = por %p350, %p351
    %p353 = scmp.ne.s32.totalorder %s342, %s345
    %p354 = scmp.eq.s32.totalorder %s24, 3
    %p355 = por %p353, %p354
    %p356 = scmp.ne.s32.totalorder %s345, %s346
    %p357 = scmp.eq.s32.totalorder %s24, 0
    %p358 = por %p356, %p357
    %p359 = scmp.ne.s32.totalorder %s345, %s346
    %p360 = scmp.eq.s32.totalorder %s25, 3
    %p361 = por %p359, %p360
    %p363 = scmp.ne.s32.totalorder %s346, %s362
    %p364 = scmp.eq.s32.totalorder %s25, 0
    %p365 = por %p363, %p364
    %s366 = ssub.s32 %s26, %s45
    %p367 = scmp.eq.s32.totalorder %s366, 0
    %s369 = sadd.s32 %s368, 1
    %s370 = scalar_select %p367, %s368, %s369
    %p373 = pneg %p367
    %p374 = scmp.eq.s32.totalorder %s19, 3
    %p375 = por %p373, %p374
    %p376 = scmp.ne.s32.totalorder %s368, %s371
    %p377 = scmp.eq.s32.totalorder %s19, 0
    %p378 = por %p376, %p377
    %p379 = scmp.ne.s32.totalorder %s368, %s371
    %p380 = scmp.eq.s32.totalorder %s24, 3
    %p381 = por %p379, %p380
    %p382 = scmp.ne.s32.totalorder %s371, %s372
    %p383 = scmp.eq.s32.totalorder %s24, 0
    %p384 = por %p382, %p383
    %p385 = scmp.ne.s32.totalorder %s371, %s372
    %p386 = scmp.eq.s32.totalorder %s25, 3
    %p387 = por %p385, %p386
    %p389 = scmp.ne.s32.totalorder %s372, %s388
    %p390 = scmp.eq.s32.totalorder %s25, 0
    %p391 = por %p389, %p390
    %s392 = ssub.s32 %s26, %s45
    %s393 = ssub.s32 %s27, %s41
    %s394 = sor.u32 %s392, %s393
    %s395 = ssub.s32 %s28, %s37
    %s396 = sor.u32 %s394, %s395
    %p397 = scmp.eq.s32.totalorder %s396, 0
    %s399 = sadd.s32 %s398, 1
    %s400 = scalar_select %p397, %s398, %s399
    %p403 = pneg %p397
    %p404 = scmp.eq.s32.totalorder %s19, 3
    %p405 = por %p403, %p404
    %p406 = scmp.ne.s32.totalorder %s398, %s401
    %p407 = scmp.eq.s32.totalorder %s19, 0
    %p408 = por %p406, %p407
    %p409 = scmp.ne.s32.totalorder %s398, %s401
    %p410 = scmp.eq.s32.totalorder %s24, 3
    %p411 = por %p409, %p410
    %p412 = scmp.ne.s32.totalorder %s401, %s402
    %p413 = scmp.eq.s32.totalorder %s24, 0
    %p414 = por %p412, %p413
    %p415 = scmp.ne.s32.totalorder %s401, %s402
    %p416 = scmp.eq.s32.totalorder %s25, 3
    %p417 = por %p415, %p416
    %p419 = scmp.ne.s32.totalorder %s402, %s418
    %p420 = scmp.eq.s32.totalorder %s25, 0
    %p421 = por %p419, %p420
    %p422 = scmp.le.s32.totalorder 1, %s19
    %p423 = scmp.lt.s32.totalorder %s19, 5
    %p424 = pnand %p422, %p423
    %p425 = pneg %p424
    // Predicated region
    $region9: #{decoder_forward.2} parent=5 // pred_check
      _
    $region10: #{decoder_forward.2} parent=5 // pred_check_branch
      %427 = sbr.rel (%p424) target = $region12
    $region11: #{decoder_forward.2} parent=5 // pred_region
      %s428 = ssub.s32 %s19, 1
    $region12: #{decoder_forward.2} parent=5 // pred_fallthru
      _
    %p429 = scmp.lt.s32.totalorder %s19, 4
    // Predicated region
    $region13: #{decoder_forward.2} parent=5 // pred_check
      %p430 = pneg %p429
    $region14: #{decoder_forward.2} parent=5 // pred_check_branch
      %432 = sbr.rel (%p430) target = $region16
    $region15: #{decoder_forward.2} parent=5 // pred_region
      // Predicated region
      $region17: #{decoder_forward.2} parent=15 // pred_check
        %p433 = pneg %p62
      $region18: #{decoder_forward.2} parent=15 // pred_check_branch
        %435 = sbr.rel (%p433) target = $region20
      $region19: #{decoder_forward.2} parent=15 // pred_region
        %s436 = smul.u32 4, %s28
        %p437 = scmp.lt.s32.totalorder %s26, 1
        %s438 = scalar_select %p437, %s26, 1
        %p439 = scmp.lt.s32.totalorder %s27, 1
        %s440 = scalar_select %p439, %s27, 1
        %p441 = scmp.lt.s32.totalorder %s436, 3
        %s442 = scalar_select %p441, %s436, 3
        %s443 = smul.addr %s440, 4
        %s444 = sadd.s32 %s442, %s443
        %s445 = smul.addr %s438, 8
        %s446 = sadd.s32 %s444, %s445
        %s447 = smul.addr %s446, 8
        %s448 = scalar_lea.vmem %s0, %s447
        %s449 = smul.u32 4, %s28
      $region20: #{decoder_forward.2} parent=15 // pred_fallthru
        _
      // Predicated region
      $region21: #{decoder_forward.2} parent=15 // pred_check
        %p450 = pneg %p92
      $region22: #{decoder_forward.2} parent=15 // pred_check_branch
        %452 = sbr.rel (%p450) target = $region24
      $region23: #{decoder_forward.2} parent=15 // pred_region
        %s453 = smul.u32 4, %s28
        %p454 = scmp.lt.s32.totalorder %s26, 1
        %s455 = scalar_select %p454, %s26, 1
        %p456 = scmp.lt.s32.totalorder %s27, 1
        %s457 = scalar_select %p456, %s27, 1
        %p458 = scmp.lt.s32.totalorder %s453, 3
        %s459 = scalar_select %p458, %s453, 3
        %s460 = smul.addr %s457, 4
        %s461 = sadd.s32 %s459, %s460
        %s462 = smul.addr %s455, 8
        %s463 = sadd.s32 %s461, %s462
        %s464 = smul.addr %s463, 8
        %s465 = scalar_lea.vmem %s1, %s464
        %s466 = smul.u32 4, %s28
      $region24: #{decoder_forward.2} parent=15 // pred_fallthru
        _
      // Predicated region
      $region25: #{decoder_forward.2} parent=15 // pred_check
        %p467 = pneg %p118
      $region26: #{decoder_forward.2} parent=15 // pred_check_branch
        %469 = sbr.rel (%p467) target = $region28
      $region27: #{decoder_forward.2} parent=15 // pred_region
        %p470 = scmp.lt.s32.totalorder %s27, 1
        %s471 = scalar_select %p470, %s27, 1
        %s472 = smul.addr %s471, 4
        %s473 = smul.addr %s472, 8
        %s474 = scalar_lea.vmem %s2, %s473
      $region28: #{decoder_forward.2} parent=15 // pred_fallthru
        _
      // Predicated region
      $region29: #{decoder_forward.2} parent=15 // pred_check
        %p475 = pneg %p144
      $region30: #{decoder_forward.2} parent=15 // pred_check_branch
        %477 = sbr.rel (%p475) target = $region32
      $region31: #{decoder_forward.2} parent=15 // pred_region
        %p478 = scmp.lt.s32.totalorder %s26, 1
        %s479 = scalar_select %p478, %s26, 1
        %s480 = smul.addr %s479, 12
        %s481 = smul.addr %s480, 8
        %s482 = scalar_lea.vmem %s3, %s481
      $region32: #{decoder_forward.2} parent=15 // pred_fallthru
        _
      // Predicated region
      $region33: #{decoder_forward.2} parent=15 // pred_check
        %p483 = pneg %p170
      $region34: #{decoder_forward.2} parent=15 // pred_check_branch
        %485 = sbr.rel (%p483) target = $region36
      $region35: #{decoder_forward.2} parent=15 // pred_region
        %p486 = scmp.lt.s32.totalorder %s26, 1
        %s487 = scalar_select %p486, %s26, 1
        %s488 = scalar_lea.vmem %s4, %s487
      $region36: #{decoder_forward.2} parent=15 // pred_fallthru
        _
      // Predicated region
      $region37: #{decoder_forward.2} parent=15 // pred_check
        %p489 = pneg %p196
      $region38: #{decoder_forward.2} parent=15 // pred_check_branch
        %491 = sbr.rel (%p489) target = $region40
      $region39: #{decoder_forward.2} parent=15 // pred_region
        %p492 = scmp.lt.s32.totalorder %s26, 1
        %s493 = scalar_select %p492, %s26, 1
        %s494 = smul.addr %s493, 12
        %s495 = smul.addr %s494, 8
        %s496 = scalar_lea.vmem %s5, %s495
      $region40: #{decoder_forward.2} parent=15 // pred_fallthru
        _
      // Predicated region
      $region41: #{decoder_forward.2} parent=15 // pred_check
        %p497 = pneg %p222
      $region42: #{decoder_forward.2} parent=15 // pred_check_branch
        %499 = sbr.rel (%p497) target = $region44
      $region43: #{decoder_forward.2} parent=15 // pred_region
        %p500 = scmp.lt.s32.totalorder %s26, 1
        %s501 = scalar_select %p500, %s26, 1
        %s502 = scalar_lea.vmem %s6, %s501
      $region44: #{decoder_forward.2} parent=15 // pred_fallthru
        _
      // Predicated region
      $region45: #{decoder_forward.2} parent=15 // pred_check
        %p503 = pneg %p248
      $region46: #{decoder_forward.2} parent=15 // pred_check_branch
        %505 = sbr.rel (%p503) target = $region48
      $region47: #{decoder_forward.2} parent=15 // pred_region
        %p506 = scmp.lt.s32.totalorder %s26, 1
        %s507 = scalar_select %p506, %s26, 1
        %s508 = smul.addr %s507, 4
        %s509 = smul.addr %s508, 8
        %s510 = scalar_lea.vmem %s7, %s509
      $region48: #{decoder_forward.2} parent=15 // pred_fallthru
        _
      // Predicated region
      $region49: #{decoder_forward.2} parent=15 // pred_check
        %p511 = pneg %p274
      $region50: #{decoder_forward.2} parent=15 // pred_check_branch
        %513 = sbr.rel (%p511) target = $region52
      $region51: #{decoder_forward.2} parent=15 // pred_region
        %p514 = scmp.lt.s32.totalorder %s26, 1
        %s515 = scalar_select %p514, %s26, 1
        %s516 = scalar_lea.vmem %s8, %s515
      $region52: #{decoder_forward.2} parent=15 // pred_fallthru
        _
      // Predicated region
      $region53: #{decoder_forward.2} parent=15 // pred_check
        %p517 = pneg %p300
      $region54: #{decoder_forward.2} parent=15 // pred_check_branch
        %519 = sbr.rel (%p517) target = $region56
      $region55: #{decoder_forward.2} parent=15 // pred_region
        %p520 = scmp.lt.s32.totalorder %s26, 1
        %s521 = scalar_select %p520, %s26, 1
        %s522 = smul.addr %s521, 4
        %s523 = smul.addr %s522, 8
        %s524 = scalar_lea.vmem %s9, %s523
      $region56: #{decoder_forward.2} parent=15 // pred_fallthru
        _
      // Predicated region
      $region57: #{decoder_forward.2} parent=15 // pred_check
        %p525 = pneg %p326
      $region58: #{decoder_forward.2} parent=15 // pred_check_branch
        %527 = sbr.rel (%p525) target = $region60
      $region59: #{decoder_forward.2} parent=15 // pred_region
        %p528 = scmp.lt.s32.totalorder %s26, 1
        %s529 = scalar_select %p528, %s26, 1
        %s530 = scalar_lea.vmem %s10, %s529
      $region60: #{decoder_forward.2} parent=15 // pred_fallthru
        _
      // Predicated region
      $region61: #{decoder_forward.2} parent=15 // pred_check
        %p531 = pneg %p352
      $region62: #{decoder_forward.2} parent=15 // pred_check_branch
        %533 = sbr.rel (%p531) target = $region64
      $region63: #{decoder_forward.2} parent=15 // pred_region
        %p534 = scmp.lt.s32.totalorder %s26, 1
        %s535 = scalar_select %p534, %s26, 1
        %s536 = scalar_lea.vmem %s11, %s535
      $region64: #{decoder_forward.2} parent=15 // pred_fallthru
        _
      // Predicated region
      $region65: #{decoder_forward.2} parent=15 // pred_check
        %p537 = pneg %p378
      $region66: #{decoder_forward.2} parent=15 // pred_check_branch
        %539 = sbr.rel (%p537) target = $region68
      $region67: #{decoder_forward.2} parent=15 // pred_region
        %p540 = scmp.lt.s32.totalorder %s26, 1
        %s541 = scalar_select %p540, %s26, 1
        %s542 = scalar_lea.vmem %s12, %s541
      $region68: #{decoder_forward.2} parent=15 // pred_fallthru
        _
    $region16: #{decoder_forward.2} parent=5 // pred_fallthru
      _
    %p543 = scmp.le.s32.totalorder 1, %s19
    %p544 = scmp.lt.s32.totalorder %s19, 5
    %p545 = pnand %p543, %p544
    %p546 = pneg %p545
    // Predicated region
    $region69: #{decoder_forward.2} parent=5 // pred_check
      _
    $region70: #{decoder_forward.2} parent=5 // pred_check_branch
      %548 = sbr.rel (%p545) target = $region72
    $region71: #{decoder_forward.2} parent=5 // pred_region
      %s549 = ssub.s32 %s19, 1
      %s550 = smul.u32 4, %s31
      %p551 = scmp.lt.s32.totalorder %s29, 1
      %s552 = scalar_select %p551, %s29, 1
      %p553 = scmp.lt.s32.totalorder %s30, 1
      %s554 = scalar_select %p553, %s30, 1
      %p555 = scmp.lt.s32.totalorder %s550, 3
      %s556 = scalar_select %p555, %s550, 3
      %s557 = smul.addr %s554, 4
      %s558 = sadd.s32 %s556, %s557
      %s559 = smul.addr %s552, 8
      %s560 = sadd.s32 %s558, %s559
      %s561 = smul.addr %s560, 8
      %s562 = scalar_lea.vmem %s0, %s561
      %p563 = pneg %p68
      %p564 = pneg %p65
      %s565 = smul.u32 4, %s31
      %p566 = scmp.lt.s32.totalorder %s29, 1
      %s567 = scalar_select %p566, %s29, 1
      %p568 = scmp.lt.s32.totalorder %s30, 1
      %s569 = scalar_select %p568, %s30, 1
      %p570 = scmp.lt.s32.totalorder %s565, 3
      %s571 = scalar_select %p570, %s565, 3
      %s572 = smul.addr %s569, 4
      %s573 = sadd.s32 %s571, %s572
      %s574 = smul.addr %s567, 8
      %s575 = sadd.s32 %s573, %s574
      %s576 = smul.addr %s575, 8
      %s577 = scalar_lea.vmem %s1, %s576
      %p578 = pneg %p98
      %p579 = pneg %p95
      %p580 = scmp.lt.s32.totalorder %s30, 1
      %s581 = scalar_select %p580, %s30, 1
      %s582 = smul.addr %s581, 4
      %s583 = smul.addr %s582, 8
      %s584 = scalar_lea.vmem %s2, %s583
      %p585 = pneg %p124
      %p586 = pneg %p121
      %p587 = scmp.lt.s32.totalorder %s29, 1
      %s588 = scalar_select %p587, %s29, 1
      %s589 = smul.addr %s588, 12
      %s590 = smul.addr %s589, 8
      %s591 = scalar_lea.vmem %s3, %s590
      %p592 = pneg %p150
      %p593 = pneg %p147
      %p594 = scmp.lt.s32.totalorder %s29, 1
      %s595 = scalar_select %p594, %s29, 1
      %s596 = scalar_lea.vmem %s4, %s595
      %p597 = pneg %p176
      %p598 = pneg %p173
      %p599 = scmp.lt.s32.totalorder %s29, 1
      %s600 = scalar_select %p599, %s29, 1
      %s601 = smul.addr %s600, 12
      %s602 = smul.addr %s601, 8
      %s603 = scalar_lea.vmem %s5, %s602
      %p604 = pneg %p202
      %p605 = pneg %p199
      %p606 = scmp.lt.s32.totalorder %s29, 1
      %s607 = scalar_select %p606, %s29, 1
      %s608 = scalar_lea.vmem %s6, %s607
      %p609 = pneg %p228
      %p610 = pneg %p225
      %p611 = scmp.lt.s32.totalorder %s29, 1
      %s612 = scalar_select %p611, %s29, 1
      %s613 = smul.addr %s612, 4
      %s614 = smul.addr %s613, 8
      %s615 = scalar_lea.vmem %s7, %s614
      %p616 = pneg %p254
      %p617 = pneg %p251
      %p618 = scmp.lt.s32.totalorder %s29, 1
      %s619 = scalar_select %p618, %s29, 1
      %s620 = scalar_lea.vmem %s8, %s619
      %p621 = pneg %p280
      %p622 = pneg %p277
      %p623 = scmp.lt.s32.totalorder %s29, 1
      %s624 = scalar_select %p623, %s29, 1
      %s625 = smul.addr %s624, 4
      %s626 = smul.addr %s625, 8
      %s627 = scalar_lea.vmem %s9, %s626
      %p628 = pneg %p306
      %p629 = pneg %p303
      %p630 = scmp.lt.s32.totalorder %s29, 1
      %s631 = scalar_select %p630, %s29, 1
      %s632 = scalar_lea.vmem %s10, %s631
      %p633 = pneg %p332
      %p634 = pneg %p329
      %p635 = scmp.lt.s32.totalorder %s29, 1
      %s636 = scalar_select %p635, %s29, 1
      %s637 = scalar_lea.vmem %s11, %s636
      %p638 = pneg %p358
      %p639 = pneg %p355
      %p640 = scmp.lt.s32.totalorder %s29, 1
      %s641 = scalar_select %p640, %s29, 1
      %s642 = scalar_lea.vmem %s12, %s641
      %p643 = pneg %p384
      %p644 = pneg %p381
      %p645 = pneg %p414
      %p646 = pneg %p411
      %s647 = smul.u32 4, %s31
      %p648 = scmp.lt.s32.totalorder %s29, 1
      %s649 = scalar_select %p648, %s29, 1
      %p650 = scmp.lt.s32.totalorder %s30, 1
      %s651 = scalar_select %p650, %s30, 1
      %p652 = scmp.lt.s32.totalorder %s647, 3
      %s653 = scalar_select %p652, %s647, 3
      %s654 = smul.addr %s651, 4
      %s655 = sadd.s32 %s653, %s654
      %s656 = smul.addr %s649, 8
      %s657 = sadd.s32 %s655, %s656
      %s658 = smul.addr %s657, 8
      %s659 = scalar_lea.vmem %s13, %s658
      %s660 = smul.u32 4, %s31
      %p661 = scmp.lt.s32.totalorder %s29, 1
      %s662 = scalar_select %p661, %s29, 1
      %p663 = scmp.lt.s32.totalorder %s30, 1
      %s664 = scalar_select %p663, %s30, 1
      %p665 = scmp.lt.s32.totalorder %s660, 3
      %s666 = scalar_select %p665, %s660, 3
      %s667 = smul.addr %s664, 4
      %s668 = sadd.s32 %s666, %s667
      %s669 = smul.addr %s662, 8
      %s670 = sadd.s32 %s668, %s669
      %s671 = smul.addr %s670, 8
      %s672 = scalar_lea.vmem %s0, %s671
      %s673 = smul.u32 4, %s31
      %s674 = smul.u32 4, %s31
      %p675 = scmp.lt.s32.totalorder %s29, 1
      %s676 = scalar_select %p675, %s29, 1
      %p677 = scmp.lt.s32.totalorder %s30, 1
      %s678 = scalar_select %p677, %s30, 1
      %p679 = scmp.lt.s32.totalorder %s674, 3
      %s680 = scalar_select %p679, %s674, 3
      %s681 = smul.addr %s678, 4
      %s682 = sadd.s32 %s680, %s681
      %s683 = smul.addr %s676, 8
      %s684 = sadd.s32 %s682, %s683
      %s685 = smul.addr %s684, 8
      %s686 = scalar_lea.vmem %s1, %s685
      %s687 = smul.u32 4, %s31
      %p688 = scmp.lt.s32.totalorder %s30, 1
      %s689 = scalar_select %p688, %s30, 1
      %s690 = smul.addr %s689, 4
      %s691 = smul.addr %s690, 8
      %s692 = scalar_lea.vmem %s2, %s691
      %p693 = scmp.lt.s32.totalorder %s29, 1
      %s694 = scalar_select %p693, %s29, 1
      %s695 = smul.addr %s694, 12
      %s696 = smul.addr %s695, 8
      %s697 = scalar_lea.vmem %s3, %s696
      %p698 = scmp.lt.s32.totalorder %s29, 1
      %s699 = scalar_select %p698, %s29, 1
      %s700 = scalar_lea.vmem %s4, %s699
      %p701 = scmp.lt.s32.totalorder %s29, 1
      %s702 = scalar_select %p701, %s29, 1
      %s703 = smul.addr %s702, 12
      %s704 = smul.addr %s703, 8
      %s705 = scalar_lea.vmem %s5, %s704
      %p706 = scmp.lt.s32.totalorder %s29, 1
      %s707 = scalar_select %p706, %s29, 1
      %s708 = scalar_lea.vmem %s6, %s707
      %p709 = scmp.lt.s32.totalorder %s29, 1
      %s710 = scalar_select %p709, %s29, 1
      %s711 = smul.addr %s710, 4
      %s712 = smul.addr %s711, 8
      %s713 = scalar_lea.vmem %s7, %s712
      %p714 = scmp.lt.s32.totalorder %s29, 1
      %s715 = scalar_select %p714, %s29, 1
      %s716 = scalar_lea.vmem %s8, %s715
      %p717 = scmp.lt.s32.totalorder %s29, 1
      %s718 = scalar_select %p717, %s29, 1
      %s719 = smul.addr %s718, 4
      %s720 = smul.addr %s719, 8
      %s721 = scalar_lea.vmem %s9, %s720
      %p722 = scmp.lt.s32.totalorder %s29, 1
      %s723 = scalar_select %p722, %s29, 1
      %s724 = scalar_lea.vmem %s10, %s723
      %p725 = scmp.lt.s32.totalorder %s29, 1
      %s726 = scalar_select %p725, %s29, 1
      %s727 = scalar_lea.vmem %s11, %s726
      %p728 = scmp.lt.s32.totalorder %s29, 1
      %s729 = scalar_select %p728, %s29, 1
      %s730 = scalar_lea.vmem %s12, %s729
      %s731 = smul.u32 4, %s31
      %p732 = scmp.lt.s32.totalorder %s29, 1
      %s733 = scalar_select %p732, %s29, 1
      %p734 = scmp.lt.s32.totalorder %s30, 1
      %s735 = scalar_select %p734, %s30, 1
      %p736 = scmp.lt.s32.totalorder %s731, 3
      %s737 = scalar_select %p736, %s731, 3
      %s738 = smul.addr %s735, 4
      %s739 = sadd.s32 %s737, %s738
      %s740 = smul.addr %s733, 8
      %s741 = sadd.s32 %s739, %s740
      %s742 = smul.addr %s741, 8
      %s743 = scalar_lea.vmem %s13, %s742
      %s744 = smul.u32 4, %s31
      %v745 = vld [vmem:[%s672] sm:$0xff]
      %v746 = vld [vmem:[%s672 + $0x8] sm:$0xff]
      %v747 = vld [vmem:[%s672 + $0x10] sm:$0xff]
      %v748 = vld [vmem:[%s672 + $0x18] sm:$0xff]
      %v749 = vld [vmem:[%s686] sm:$0xff]
      %v750 = vld [vmem:[%s686 + $0x8] sm:$0xff]
      %v751 = vld [vmem:[%s686 + $0x10] sm:$0xff]
      %v752 = vld [vmem:[%s686 + $0x18] sm:$0xff]
      %v753 = vld [vmem:[%s692] sm:$0xff]
      %v754 = vld [vmem:[%s692 + $0x8] sm:$0xff]
      %v755 = vld [vmem:[%s692 + $0x10] sm:$0xff]
      %v756 = vld [vmem:[%s692 + $0x18] sm:$0xff]
      %v761 = vrot.slane %v745, 6
      %v762 = vrot.slane %v746, 6
      %v763 = vrot.slane %v747, 6
      %v764 = vrot.slane %v748, 6
      %vm769 = vcmask 1041408
      %v770 = vsel %vm769, 0.0, %v761
      %v771 = vsel %vm769, 0.0, %v762
      %v772 = vsel %vm769, 0.0, %v763
      %v773 = vsel %vm769, 0.0, %v764
      %v774 = vrot.slane %v745, 7
      %v775 = vrot.slane %v746, 7
      %v776 = vrot.slane %v747, 7
      %v777 = vrot.slane %v748, 7
      %vm782 = vcmask 1040384
      %v783 = vsel %vm782, 0.0, %v774
      %v784 = vsel %vm782, 0.0, %v775
      %v785 = vsel %vm782, 0.0, %v776
      %v786 = vsel %vm782, 0.0, %v777
      %791 = vrot.lane.b32.xlu0 %v783, 32
      %v792 = vpop.permute.xlu0 %791
      %793 = vrot.lane.b32.xlu0 %v784, 32
      %v794 = vpop.permute.xlu0 %793
      %795 = vrot.lane.b32.xlu0 %v785, 32
      %v796 = vpop.permute.xlu0 %795
      %797 = vrot.lane.b32.xlu0 %v786, 32
      %v798 = vpop.permute.xlu0 %797
      %803 = vrot.lane.b32.xlu0 %v745, 64
      %v804 = vpop.permute.xlu0 %803
      %805 = vrot.lane.b32.xlu0 %v746, 64
      %v806 = vpop.permute.xlu0 %805
      %807 = vrot.lane.b32.xlu0 %v747, 64
      %v808 = vpop.permute.xlu0 %807
      %809 = vrot.lane.b32.xlu0 %v748, 64
      %v810 = vpop.permute.xlu0 %809
      %vm815 = vcmask 261120
      %v816 = vsel %vm815, %v770, %v792
      %v817 = vsel %vm815, %v771, %v794
      %v818 = vsel %vm815, %v772, %v796
      %v819 = vsel %vm815, %v773, %v798
      %vm820 = vcmask 523264
      %v821 = vsel %vm820, %v816, %v804
      %v822 = vsel %vm820, %v817, %v806
      %v823 = vsel %vm820, %v818, %v808
      %v824 = vsel %vm820, %v819, %v810
      %v825 = vld [vmem:[%s697] sm:$0xff]
      %v826 = vld [vmem:[%s697 + $0x8] sm:$0xff]
      %v827 = vld [vmem:[%s697 + $0x10] sm:$0xff]
      %v828 = vld [vmem:[%s697 + $0x18] sm:$0xff]
      %v829 = vld [vmem:[%s697 + $0x20] sm:$0xff]
      %v830 = vld [vmem:[%s697 + $0x28] sm:$0xff]
      %v831 = vld [vmem:[%s697 + $0x30] sm:$0xff]
      %v832 = vld [vmem:[%s697 + $0x38] sm:$0xff]
      %v833 = vld [vmem:[%s697 + $0x40] sm:$0xff]
      %v834 = vld [vmem:[%s697 + $0x48] sm:$0xff]
      %v835 = vld [vmem:[%s697 + $0x50] sm:$0xff]
      %v836 = vld [vmem:[%s697 + $0x58] sm:$0xff]
      %v837 = vld [vmem:[%s700] sm:$0x1]
      %v839 = vlaneseq
      %v840 = vshrl.u32 %v839, 7
      %v841 = vsub.s32 0, %v840
      %v842 = vrot.slane %v837, %v841
      %vm844 = vcmask 785408
      %v846 = vsel %vm844, %v821, 0
      %v849 = vsel %vm844, %v822, 0
      %v852 = vsel %vm844, %v823, 0
      %v855 = vsel %vm844, %v824, 0
      %857 = vmatprep.subr.mxu0 0.0
      %858 = vmatpush1.msra.mxu0 %v825
      %859 = vmatprep.subr.mxu0 0.0
      %860 = vmatpush1.msra.mxu0 %v826
      %861 = vmatprep.subr.mxu0 0.0
      %862 = vmatpush1.msra.mxu0 %v827
      %863 = vmatprep.subr.mxu0 0.0
      %864 = vmatpush1.msra.mxu0 %v828
      %865 = vmatprep.subr.mxu0 0.0
      %866 = vmatpush1.msra.mxu0 %v829
      %867 = vmatprep.subr.mxu0 0.0
      %868 = vmatpush1.msra.mxu0 %v830
      %869 = vmatprep.subr.mxu0 0.0
      %870 = vmatpush1.msra.mxu0 %v831
      %871 = vmatprep.subr.mxu0 0.0
      %872 = vmatpush1.msra.mxu0 %v832
      %873 = vmatprep.subr.mxu0 0.0
      %874 = vmatpush1.msra.mxu0 %v833
      %875 = vmatprep.subr.mxu0 0.0
      %876 = vmatpush1.msra.mxu0 %v834
      %877 = vmatprep.subr.mxu0 0.0
      %878 = vmatpush1.msra.mxu0 %v835
      %879 = vmatprep.subr.mxu0 0.0
      %880 = vmatpush1.msra.mxu0 %v836
      %881 = vmatprep.subr.mxu0 0.0
      %882 = vmatpush1.msra.mxu0 0.0
      %883 = vmatprep.subr.mxu0 0.0
      %884 = vmatpush1.msra.mxu0 0.0
      %885 = vmatprep.subr.mxu0 0.0
      %886 = vmatpush1.msra.mxu0 0.0
      %887 = vmatprep.subr.mxu0 0.0
      %888 = vmatpush1.msra.mxu0 0.0
      %889 = vmatprep.subr.mxu0 0.0
      %890 = vmatpush1.msra.mxu0 0.0
      %891 = vmatprep.subr.mxu0 0.0
      %892 = vmatpush1.msra.mxu0 0.0
      %893 = vmatprep.subr.mxu0 0.0
      %894 = vmatpush1.msra.mxu0 0.0
      %895 = vmatprep.subr.mxu0 0.0
      %896 = vmatpush1.msra.mxu0 0.0
      %897 = vmatprep.subr.mxu0 0.0
      %898 = vmatpush1.msra.mxu0 0.0
      %899 = vmatprep.subr.mxu0 0.0
      %900 = vmatpush1.msra.mxu0 0.0
      %901 = vmatprep.subr.mxu0 0.0
      %902 = vmatpush1.msra.mxu0 0.0
      %903 = vmatprep.subr.mxu0 0.0
      %904 = vmatpush1.msra.mxu0 0.0
      %905 = vmatprep.subr.mxu0 0.0
      %906 = vmatpush1.msra.mxu0 0.0
      %907 = vmatprep.subr.mxu0 0.0
      %908 = vmatpush1.msra.mxu0 0.0
      %909 = vmatprep.subr.mxu0 0.0
      %910 = vmatpush1.msra.mxu0 0.0
      %911 = vmatprep.subr.mxu0 0.0
      %912 = vmatpush1.msra.mxu0 0.0
      %913 = vmatprep.subr.mxu0 0.0
      %914 = vmatpush1.msra.mxu0 0.0
      %915 = vmatprep.subr.mxu0 0.0
      %916 = vmatpush1.msra.mxu0 0.0
      %917 = vmatprep.subr.mxu0 0.0
      %918 = vmatpush1.msra.mxu0 0.0
      %919 = vmatprep.subr.mxu0 0.0
      %920 = vmatpush1.msra.mxu0 0.0
      %921 = vmatprep.mubr.f32.mxu0 0.0
      %922 = vmatmul.mubr.f32.gmra.mrb[0].mxu0 %v846
      %v923 = vpop.f32.mrb[0].mxu0
      %v924 = vadd.f32 %v842, %v923
      %v925 = vpop.f32.mrb[0].mxu0
      %926 = vmatprep.mubr.f32.mxu0 0.0
      %927 = vmatmul.mubr.f32.gmra.mrb[0].mxu0 %v849
      %v928 = vpop.f32.mrb[0].mxu0
      %v929 = vadd.f32 %v842, %v928
      %v930 = vpop.f32.mrb[0].mxu0
      %931 = vmatprep.mubr.f32.mxu0 0.0
      %932 = vmatmul.mubr.f32.gmra.mrb[0].mxu0 %v852
      %v933 = vpop.f32.mrb[0].mxu0
      %v934 = vadd.f32 %v842, %v933
      %v935 = vpop.f32.mrb[0].mxu0
      %936 = vmatprep.mubr.f32.mxu0 0.0
      %937 = vmatmul.mubr.f32.gmra.mrb[0].mxu0 %v855
      %v938 = vpop.f32.mrb[0].mxu0
      %v939 = vadd.f32 %v842, %v938
      %v940 = vpop.f32.mrb[0].mxu0
      %941 = vdwg.mxu0
      %v946 = vrot.slane %v749, 6
      %v947 = vrot.slane %v750, 6
      %v948 = vrot.slane %v751, 6
      %v949 = vrot.slane %v752, 6
      %v954 = vsel %vm769, 0.0, %v946
      %v955 = vsel %vm769, 0.0, %v947
      %v956 = vsel %vm769, 0.0, %v948
      %v957 = vsel %vm769, 0.0, %v949
      %v958 = vrot.slane %v749, 7
      %v959 = vrot.slane %v750, 7
      %v960 = vrot.slane %v751, 7
      %v961 = vrot.slane %v752, 7
      %v966 = vsel %vm782, 0.0, %v958
      %v967 = vsel %vm782, 0.0, %v959
      %v968 = vsel %vm782, 0.0, %v960
      %v969 = vsel %vm782, 0.0, %v961
      %974 = vrot.lane.b32.xlu0 %v966, 32
      %v975 = vpop.permute.xlu0 %974
      %976 = vrot.lane.b32.xlu0 %v967, 32
      %v977 = vpop.permute.xlu0 %976
      %978 = vrot.lane.b32.xlu0 %v968, 32
      %v979 = vpop.permute.xlu0 %978
      %980 = vrot.lane.b32.xlu0 %v969, 32
      %v981 = vpop.permute.xlu0 %980
      %986 = vrot.lane.b32.xlu0 %v749, 64
      %v987 = vpop.permute.xlu0 %986
      %988 = vrot.lane.b32.xlu0 %v750, 64
      %v989 = vpop.permute.xlu0 %988
      %990 = vrot.lane.b32.xlu0 %v751, 64
      %v991 = vpop.permute.xlu0 %990
      %992 = vrot.lane.b32.xlu0 %v752, 64
      %v993 = vpop.permute.xlu0 %992
      %v998 = vsel %vm815, %v954, %v975
      %v999 = vsel %vm815, %v955, %v977
      %v1000 = vsel %vm815, %v956, %v979
      %v1001 = vsel %vm815, %v957, %v981
      %v1002 = vsel %vm820, %v998, %v987
      %v1003 = vsel %vm820, %v999, %v989
      %v1004 = vsel %vm820, %v1000, %v991
      %v1005 = vsel %vm820, %v1001, %v993
      %v1006 = vld [vmem:[%s705] sm:$0xff]
      %v1007 = vld [vmem:[%s705 + $0x8] sm:$0xff]
      %v1008 = vld [vmem:[%s705 + $0x10] sm:$0xff]
      %v1009 = vld [vmem:[%s705 + $0x18] sm:$0xff]
      %v1010 = vld [vmem:[%s705 + $0x20] sm:$0xff]
      %v1011 = vld [vmem:[%s705 + $0x28] sm:$0xff]
      %v1012 = vld [vmem:[%s705 + $0x30] sm:$0xff]
      %v1013 = vld [vmem:[%s705 + $0x38] sm:$0xff]
      %v1014 = vld [vmem:[%s705 + $0x40] sm:$0xff]
      %v1015 = vld [vmem:[%s705 + $0x48] sm:$0xff]
      %v1016 = vld [vmem:[%s705 + $0x50] sm:$0xff]
      %v1017 = vld [vmem:[%s705 + $0x58] sm:$0xff]
      %v1018 = vld [vmem:[%s708] sm:$0x1]
      %v1020 = vlaneseq
      %v1021 = vshrl.u32 %v1020, 7
      %v1022 = vsub.s32 0, %v1021
      %v1023 = vrot.slane %v1018, %v1022
      %v1026 = vsel %vm844, %v1002, 0
      %v1029 = vsel %vm844, %v1003, 0
      %v1032 = vsel %vm844, %v1004, 0
      %v1035 = vsel %vm844, %v1005, 0
      %1037 = vmatprep.subr.mxu0 0.0
      %1038 = vmatpush1.msra.mxu0 %v1006
      %1039 = vmatprep.subr.mxu0 0.0
      %1040 = vmatpush1.msra.mxu0 %v1007
      %1041 = vmatprep.subr.mxu0 0.0
      %1042 = vmatpush1.msra.mxu0 %v1008
      %1043 = vmatprep.subr.mxu0 0.0
      %1044 = vmatpush1.msra.mxu0 %v1009
      %1045 = vmatprep.subr.mxu0 0.0
      %1046 = vmatpush1.msra.mxu0 %v1010
      %1047 = vmatprep.subr.mxu0 0.0
      %1048 = vmatpush1.msra.mxu0 %v1011
      %1049 = vmatprep.subr.mxu0 0.0
      %1050 = vmatpush1.msra.mxu0 %v1012
      %1051 = vmatprep.subr.mxu0 0.0
      %1052 = vmatpush1.msra.mxu0 %v1013
      %1053 = vmatprep.subr.mxu0 0.0
      %1054 = vmatpush1.msra.mxu0 %v1014
      %1055 = vmatprep.subr.mxu0 0.0
      %1056 = vmatpush1.msra.mxu0 %v1015
      %1057 = vmatprep.subr.mxu0 0.0
      %1058 = vmatpush1.msra.mxu0 %v1016
      %1059 = vmatprep.subr.mxu0 0.0
      %1060 = vmatpush1.msra.mxu0 %v1017
      %1061 = vmatprep.subr.mxu0 0.0
      %1062 = vmatpush1.msra.mxu0 0.0
      %1063 = vmatprep.subr.mxu0 0.0
      %1064 = vmatpush1.msra.mxu0 0.0
      %1065 = vmatprep.subr.mxu0 0.0
      %1066 = vmatpush1.msra.mxu0 0.0
      %1067 = vmatprep.subr.mxu0 0.0
      %1068 = vmatpush1.msra.mxu0 0.0
      %1069 = vmatprep.subr.mxu0 0.0
      %1070 = vmatpush1.msra.mxu0 0.0
      %1071 = vmatprep.subr.mxu0 0.0
      %1072 = vmatpush1.msra.mxu0 0.0
      %1073 = vmatprep.subr.mxu0 0.0
      %1074 = vmatpush1.msra.mxu0 0.0
      %1075 = vmatprep.subr.mxu0 0.0
      %1076 = vmatpush1.msra.mxu0 0.0
      %1077 = vmatprep.subr.mxu0 0.0
      %1078 = vmatpush1.msra.mxu0 0.0
      %1079 = vmatprep.subr.mxu0 0.0
      %1080 = vmatpush1.msra.mxu0 0.0
      %1081 = vmatprep.subr.mxu0 0.0
      %1082 = vmatpush1.msra.mxu0 0.0
      %1083 = vmatprep.subr.mxu0 0.0
      %1084 = vmatpush1.msra.mxu0 0.0
      %1085 = vmatprep.subr.mxu0 0.0
      %1086 = vmatpush1.msra.mxu0 0.0
      %1087 = vmatprep.subr.mxu0 0.0
      %1088 = vmatpush1.msra.mxu0 0.0
      %1089 = vmatprep.subr.mxu0 0.0
      %1090 = vmatpush1.msra.mxu0 0.0
      %1091 = vmatprep.subr.mxu0 0.0
      %1092 = vmatpush1.msra.mxu0 0.0
      %1093 = vmatprep.subr.mxu0 0.0
      %1094 = vmatpush1.msra.mxu0 0.0
      %1095 = vmatprep.subr.mxu0 0.0
      %1096 = vmatpush1.msra.mxu0 0.0
      %1097 = vmatprep.subr.mxu0 0.0
      %1098 = vmatpush1.msra.mxu0 0.0
      %1099 = vmatprep.subr.mxu0 0.0
      %1100 = vmatpush1.msra.mxu0 0.0
      %1101 = vmatprep.mubr.f32.mxu0 0.0
      %1102 = vmatmul.mubr.f32.gmra.mrb[0].mxu0 %v1026
      %v1103 = vpop.f32.mrb[0].mxu0
      %v1104 = vadd.f32 %v1023, %v1103
      %v1105 = vpop.f32.mrb[0].mxu0
      %1106 = vmatprep.mubr.f32.mxu0 0.0
      %1107 = vmatmul.mubr.f32.gmra.mrb[0].mxu0 %v1029
      %v1108 = vpop.f32.mrb[0].mxu0
      %v1109 = vadd.f32 %v1023, %v1108
      %v1110 = vpop.f32.mrb[0].mxu0
      %1111 = vmatprep.mubr.f32.mxu0 0.0
      %1112 = vmatmul.mubr.f32.gmra.mrb[0].mxu0 %v1032
      %v1113 = vpop.f32.mrb[0].mxu0
      %v1114 = vadd.f32 %v1023, %v1113
      %v1115 = vpop.f32.mrb[0].mxu0
      %1116 = vmatprep.mubr.f32.mxu0 0.0
      %1117 = vmatmul.mubr.f32.gmra.mrb[0].mxu0 %v1035
      %v1118 = vpop.f32.mrb[0].mxu0
      %v1119 = vadd.f32 %v1023, %v1118
      %v1120 = vpop.f32.mrb[0].mxu0
      %1121 = vdwg.mxu0
      %v1122 = vld [vmem:[%s713] sm:$0xff]
      %v1123 = vld [vmem:[%s713 + $0x8] sm:$0xff]
      %v1124 = vld [vmem:[%s713 + $0x10] sm:$0xff]
      %v1125 = vld [vmem:[%s713 + $0x18] sm:$0xff]
      %v1126 = vld [vmem:[%s716] sm:$0x1]
      %v1128 = vlaneseq
      %v1129 = vshrl.u32 %v1128, 7
      %v1130 = vsub.s32 0, %v1129
      %v1131 = vrot.slane %v1126, %v1130
      %v1133 = vsel %vm815, %v749, 0
      %v1135 = vsel %vm815, %v750, 0
      %v1137 = vsel %vm815, %v751, 0
      %v1139 = vsel %vm815, %v752, 0
      %1141 = vmatprep.subr.mxu0 0.0
      %1142 = vmatpush1.msra.mxu0 %v1122
      %1143 = vmatprep.subr.mxu0 0.0
      %1144 = vmatpush1.msra.mxu0 %v1123
      %1145 = vmatprep.subr.mxu0 0.0
      %1146 = vmatpush1.msra.mxu0 %v1124
      %1147 = vmatprep.subr.mxu0 0.0
      %1148 = vmatpush1.msra.mxu0 %v1125
      %1149 = vmatprep.subr.mxu0 0.0
      %1150 = vmatpush1.msra.mxu0 0.0
      %1151 = vmatprep.subr.mxu0 0.0
      %1152 = vmatpush1.msra.mxu0 0.0
      %1153 = vmatprep.subr.mxu0 0.0
      %1154 = vmatpush1.msra.mxu0 0.0
      %1155 = vmatprep.subr.mxu0 0.0
      %1156 = vmatpush1.msra.mxu0 0.0
      %1157 = vmatprep.subr.mxu0 0.0
      %1158 = vmatpush1.msra.mxu0 0.0
      %1159 = vmatprep.subr.mxu0 0.0
      %1160 = vmatpush1.msra.mxu0 0.0
      %1161 = vmatprep.subr.mxu0 0.0
      %1162 = vmatpush1.msra.mxu0 0.0
      %1163 = vmatprep.subr.mxu0 0.0
      %1164 = vmatpush1.msra.mxu0 0.0
      %1165 = vmatprep.subr.mxu0 0.0
      %1166 = vmatpush1.msra.mxu0 0.0
      %1167 = vmatprep.subr.mxu0 0.0
      %1168 = vmatpush1.msra.mxu0 0.0
      %1169 = vmatprep.subr.mxu0 0.0
      %1170 = vmatpush1.msra.mxu0 0.0
      %1171 = vmatprep.subr.mxu0 0.0
      %1172 = vmatpush1.msra.mxu0 0.0
      %1173 = vmatprep.subr.mxu0 0.0
      %1174 = vmatpush1.msra.mxu0 0.0
      %1175 = vmatprep.subr.mxu0 0.0
      %1176 = vmatpush1.msra.mxu0 0.0
      %1177 = vmatprep.subr.mxu0 0.0
      %1178 = vmatpush1.msra.mxu0 0.0
      %1179 = vmatprep.subr.mxu0 0.0
      %1180 = vmatpush1.msra.mxu0 0.0
      %1181 = vmatprep.subr.mxu0 0.0
      %1182 = vmatpush1.msra.mxu0 0.0
      %1183 = vmatprep.subr.mxu0 0.0
      %1184 = vmatpush1.msra.mxu0 0.0
      %1185 = vmatprep.subr.mxu0 0.0
      %1186 = vmatpush1.msra.mxu0 0.0
      %1187 = vmatprep.subr.mxu0 0.0
      %1188 = vmatpush1.msra.mxu0 0.0
      %1189 = vmatprep.subr.mxu0 0.0
      %1190 = vmatpush1.msra.mxu0 0.0
      %1191 = vmatprep.subr.mxu0 0.0
      %1192 = vmatpush1.msra.mxu0 0.0
      %1193 = vmatprep.subr.mxu0 0.0
      %1194 = vmatpush1.msra.mxu0 0.0
      %1195 = vmatprep.subr.mxu0 0.0
      %1196 = vmatpush1.msra.mxu0 0.0
      %1197 = vmatprep.subr.mxu0 0.0
      %1198 = vmatpush1.msra.mxu0 0.0
      %1199 = vmatprep.subr.mxu0 0.0
      %1200 = vmatpush1.msra.mxu0 0.0
      %1201 = vmatprep.subr.mxu0 0.0
      %1202 = vmatpush1.msra.mxu0 0.0
      %1203 = vmatprep.subr.mxu0 0.0
      %1204 = vmatpush1.msra.mxu0 0.0
      %1205 = vmatprep.mubr.f32.mxu0 0.0
      %1206 = vmatmul.mubr.f32.gmra.mrb[0].mxu0 %v1133
      %v1207 = vpop.f32.mrb[0].mxu0
      %v1208 = vadd.f32 %v1131, %v1207
      %v1209 = vpop.f32.mrb[0].mxu0
      %1210 = vmatprep.mubr.f32.mxu0 0.0
      %1211 = vmatmul.mubr.f32.gmra.mrb[0].mxu0 %v1135
      %v1212 = vpop.f32.mrb[0].mxu0
      %v1213 = vadd.f32 %v1131, %v1212
      %v1214 = vpop.f32.mrb[0].mxu0
      %1215 = vmatprep.mubr.f32.mxu0 0.0
      %1216 = vmatmul.mubr.f32.gmra.mrb[0].mxu0 %v1137
      %v1217 = vpop.f32.mrb[0].mxu0
      %v1218 = vadd.f32 %v1131, %v1217
      %v1219 = vpop.f32.mrb[0].mxu0
      %1220 = vmatprep.mubr.f32.mxu0 0.0
      %1221 = vmatmul.mubr.f32.gmra.mrb[0].mxu0 %v1139
      %v1222 = vpop.f32.mrb[0].mxu0
      %v1223 = vadd.f32 %v1131, %v1222
      %v1224 = vpop.f32.mrb[0].mxu0
      %1225 = vdwg.mxu0
      %vm1226 = vcmask 64512
      %v1228 = vsel %vm1226, %v924, 0
      %v1231 = vsel %vm1226, %v929, 0
      %v1234 = vsel %vm1226, %v934, 0
      %v1237 = vsel %vm1226, %v939, 0
      %v1240 = vsel %vm1226, %v1104, 0
      %v1243 = vsel %vm1226, %v1109, 0
      %v1246 = vsel %vm1226, %v1114, 0
      %v1249 = vsel %vm1226, %v1119, 0
      %1251 = vmatprep.subr.mxu0 0.0
      %1252 = vmatpush1.xpose.msra.mxu0 %v1240
      %1253 = vmatprep.subr.mxu0 0.0
      %1254 = vmatpush1.xpose.msra.mxu0 %v1243
      %1255 = vmatprep.subr.mxu0 0.0
      %1256 = vmatpush1.xpose.msra.mxu0 %v1246
      %1257 = vmatprep.subr.mxu0 0.0
      %1258 = vmatpush1.xpose.msra.mxu0 %v1249
      %1259 = vmatprep.subr.mxu0 0.0
      %1260 = vmatpush1.xpose.msra.mxu0 0.0
      %1261 = vmatprep.subr.mxu0 0.0
      %1262 = vmatpush1.xpose.msra.mxu0 0.0
      %1263 = vmatprep.subr.mxu0 0.0
      %1264 = vmatpush1.xpose.msra.mxu0 0.0
      %1265 = vmatprep.subr.mxu0 0.0
      %1266 = vmatpush1.xpose.msra.mxu0 0.0
      %1267 = vmatprep.subr.mxu0 0.0
      %1268 = vmatpush1.xpose.msra.mxu0 0.0
      %1269 = vmatprep.subr.mxu0 0.0
      %1270 = vmatpush1.xpose.msra.mxu0 0.0
      %1271 = vmatprep.subr.mxu0 0.0
      %1272 = vmatpush1.xpose.msra.mxu0 0.0
      %1273 = vmatprep.subr.mxu0 0.0
      %1274 = vmatpush1.xpose.msra.mxu0 0.0
      %1275 = vmatprep.subr.mxu0 0.0
      %1276 = vmatpush1.xpose.msra.mxu0 0.0
      %1277 = vmatprep.subr.mxu0 0.0
      %1278 = vmatpush1.xpose.msra.mxu0 0.0
      %1279 = vmatprep.subr.mxu0 0.0
      %1280 = vmatpush1.xpose.msra.mxu0 0.0
      %1281 = vmatprep.subr.mxu0 0.0
      %1282 = vmatpush1.xpose.msra.mxu0 0.0
      %1283 = vmatprep.subr.mxu0 0.0
      %1284 = vmatpush1.xpose.msra.mxu0 0.0
      %1285 = vmatprep.subr.mxu0 0.0
      %1286 = vmatpush1.xpose.msra.mxu0 0.0
      %1287 = vmatprep.subr.mxu0 0.0
      %1288 = vmatpush1.xpose.msra.mxu0 0.0
      %1289 = vmatprep.subr.mxu0 0.0
      %1290 = vmatpush1.xpose.msra.mxu0 0.0
      %1291 = vmatprep.subr.mxu0 0.0
      %1292 = vmatpush1.xpose.msra.mxu0 0.0
      %1293 = vmatprep.subr.mxu0 0.0
      %1294 = vmatpush1.xpose.msra.mxu0 0.0
      %1295 = vmatprep.subr.mxu0 0.0
      %1296 = vmatpush1.xpose.msra.mxu0 0.0
      %1297 = vmatprep.subr.mxu0 0.0
      %1298 = vmatpush1.xpose.msra.mxu0 0.0
      %1299 = vmatprep.subr.mxu0 0.0
      %1300 = vmatpush1.xpose.msra.mxu0 0.0
      %1301 = vmatprep.subr.mxu0 0.0
      %1302 = vmatpush1.xpose.msra.mxu0 0.0
      %1303 = vmatprep.subr.mxu0 0.0
      %1304 = vmatpush1.xpose.msra.mxu0 0.0
      %1305 = vmatprep.subr.mxu0 0.0
      %1306 = vmatpush1.xpose.msra.mxu0 0.0
      %1307 = vmatprep.subr.mxu0 0.0
      %1308 = vmatpush1.xpose.msra.mxu0 0.0
      %1309 = vmatprep.subr.mxu0 0.0
      %1310 = vmatpush1.xpose.msra.mxu0 0.0
      %1311 = vmatprep.subr.mxu0 0.0
      %1312 = vmatpush1.xpose.msra.mxu0 0.0
      %1313 = vmatprep.subr.mxu0 0.0
      %1314 = vmatpush1.xpose.msra.mxu0 0.0
      %1315 = vmatprep.mubr.f32.mxu0 0.0
      %1316 = vmatmul.mubr.f32.gmra.mrb[0].mxu0 %v1228
      %v1317 = vpop.f32.mrb[0].mxu0
      %v1318 = vadd.f32 0.0, %v1317
      %v1319 = vpop.f32.mrb[0].mxu0
      %1320 = vmatprep.mubr.f32.mxu0 0.0
      %1321 = vmatmul.mubr.f32.gmra.mrb[0].mxu0 %v1231
      %v1322 = vpop.f32.mrb[0].mxu0
      %v1323 = vadd.f32 0.0, %v1322
      %v1324 = vpop.f32.mrb[0].mxu0
      %1325 = vmatprep.mubr.f32.mxu0 0.0
      %1326 = vmatmul.mubr.f32.gmra.mrb[0].mxu0 %v1234
      %v1327 = vpop.f32.mrb[0].mxu0
      %v1328 = vadd.f32 0.0, %v1327
      %v1329 = vpop.f32.mrb[0].mxu0
      %1330 = vmatprep.mubr.f32.mxu0 0.0
      %1331 = vmatmul.mubr.f32.gmra.mrb[0].mxu0 %v1237
      %v1332 = vpop.f32.mrb[0].mxu0
      %v1333 = vadd.f32 0.0, %v1332
      %v1334 = vpop.f32.mrb[0].mxu0
      %1335 = vdwg.mxu0
      %v1336 = vmul.f32 %v1318, 0.35355338
      %v1337 = vmul.f32 %v1323, 0.35355338
      %v1338 = vmul.f32 %v1328, 0.35355338
      %v1339 = vmul.f32 %v1333, 0.35355338
      %v1340 = vadd.f32 %v1336, %v753
      %v1341 = vadd.f32 %v1337, %v754
      %v1342 = vadd.f32 %v1338, %v755
      %v1343 = vadd.f32 %v1339, %v756
      %v1344 = vsel %vm815, %v1340, -inf
      %1345 = vmax.xlane.f32.xlu0 %v1344
      %v1346 = vpop.xlane.xlu0 %1345
      %v1347 = vsel %vm815, %v1341, -inf
      %1348 = vmax.xlane.f32.xlu0 %v1347
      %v1349 = vpop.xlane.xlu0 %1348
      %v1350 = vsel %vm815, %v1342, -inf
      %1351 = vmax.xlane.f32.xlu0 %v1350
      %v1352 = vpop.xlane.xlu0 %1351
      %v1353 = vsel %vm815, %v1343, -inf
      %1354 = vmax.xlane.f32.xlu0 %v1353
      %v1355 = vpop.xlane.xlu0 %1354
      %v1356 = vsub.f32 %v1340, %v1346
      %v1357 = vsub.f32 %v1341, %v1349
      %v1358 = vsub.f32 %v1342, %v1352
      %v1359 = vsub.f32 %v1343, %v1355
      %v1360 = vmul.f32 %v1356, 1.442695
      %v1361 = vpow.pop %v1360
      %v1362 = vmul.f32 %v1357, 1.442695
      %v1363 = vpow.pop %v1362
      %v1364 = vmul.f32 %v1358, 1.442695
      %v1365 = vpow.pop %v1364
      %v1366 = vmul.f32 %v1359, 1.442695
      %v1367 = vpow.pop %v1366
      %v1368 = vsel %vm815, %v1361, 0.0
      %1369 = vadd.xlane.f32.xlu0 %v1368
      %v1370 = vpop.xlane.xlu0 %1369
      %v1371 = vsel %vm815, %v1363, 0.0
      %1372 = vadd.xlane.f32.xlu0 %v1371
      %v1373 = vpop.xlane.xlu0 %1372
      %v1374 = vsel %vm815, %v1365, 0.0
      %1375 = vadd.xlane.f32.xlu0 %v1374
      %v1376 = vpop.xlane.xlu0 %1375
      %v1377 = vsel %vm815, %v1367, 0.0
      %1378 = vadd.xlane.f32.xlu0 %v1377
      %v1379 = vpop.xlane.xlu0 %1378
      %v1380 = vrcp.pop %v1370
      %v1381 = vrcp.pop %v1373
      %v1382 = vrcp.pop %v1376
      %v1383 = vrcp.pop %v1379
      %v1384 = vmul.f32 %v1361, %v1380
      %v1385 = vmul.f32 %v1363, %v1381
      %v1386 = vmul.f32 %v1365, %v1382
      %v1387 = vmul.f32 %v1367, %v1383
      %v1389 = vsel %vm815, %v1384, 0
      %v1392 = vsel %vm815, %v1385, 0
      %v1395 = vsel %vm815, %v1386, 0
      %v1398 = vsel %vm815, %v1387, 0
      %1400 = vmatprep.subr.mxu0 0.0
      %1401 = vmatpush1.msra.mxu0 %v1208
      %1402 = vmatprep.subr.mxu0 0.0
      %1403 = vmatpush1.msra.mxu0 %v1213
      %1404 = vmatprep.subr.mxu0 0.0
      %1405 = vmatpush1.msra.mxu0 %v1218
      %1406 = vmatprep.subr.mxu0 0.0
      %1407 = vmatpush1.msra.mxu0 %v1223
      %1408 = vmatprep.subr.mxu0 0.0
      %1409 = vmatpush1.msra.mxu0 0.0
      %1410 = vmatprep.subr.mxu0 0.0
      %1411 = vmatpush1.msra.mxu0 0.0
      %1412 = vmatprep.subr.mxu0 0.0
      %1413 = vmatpush1.msra.mxu0 0.0
      %1414 = vmatprep.subr.mxu0 0.0
      %1415 = vmatpush1.msra.mxu0 0.0
      %1416 = vmatprep.subr.mxu0 0.0
      %1417 = vmatpush1.msra.mxu0 0.0
      %1418 = vmatprep.subr.mxu0 0.0
      %1419 = vmatpush1.msra.mxu0 0.0
      %1420 = vmatprep.subr.mxu0 0.0
      %1421 = vmatpush1.msra.mxu0 0.0
      %1422 = vmatprep.subr.mxu0 0.0
      %1423 = vmatpush1.msra.mxu0 0.0
      %1424 = vmatprep.subr.mxu0 0.0
      %1425 = vmatpush1.msra.mxu0 0.0
      %1426 = vmatprep.subr.mxu0 0.0
      %1427 = vmatpush1.msra.mxu0 0.0
      %1428 = vmatprep.subr.mxu0 0.0
      %1429 = vmatpush1.msra.mxu0 0.0
      %1430 = vmatprep.subr.mxu0 0.0
      %1431 = vmatpush1.msra.mxu0 0.0
      %1432 = vmatprep.subr.mxu0 0.0
      %1433 = vmatpush1.msra.mxu0 0.0
      %1434 = vmatprep.subr.mxu0 0.0
      %1435 = vmatpush1.msra.mxu0 0.0
      %1436 = vmatprep.subr.mxu0 0.0
      %1437 = vmatpush1.msra.mxu0 0.0
      %1438 = vmatprep.subr.mxu0 0.0
      %1439 = vmatpush1.msra.mxu0 0.0
      %1440 = vmatprep.subr.mxu0 0.0
      %1441 = vmatpush1.msra.mxu0 0.0
      %1442 = vmatprep.subr.mxu0 0.0
      %1443 = vmatpush1.msra.mxu0 0.0
      %1444 = vmatprep.subr.mxu0 0.0
      %1445 = vmatpush1.msra.mxu0 0.0
      %1446 = vmatprep.subr.mxu0 0.0
      %1447 = vmatpush1.msra.mxu0 0.0
      %1448 = vmatprep.subr.mxu0 0.0
      %1449 = vmatpush1.msra.mxu0 0.0
      %1450 = vmatprep.subr.mxu0 0.0
      %1451 = vmatpush1.msra.mxu0 0.0
      %1452 = vmatprep.subr.mxu0 0.0
      %1453 = vmatpush1.msra.mxu0 0.0
      %1454 = vmatprep.subr.mxu0 0.0
      %1455 = vmatpush1.msra.mxu0 0.0
      %1456 = vmatprep.subr.mxu0 0.0
      %1457 = vmatpush1.msra.mxu0 0.0
      %1458 = vmatprep.subr.mxu0 0.0
      %1459 = vmatpush1.msra.mxu0 0.0
      %1460 = vmatprep.subr.mxu0 0.0
      %1461 = vmatpush1.msra.mxu0 0.0
      %1462 = vmatprep.subr.mxu0 0.0
      %1463 = vmatpush1.msra.mxu0 0.0
      %1464 = vmatprep.mubr.f32.mxu0 0.0
      %1465 = vmatmul.mubr.f32.gmra.mrb[0].mxu0 %v1389
      %v1466 = vpop.f32.mrb[0].mxu0
      %v1467 = vadd.f32 0.0, %v1466
      %v1468 = vpop.f32.mrb[0].mxu0
      %1469 = vmatprep.mubr.f32.mxu0 0.0
      %1470 = vmatmul.mubr.f32.gmra.mrb[0].mxu0 %v1392
      %v1471 = vpop.f32.mrb[0].mxu0
      %v1472 = vadd.f32 0.0, %v1471
      %v1473 = vpop.f32.mrb[0].mxu0
      %1474 = vmatprep.mubr.f32.mxu0 0.0
      %1475 = vmatmul.mubr.f32.gmra.mrb[0].mxu0 %v1395
      %v1476 = vpop.f32.mrb[0].mxu0
      %v1477 = vadd.f32 0.0, %v1476
      %v1478 = vpop.f32.mrb[0].mxu0
      %1479 = vmatprep.mubr.f32.mxu0 0.0
      %1480 = vmatmul.mubr.f32.gmra.mrb[0].mxu0 %v1398
      %v1481 = vpop.f32.mrb[0].mxu0
      %v1482 = vadd.f32 0.0, %v1481
      %v1483 = vpop.f32.mrb[0].mxu0
      %1484 = vdwg.mxu0
      %1485 = vrot.lane.b32.xlu0 %v924, 120
      %v1486 = vpop.permute.xlu0 %1485
      %1487 = vrot.lane.b32.xlu0 %v929, 120
      %v1488 = vpop.permute.xlu0 %1487
      %1489 = vrot.lane.b32.xlu0 %v934, 120
      %v1490 = vpop.permute.xlu0 %1489
      %1491 = vrot.lane.b32.xlu0 %v939, 120
      %v1492 = vpop.permute.xlu0 %1491
      %1493 = vrot.lane.b32.xlu0 %v1104, 120
      %v1494 = vpop.permute.xlu0 %1493
      %1495 = vrot.lane.b32.xlu0 %v1109, 120
      %v1496 = vpop.permute.xlu0 %1495
      %1497 = vrot.lane.b32.xlu0 %v1114, 120
      %v1498 = vpop.permute.xlu0 %1497
      %1499 = vrot.lane.b32.xlu0 %v1119, 120
      %v1500 = vpop.permute.xlu0 %1499
      %v1501 = vsel %vm1226, %v1486, 0
      %v1503 = vsel %vm1226, %v1488, 0
      %v1505 = vsel %vm1226, %v1490, 0
      %v1507 = vsel %vm1226, %v1492, 0
      %v1509 = vsel %vm1226, %v1494, 0
      %v1511 = vsel %vm1226, %v1496, 0
      %v1513 = vsel %vm1226, %v1498, 0
      %v1515 = vsel %vm1226, %v1500, 0
      %1517 = vmatprep.subr.mxu0 0.0
      %1518 = vmatpush1.xpose.msra.mxu0 %v1509
      %1519 = vmatprep.subr.mxu0 0.0
      %1520 = vmatpush1.xpose.msra.mxu0 %v1511
      %1521 = vmatprep.subr.mxu0 0.0
      %1522 = vmatpush1.xpose.msra.mxu0 %v1513
      %1523 = vmatprep.subr.mxu0 0.0
      %1524 = vmatpush1.xpose.msra.mxu0 %v1515
      %1525 = vmatprep.subr.mxu0 0.0
      %1526 = vmatpush1.xpose.msra.mxu0 0.0
      %1527 = vmatprep.subr.mxu0 0.0
      %1528 = vmatpush1.xpose.msra.mxu0 0.0
      %1529 = vmatprep.subr.mxu0 0.0
      %1530 = vmatpush1.xpose.msra.mxu0 0.0
      %1531 = vmatprep.subr.mxu0 0.0
      %1532 = vmatpush1.xpose.msra.mxu0 0.0
      %1533 = vmatprep.subr.mxu0 0.0
      %1534 = vmatpush1.xpose.msra.mxu0 0.0
      %1535 = vmatprep.subr.mxu0 0.0
      %1536 = vmatpush1.xpose.msra.mxu0 0.0
      %1537 = vmatprep.subr.mxu0 0.0
      %1538 = vmatpush1.xpose.msra.mxu0 0.0
      %1539 = vmatprep.subr.mxu0 0.0
      %1540 = vmatpush1.xpose.msra.mxu0 0.0
      %1541 = vmatprep.subr.mxu0 0.0
      %1542 = vmatpush1.xpose.msra.mxu0 0.0
      %1543 = vmatprep.subr.mxu0 0.0
      %1544 = vmatpush1.xpose.msra.mxu0 0.0
      %1545 = vmatprep.subr.mxu0 0.0
      %1546 = vmatpush1.xpose.msra.mxu0 0.0
      %1547 = vmatprep.subr.mxu0 0.0
      %1548 = vmatpush1.xpose.msra.mxu0 0.0
      %1549 = vmatprep.subr.mxu0 0.0
      %1550 = vmatpush1.xpose.msra.mxu0 0.0
      %1551 = vmatprep.subr.mxu0 0.0
      %1552 = vmatpush1.xpose.msra.mxu0 0.0
      %1553 = vmatprep.subr.mxu0 0.0
      %1554 = vmatpush1.xpose.msra.mxu0 0.0
      %1555 = vmatprep.subr.mxu0 0.0
      %1556 = vmatpush1.xpose.msra.mxu0 0.0
      %1557 = vmatprep.subr.mxu0 0.0
      %1558 = vmatpush1.xpose.msra.mxu0 0.0
      %1559 = vmatprep.subr.mxu0 0.0
      %1560 = vmatpush1.xpose.msra.mxu0 0.0
      %1561 = vmatprep.subr.mxu0 0.0
      %1562 = vmatpush1.xpose.msra.mxu0 0.0
      %1563 = vmatprep.subr.mxu0 0.0
      %1564 = vmatpush1.xpose.msra.mxu0 0.0
      %1565 = vmatprep.subr.mxu0 0.0
      %1566 = vmatpush1.xpose.msra.mxu0 0.0
      %1567 = vmatprep.subr.mxu0 0.0
      %1568 = vmatpush1.xpose.msra.mxu0 0.0
      %1569 = vmatprep.subr.mxu0 0.0
      %1570 = vmatpush1.xpose.msra.mxu0 0.0
      %1571 = vmatprep.subr.mxu0 0.0
      %1572 = vmatpush1.xpose.msra.mxu0 0.0
      %1573 = vmatprep.subr.mxu0 0.0
      %1574 = vmatpush1.xpose.msra.mxu0 0.0
      %1575 = vmatprep.subr.mxu0 0.0
      %1576 = vmatpush1.xpose.msra.mxu0 0.0
      %1577 = vmatprep.subr.mxu0 0.0
      %1578 = vmatpush1.xpose.msra.mxu0 0.0
      %1579 = vmatprep.subr.mxu0 0.0
      %1580 = vmatpush1.xpose.msra.mxu0 0.0
      %1581 = vmatprep.mubr.f32.mxu0 0.0
      %1582 = vmatmul.mubr.f32.gmra.mrb[0].mxu0 %v1501
      %v1583 = vpop.f32.mrb[0].mxu0
      %v1584 = vadd.f32 0.0, %v1583
      %v1585 = vpop.f32.mrb[0].mxu0
      %1586 = vmatprep.mubr.f32.mxu0 0.0
      %1587 = vmatmul.mubr.f32.gmra.mrb[0].mxu0 %v1503
      %v1588 = vpop.f32.mrb[0].mxu0
      %v1589 = vadd.f32 0.0, %v1588
      %v1590 = vpop.f32.mrb[0].mxu0
      %1591 = vmatprep.mubr.f32.mxu0 0.0
      %1592 = vmatmul.mubr.f32.gmra.mrb[0].mxu0 %v1505
      %v1593 = vpop.f32.mrb[0].mxu0
      %v1594 = vadd.f32 0.0, %v1593
      %v1595 = vpop.f32.mrb[0].mxu0
      %1596 = vmatprep.mubr.f32.mxu0 0.0
      %1597 = vmatmul.mubr.f32.gmra.mrb[0].mxu0 %v1507
      %v1598 = vpop.f32.mrb[0].mxu0
      %v1599 = vadd.f32 0.0, %v1598
      %v1600 = vpop.f32.mrb[0].mxu0
      %1601 = vdwg.mxu0
      %v1602 = vmul.f32 %v1584, 0.35355338
      %v1603 = vmul.f32 %v1589, 0.35355338
      %v1604 = vmul.f32 %v1594, 0.35355338
      %v1605 = vmul.f32 %v1599, 0.35355338
      %v1606 = vadd.f32 %v1602, %v753
      %v1607 = vadd.f32 %v1603, %v754
      %v1608 = vadd.f32 %v1604, %v755
      %v1609 = vadd.f32 %v1605, %v756
      %v1610 = vsel %vm815, %v1606, -inf
      %1611 = vmax.xlane.f32.xlu0 %v1610
      %v1612 = vpop.xlane.xlu0 %1611
      %v1613 = vsel %vm815, %v1607, -inf
      %1614 = vmax.xlane.f32.xlu0 %v1613
      %v1615 = vpop.xlane.xlu0 %1614
      %v1616 = vsel %vm815, %v1608, -inf
      %1617 = vmax.xlane.f32.xlu0 %v1616
      %v1618 = vpop.xlane.xlu0 %1617
      %v1619 = vsel %vm815, %v1609, -inf
      %1620 = vmax.xlane.f32.xlu0 %v1619
      %v1621 = vpop.xlane.xlu0 %1620
      %v1622 = vsub.f32 %v1606, %v1612
      %v1623 = vsub.f32 %v1607, %v1615
      %v1624 = vsub.f32 %v1608, %v1618
      %v1625 = vsub.f32 %v1609, %v1621
      %v1626 = vmul.f32 %v1622, 1.442695
      %v1627 = vpow.pop %v1626
      %v1628 = vmul.f32 %v1623, 1.442695
      %v1629 = vpow.pop %v1628
      %v1630 = vmul.f32 %v1624, 1.442695
      %v1631 = vpow.pop %v1630
      %v1632 = vmul.f32 %v1625, 1.442695
      %v1633 = vpow.pop %v1632
      %v1634 = vsel %vm815, %v1627, 0.0
      %1635 = vadd.xlane.f32.xlu0 %v1634
      %v1636 = vpop.xlane.xlu0 %1635
      %v1637 = vsel %vm815, %v1629, 0.0
      %1638 = vadd.xlane.f32.xlu0 %v1637
      %v1639 = vpop.xlane.xlu0 %1638
      %v1640 = vsel %vm815, %v1631, 0.0
      %1641 = vadd.xlane.f32.xlu0 %v1640
      %v1642 = vpop.xlane.xlu0 %1641
      %v1643 = vsel %vm815, %v1633, 0.0
      %1644 = vadd.xlane.f32.xlu0 %v1643
      %v1645 = vpop.xlane.xlu0 %1644
      %v1646 = vrcp.pop %v1636
      %v1647 = vrcp.pop %v1639
      %v1648 = vrcp.pop %v1642
      %v1649 = vrcp.pop %v1645
      %v1650 = vmul.f32 %v1627, %v1646
      %v1651 = vmul.f32 %v1629, %v1647
      %v1652 = vmul.f32 %v1631, %v1648
      %v1653 = vmul.f32 %v1633, %v1649
      %1658 = vrot.lane.b32.xlu0 %v1208, 120
      %v1659 = vpop.permute.xlu0 %1658
      %1660 = vrot.lane.b32.xlu0 %v1213, 120
      %v1661 = vpop.permute.xlu0 %1660
      %1662 = vrot.lane.b32.xlu0 %v1218, 120
      %v1663 = vpop.permute.xlu0 %1662
      %1664 = vrot.lane.b32.xlu0 %v1223, 120
      %v1665 = vpop.permute.xlu0 %1664
      %v1671 = vsel %vm815, %v1650, 0
      %v1674 = vsel %vm815, %v1651, 0
      %v1677 = vsel %vm815, %v1652, 0
      %v1680 = vsel %vm815, %v1653, 0
      %1682 = vmatprep.subr.mxu0 0.0
      %1683 = vmatpush1.msra.mxu0 %v1659
      %1684 = vmatprep.subr.mxu0 0.0
      %1685 = vmatpush1.msra.mxu0 %v1661
      %1686 = vmatprep.subr.mxu0 0.0
      %1687 = vmatpush1.msra.mxu0 %v1663
      %1688 = vmatprep.subr.mxu0 0.0
      %1689 = vmatpush1.msra.mxu0 %v1665
      %1690 = vmatprep.subr.mxu0 0.0
      %1691 = vmatpush1.msra.mxu0 0.0
      %1692 = vmatprep.subr.mxu0 0.0
      %1693 = vmatpush1.msra.mxu0 0.0
      %1694 = vmatprep.subr.mxu0 0.0
      %1695 = vmatpush1.msra.mxu0 0.0
      %1696 = vmatprep.subr.mxu0 0.0
      %1697 = vmatpush1.msra.mxu0 0.0
      %1698 = vmatprep.subr.mxu0 0.0
      %1699 = vmatpush1.msra.mxu0 0.0
      %1700 = vmatprep.subr.mxu0 0.0
      %1701 = vmatpush1.msra.mxu0 0.0
      %1702 = vmatprep.subr.mxu0 0.0
      %1703 = vmatpush1.msra.mxu0 0.0
      %1704 = vmatprep.subr.mxu0 0.0
      %1705 = vmatpush1.msra.mxu0 0.0
      %1706 = vmatprep.subr.mxu0 0.0
      %1707 = vmatpush1.msra.mxu0 0.0
      %1708 = vmatprep.subr.mxu0 0.0
      %1709 = vmatpush1.msra.mxu0 0.0
      %1710 = vmatprep.subr.mxu0 0.0
      %1711 = vmatpush1.msra.mxu0 0.0
      %1712 = vmatprep.subr.mxu0 0.0
      %1713 = vmatpush1.msra.mxu0 0.0
      %1714 = vmatprep.subr.mxu0 0.0
      %1715 = vmatpush1.msra.mxu0 0.0
      %1716 = vmatprep.subr.mxu0 0.0
      %1717 = vmatpush1.msra.mxu0 0.0
      %1718 = vmatprep.subr.mxu0 0.0
      %1719 = vmatpush1.msra.mxu0 0.0
      %1720 = vmatprep.subr.mxu0 0.0
      %1721 = vmatpush1.msra.mxu0 0.0
      %1722 = vmatprep.subr.mxu0 0.0
      %1723 = vmatpush1.msra.mxu0 0.0
      %1724 = vmatprep.subr.mxu0 0.0
      %1725 = vmatpush1.msra.mxu0 0.0
      %1726 = vmatprep.subr.mxu0 0.0
      %1727 = vmatpush1.msra.mxu0 0.0
      %1728 = vmatprep.subr.mxu0 0.0
      %1729 = vmatpush1.msra.mxu0 0.0
      %1730 = vmatprep.subr.mxu0 0.0
      %1731 = vmatpush1.msra.mxu0 0.0
      %1732 = vmatprep.subr.mxu0 0.0
      %1733 = vmatpush1.msra.mxu0 0.0
      %1734 = vmatprep.subr.mxu0 0.0
      %1735 = vmatpush1.msra.mxu0 0.0
      %1736 = vmatprep.subr.mxu0 0.0
      %1737 = vmatpush1.msra.mxu0 0.0
      %1738 = vmatprep.subr.mxu0 0.0
      %1739 = vmatpush1.msra.mxu0 0.0
      %1740 = vmatprep.subr.mxu0 0.0
      %1741 = vmatpush1.msra.mxu0 0.0
      %1742 = vmatprep.subr.mxu0 0.0
      %1743 = vmatpush1.msra.mxu0 0.0
      %1744 = vmatprep.subr.mxu0 0.0
      %1745 = vmatpush1.msra.mxu0 0.0
      %1746 = vmatprep.mubr.f32.mxu0 0.0
      %1747 = vmatmul.mubr.f32.gmra.mrb[0].mxu0 %v1671
      %v1748 = vpop.f32.mrb[0].mxu0
      %v1749 = vadd.f32 0.0, %v1748
      %v1750 = vpop.f32.mrb[0].mxu0
      %1751 = vmatprep.mubr.f32.mxu0 0.0
      %1752 = vmatmul.mubr.f32.gmra.mrb[0].mxu0 %v1674
      %v1753 = vpop.f32.mrb[0].mxu0
      %v1754 = vadd.f32 0.0, %v1753
      %v1755 = vpop.f32.mrb[0].mxu0
      %1756 = vmatprep.mubr.f32.mxu0 0.0
      %1757 = vmatmul.mubr.f32.gmra.mrb[0].mxu0 %v1677
      %v1758 = vpop.f32.mrb[0].mxu0
      %v1759 = vadd.f32 0.0, %v1758
      %v1760 = vpop.f32.mrb[0].mxu0
      %1761 = vmatprep.mubr.f32.mxu0 0.0
      %1762 = vmatmul.mubr.f32.gmra.mrb[0].mxu0 %v1680
      %v1763 = vpop.f32.mrb[0].mxu0
      %v1764 = vadd.f32 0.0, %v1763
      %v1765 = vpop.f32.mrb[0].mxu0
      %1766 = vdwg.mxu0
      %1767 = vrot.lane.b32.xlu0 %v924, 112
      %v1768 = vpop.permute.xlu0 %1767
      %1769 = vrot.lane.b32.xlu0 %v929, 112
      %v1770 = vpop.permute.xlu0 %1769
      %1771 = vrot.lane.b32.xlu0 %v934, 112
      %v1772 = vpop.permute.xlu0 %1771
      %1773 = vrot.lane.b32.xlu0 %v939, 112
      %v1774 = vpop.permute.xlu0 %1773
      %1775 = vrot.lane.b32.xlu0 %v1104, 112
      %v1776 = vpop.permute.xlu0 %1775
      %1777 = vrot.lane.b32.xlu0 %v1109, 112
      %v1778 = vpop.permute.xlu0 %1777
      %1779 = vrot.lane.b32.xlu0 %v1114, 112
      %v1780 = vpop.permute.xlu0 %1779
      %1781 = vrot.lane.b32.xlu0 %v1119, 112
      %v1782 = vpop.permute.xlu0 %1781
      %v1783 = vsel %vm1226, %v1768, 0
      %v1785 = vsel %vm1226, %v1770, 0
      %v1787 = vsel %vm1226, %v1772, 0
      %v1789 = vsel %vm1226, %v1774, 0
      %v1791 = vsel %vm1226, %v1776, 0
      %v1793 = vsel %vm1226, %v1778, 0
      %v1795 = vsel %vm1226, %v1780, 0
      %v1797 = vsel %vm1226, %v1782, 0
      %1799 = vmatprep.subr.mxu0 0.0
      %1800 = vmatpush1.xpose.msra.mxu0 %v1791
      %1801 = vmatprep.subr.mxu0 0.0
      %1802 = vmatpush1.xpose.msra.mxu0 %v1793
      %1803 = vmatprep.subr.mxu0 0.0
      %1804 = vmatpush1.xpose.msra.mxu0 %v1795
      %1805 = vmatprep.subr.mxu0 0.0
      %1806 = vmatpush1.xpose.msra.mxu0 %v1797
      %1807 = vmatprep.subr.mxu0 0.0
      %1808 = vmatpush1.xpose.msra.mxu0 0.0
      %1809 = vmatprep.subr.mxu0 0.0
      %1810 = vmatpush1.xpose.msra.mxu0 0.0
      %1811 = vmatprep.subr.mxu0 0.0
      %1812 = vmatpush1.xpose.msra.mxu0 0.0
      %1813 = vmatprep.subr.mxu0 0.0
      %1814 = vmatpush1.xpose.msra.mxu0 0.0
      %1815 = vmatprep.subr.mxu0 0.0
      %1816 = vmatpush1.xpose.msra.mxu0 0.0
      %1817 = vmatprep.subr.mxu0 0.0
      %1818 = vmatpush1.xpose.msra.mxu0 0.0
      %1819 = vmatprep.subr.mxu0 0.0
      %1820 = vmatpush1.xpose.msra.mxu0 0.0
      %1821 = vmatprep.subr.mxu0 0.0
      %1822 = vmatpush1.xpose.msra.mxu0 0.0
      %1823 = vmatprep.subr.mxu0 0.0
      %1824 = vmatpush1.xpose.msra.mxu0 0.0
      %1825 = vmatprep.subr.mxu0 0.0
      %1826 = vmatpush1.xpose.msra.mxu0 0.0
      %1827 = vmatprep.subr.mxu0 0.0
      %1828 = vmatpush1.xpose.msra.mxu0 0.0
      %1829 = vmatprep.subr.mxu0 0.0
      %1830 = vmatpush1.xpose.msra.mxu0 0.0
      %1831 = vmatprep.subr.mxu0 0.0
      %1832 = vmatpush1.xpose.msra.mxu0 0.0
      %1833 = vmatprep.subr.mxu0 0.0
      %1834 = vmatpush1.xpose.msra.mxu0 0.0
      %1835 = vmatprep.subr.mxu0 0.0
      %1836 = vmatpush1.xpose.msra.mxu0 0.0
      %1837 = vmatprep.subr.mxu0 0.0
      %1838 = vmatpush1.xpose.msra.mxu0 0.0
      %1839 = vmatprep.subr.mxu0 0.0
      %1840 = vmatpush1.xpose.msra.mxu0 0.0
      %1841 = vmatprep.subr.mxu0 0.0
      %1842 = vmatpush1.xpose.msra.mxu0 0.0
      %1843 = vmatprep.subr.mxu0 0.0
      %1844 = vmatpush1.xpose.msra.mxu0 0.0
      %1845 = vmatprep.subr.mxu0 0.0
      %1846 = vmatpush1.xpose.msra.mxu0 0.0
      %1847 = vmatprep.subr.mxu0 0.0
      %1848 = vmatpush1.xpose.msra.mxu0 0.0
      %1849 = vmatprep.subr.mxu0 0.0
      %1850 = vmatpush1.xpose.msra.mxu0 0.0
      %1851 = vmatprep.subr.mxu0 0.0
      %1852 = vmatpush1.xpose.msra.mxu0 0.0
      %1853 = vmatprep.subr.mxu0 0.0
      %1854 = vmatpush1.xpose.msra.mxu0 0.0
      %1855 = vmatprep.subr.mxu0 0.0
      %1856 = vmatpush1.xpose.msra.mxu0 0.0
      %1857 = vmatprep.subr.mxu0 0.0
      %1858 = vmatpush1.xpose.msra.mxu0 0.0
      %1859 = vmatprep.subr.mxu0 0.0
      %1860 = vmatpush1.xpose.msra.mxu0 0.0
      %1861 = vmatprep.subr.mxu0 0.0
      %1862 = vmatpush1.xpose.msra.mxu0 0.0
      %1863 = vmatprep.mubr.f32.mxu0 0.0
      %1864 = vmatmul.mubr.f32.gmra.mrb[0].mxu0 %v1783
      %v1865 = vpop.f32.mrb[0].mxu0
      %v1866 = vadd.f32 0.0, %v1865
      %v1867 = vpop.f32.mrb[0].mxu0
      %1868 = vmatprep.mubr.f32.mxu0 0.0
      %1869 = vmatmul.mubr.f32.gmra.mrb[0].mxu0 %v1785
      %v1870 = vpop.f32.mrb[0].mxu0
      %v1871 = vadd.f32 0.0, %v1870
      %v1872 = vpop.f32.mrb[0].mxu0
      %1873 = vmatprep.mubr.f32.mxu0 0.0
      %1874 = vmatmul.mubr.f32.gmra.mrb[0].mxu0 %v1787
      %v1875 = vpop.f32.mrb[0].mxu0
      %v1876 = vadd.f32 0.0, %v1875
      %v1877 = vpop.f32.mrb[0].mxu0
      %1878 = vmatprep.mubr.f32.mxu0 0.0
      %1879 = vmatmul.mubr.f32.gmra.mrb[0].mxu0 %v1789
      %v1880 = vpop.f32.mrb[0].mxu0
      %v1881 = vadd.f32 0.0, %v1880
      %v1882 = vpop.f32.mrb[0].mxu0
      %1883 = vdwg.mxu0
      %v1884 = vmul.f32 %v1866, 0.35355338
      %v1885 = vmul.f32 %v1871, 0.35355338
      %v1886 = vmul.f32 %v1876, 0.35355338
      %v1887 = vmul.f32 %v1881, 0.35355338
      %v1888 = vadd.f32 %v1884, %v753
      %v1889 = vadd.f32 %v1885, %v754
      %v1890 = vadd.f32 %v1886, %v755
      %v1891 = vadd.f32 %v1887, %v756
      %v1892 = vsel %vm815, %v1888, -inf
      %1893 = vmax.xlane.f32.xlu0 %v1892
      %v1894 = vpop.xlane.xlu0 %1893
      %v1895 = vsel %vm815, %v1889, -inf
      %1896 = vmax.xlane.f32.xlu0 %v1895
      %v1897 = vpop.xlane.xlu0 %1896
      %v1898 = vsel %vm815, %v1890, -inf
      %1899 = vmax.xlane.f32.xlu0 %v1898
      %v1900 = vpop.xlane.xlu0 %1899
      %v1901 = vsel %vm815, %v1891, -inf
      %1902 = vmax.xlane.f32.xlu0 %v1901
      %v1903 = vpop.xlane.xlu0 %1902
      %v1904 = vsub.f32 %v1888, %v1894
      %v1905 = vsub.f32 %v1889, %v1897
      %v1906 = vsub.f32 %v1890, %v1900
      %v1907 = vsub.f32 %v1891, %v1903
      %v1908 = vmul.f32 %v1904, 1.442695
      %v1909 = vpow.pop %v1908
      %v1910 = vmul.f32 %v1905, 1.442695
      %v1911 = vpow.pop %v1910
      %v1912 = vmul.f32 %v1906, 1.442695
      %v1913 = vpow.pop %v1912
      %v1914 = vmul.f32 %v1907, 1.442695
      %v1915 = vpow.pop %v1914
      %v1916 = vsel %vm815, %v1909, 0.0
      %1917 = vadd.xlane.f32.xlu0 %v1916
      %v1918 = vpop.xlane.xlu0 %1917
      %v1919 = vsel %vm815, %v1911, 0.0
      %1920 = vadd.xlane.f32.xlu0 %v1919
      %v1921 = vpop.xlane.xlu0 %1920
      %v1922 = vsel %vm815, %v1913, 0.0
      %1923 = vadd.xlane.f32.xlu0 %v1922
      %v1924 = vpop.xlane.xlu0 %1923
      %v1925 = vsel %vm815, %v1915, 0.0
      %1926 = vadd.xlane.f32.xlu0 %v1925
      %v1927 = vpop.xlane.xlu0 %1926
      %v1928 = vrcp.pop %v1918
      %v1929 = vrcp.pop %v1921
      %v1930 = vrcp.pop %v1924
      %v1931 = vrcp.pop %v1927
      %v1932 = vmul.f32 %v1909, %v1928
      %v1933 = vmul.f32 %v1911, %v1929
      %v1934 = vmul.f32 %v1913, %v1930
      %v1935 = vmul.f32 %v1915, %v1931
      %1936 = vrot.lane.b32.xlu0 %v1208, 112
      %v1937 = vpop.permute.xlu0 %1936
      %1938 = vrot.lane.b32.xlu0 %v1213, 112
      %v1939 = vpop.permute.xlu0 %1938
      %1940 = vrot.lane.b32.xlu0 %v1218, 112
      %v1941 = vpop.permute.xlu0 %1940
      %1942 = vrot.lane.b32.xlu0 %v1223, 112
      %v1943 = vpop.permute.xlu0 %1942
      %v1949 = vsel %vm815, %v1932, 0
      %v1952 = vsel %vm815, %v1933, 0
      %v1955 = vsel %vm815, %v1934, 0
      %v1958 = vsel %vm815, %v1935, 0
      %1960 = vmatprep.subr.mxu0 0.0
      %1961 = vmatpush1.msra.mxu0 %v1937
      %1962 = vmatprep.subr.mxu0 0.0
      %1963 = vmatpush1.msra.mxu0 %v1939
      %1964 = vmatprep.subr.mxu0 0.0
      %1965 = vmatpush1.msra.mxu0 %v1941
      %1966 = vmatprep.subr.mxu0 0.0
      %1967 = vmatpush1.msra.mxu0 %v1943
      %1968 = vmatprep.subr.mxu0 0.0
      %1969 = vmatpush1.msra.mxu0 0.0
      %1970 = vmatprep.subr.mxu0 0.0
      %1971 = vmatpush1.msra.mxu0 0.0
      %1972 = vmatprep.subr.mxu0 0.0
      %1973 = vmatpush1.msra.mxu0 0.0
      %1974 = vmatprep.subr.mxu0 0.0
      %1975 = vmatpush1.msra.mxu0 0.0
      %1976 = vmatprep.subr.mxu0 0.0
      %1977 = vmatpush1.msra.mxu0 0.0
      %1978 = vmatprep.subr.mxu0 0.0
      %1979 = vmatpush1.msra.mxu0 0.0
      %1980 = vmatprep.subr.mxu0 0.0
      %1981 = vmatpush1.msra.mxu0 0.0
      %1982 = vmatprep.subr.mxu0 0.0
      %1983 = vmatpush1.msra.mxu0 0.0
      %1984 = vmatprep.subr.mxu0 0.0
      %1985 = vmatpush1.msra.mxu0 0.0
      %1986 = vmatprep.subr.mxu0 0.0
      %1987 = vmatpush1.msra.mxu0 0.0
      %1988 = vmatprep.subr.mxu0 0.0
      %1989 = vmatpush1.msra.mxu0 0.0
      %1990 = vmatprep.subr.mxu0 0.0
      %1991 = vmatpush1.msra.mxu0 0.0
      %1992 = vmatprep.subr.mxu0 0.0
      %1993 = vmatpush1.msra.mxu0 0.0
      %1994 = vmatprep.subr.mxu0 0.0
      %1995 = vmatpush1.msra.mxu0 0.0
      %1996 = vmatprep.subr.mxu0 0.0
      %1997 = vmatpush1.msra.mxu0 0.0
      %1998 = vmatprep.subr.mxu0 0.0
      %1999 = vmatpush1.msra.mxu0 0.0
      %2000 = vmatprep.subr.mxu0 0.0
      %2001 = vmatpush1.msra.mxu0 0.0
      %2002 = vmatprep.subr.mxu0 0.0
      %2003 = vmatpush1.msra.mxu0 0.0
      %2004 = vmatprep.subr.mxu0 0.0
      %2005 = vmatpush1.msra.mxu0 0.0
      %2006 = vmatprep.subr.mxu0 0.0
      %2007 = vmatpush1.msra.mxu0 0.0
      %2008 = vmatprep.subr.mxu0 0.0
      %2009 = vmatpush1.msra.mxu0 0.0
      %2010 = vmatprep.subr.mxu0 0.0
      %2011 = vmatpush1.msra.mxu0 0.0
      %2012 = vmatprep.subr.mxu0 0.0
      %2013 = vmatpush1.msra.mxu0 0.0
      %2014 = vmatprep.subr.mxu0 0.0
      %2015 = vmatpush1.msra.mxu0 0.0
      %2016 = vmatprep.subr.mxu0 0.0
      %2017 = vmatpush1.msra.mxu0 0.0
      %2018 = vmatprep.subr.mxu0 0.0
      %2019 = vmatpush1.msra.mxu0 0.0
      %2020 = vmatprep.subr.mxu0 0.0
      %2021 = vmatpush1.msra.mxu0 0.0
      %2022 = vmatprep.subr.mxu0 0.0
      %2023 = vmatpush1.msra.mxu0 0.0
      %2024 = vmatprep.mubr.f32.mxu0 0.0
      %2025 = vmatmul.mubr.f32.gmra.mrb[0].mxu0 %v1949
      %v2026 = vpop.f32.mrb[0].mxu0
      %v2027 = vadd.f32 0.0, %v2026
      %v2028 = vpop.f32.mrb[0].mxu0
      %2029 = vmatprep.mubr.f32.mxu0 0.0
      %2030 = vmatmul.mubr.f32.gmra.mrb[0].mxu0 %v1952
      %v2031 = vpop.f32.mrb[0].mxu0
      %v2032 = vadd.f32 0.0, %v2031
      %v2033 = vpop.f32.mrb[0].mxu0
      %2034 = vmatprep.mubr.f32.mxu0 0.0
      %2035 = vmatmul.mubr.f32.gmra.mrb[0].mxu0 %v1955
      %v2036 = vpop.f32.mrb[0].mxu0
      %v2037 = vadd.f32 0.0, %v2036
      %v2038 = vpop.f32.mrb[0].mxu0
      %2039 = vmatprep.mubr.f32.mxu0 0.0
      %2040 = vmatmul.mubr.f32.gmra.mrb[0].mxu0 %v1958
      %v2041 = vpop.f32.mrb[0].mxu0
      %v2042 = vadd.f32 0.0, %v2041
      %v2043 = vpop.f32.mrb[0].mxu0
      %2044 = vdwg.mxu0
      %2045 = vrot.lane.b32.xlu0 %v924, 104
      %v2046 = vpop.permute.xlu0 %2045
      %2047 = vrot.lane.b32.xlu0 %v929, 104
      %v2048 = vpop.permute.xlu0 %2047
      %2049 = vrot.lane.b32.xlu0 %v934, 104
      %v2050 = vpop.permute.xlu0 %2049
      %2051 = vrot.lane.b32.xlu0 %v939, 104
      %v2052 = vpop.permute.xlu0 %2051
      %2053 = vrot.lane.b32.xlu0 %v1104, 104
      %v2054 = vpop.permute.xlu0 %2053
      %2055 = vrot.lane.b32.xlu0 %v1109, 104
      %v2056 = vpop.permute.xlu0 %2055
      %2057 = vrot.lane.b32.xlu0 %v1114, 104
      %v2058 = vpop.permute.xlu0 %2057
      %2059 = vrot.lane.b32.xlu0 %v1119, 104
      %v2060 = vpop.permute.xlu0 %2059
      %v2061 = vsel %vm1226, %v2046, 0
      %v2063 = vsel %vm1226, %v2048, 0
      %v2065 = vsel %vm1226, %v2050, 0
      %v2067 = vsel %vm1226, %v2052, 0
      %v2069 = vsel %vm1226, %v2054, 0
      %v2071 = vsel %vm1226, %v2056, 0
      %v2073 = vsel %vm1226, %v2058, 0
      %v2075 = vsel %vm1226, %v2060, 0
      %2077 = vmatprep.subr.mxu0 0.0
      %2078 = vmatpush1.xpose.msra.mxu0 %v2069
      %2079 = vmatprep.subr.mxu0 0.0
      %2080 = vmatpush1.xpose.msra.mxu0 %v2071
      %2081 = vmatprep.subr.mxu0 0.0
      %2082 = vmatpush1.xpose.msra.mxu0 %v2073
      %2083 = vmatprep.subr.mxu0 0.0
      %2084 = vmatpush1.xpose.msra.mxu0 %v2075
      %2085 = vmatprep.subr.mxu0 0.0
      %2086 = vmatpush1.xpose.msra.mxu0 0.0
      %2087 = vmatprep.subr.mxu0 0.0
      %2088 = vmatpush1.xpose.msra.mxu0 0.0
      %2089 = vmatprep.subr.mxu0 0.0
      %2090 = vmatpush1.xpose.msra.mxu0 0.0
      %2091 = vmatprep.subr.mxu0 0.0
      %2092 = vmatpush1.xpose.msra.mxu0 0.0
      %2093 = vmatprep.subr.mxu0 0.0
      %2094 = vmatpush1.xpose.msra.mxu0 0.0
      %2095 = vmatprep.subr.mxu0 0.0
      %2096 = vmatpush1.xpose.msra.mxu0 0.0
      %2097 = vmatprep.subr.mxu0 0.0
      %2098 = vmatpush1.xpose.msra.mxu0 0.0
      %2099 = vmatprep.subr.mxu0 0.0
      %2100 = vmatpush1.xpose.msra.mxu0 0.0
      %2101 = vmatprep.subr.mxu0 0.0
      %2102 = vmatpush1.xpose.msra.mxu0 0.0
      %2103 = vmatprep.subr.mxu0 0.0
      %2104 = vmatpush1.xpose.msra.mxu0 0.0
      %2105 = vmatprep.subr.mxu0 0.0
      %2106 = vmatpush1.xpose.msra.mxu0 0.0
      %2107 = vmatprep.subr.mxu0 0.0
      %2108 = vmatpush1.xpose.msra.mxu0 0.0
      %2109 = vmatprep.subr.mxu0 0.0
      %2110 = vmatpush1.xpose.msra.mxu0 0.0
      %2111 = vmatprep.subr.mxu0 0.0
      %2112 = vmatpush1.xpose.msra.mxu0 0.0
      %2113 = vmatprep.subr.mxu0 0.0
      %2114 = vmatpush1.xpose.msra.mxu0 0.0
      %2115 = vmatprep.subr.mxu0 0.0
      %2116 = vmatpush1.xpose.msra.mxu0 0.0
      %2117 = vmatprep.subr.mxu0 0.0
      %2118 = vmatpush1.xpose.msra.mxu0 0.0
      %2119 = vmatprep.subr.mxu0 0.0
      %2120 = vmatpush1.xpose.msra.mxu0 0.0
      %2121 = vmatprep.subr.mxu0 0.0
      %2122 = vmatpush1.xpose.msra.mxu0 0.0
      %2123 = vmatprep.subr.mxu0 0.0
      %2124 = vmatpush1.xpose.msra.mxu0 0.0
      %2125 = vmatprep.subr.mxu0 0.0
      %2126 = vmatpush1.xpose.msra.mxu0 0.0
      %2127 = vmatprep.subr.mxu0 0.0
      %2128 = vmatpush1.xpose.msra.mxu0 0.0
      %2129 = vmatprep.subr.mxu0 0.0
      %2130 = vmatpush1.xpose.msra.mxu0 0.0
      %2131 = vmatprep.subr.mxu0 0.0
      %2132 = vmatpush1.xpose.msra.mxu0 0.0
      %2133 = vmatprep.subr.mxu0 0.0
      %2134 = vmatpush1.xpose.msra.mxu0 0.0
      %2135 = vmatprep.subr.mxu0 0.0
      %2136 = vmatpush1.xpose.msra.mxu0 0.0
      %2137 = vmatprep.subr.mxu0 0.0
      %2138 = vmatpush1.xpose.msra.mxu0 0.0
      %2139 = vmatprep.subr.mxu0 0.0
      %2140 = vmatpush1.xpose.msra.mxu0 0.0
      %2141 = vmatprep.mubr.f32.mxu0 0.0
      %2142 = vmatmul.mubr.f32.gmra.mrb[0].mxu0 %v2061
      %v2143 = vpop.f32.mrb[0].mxu0
      %v2144 = vadd.f32 0.0, %v2143
      %v2145 = vpop.f32.mrb[0].mxu0
      %2146 = vmatprep.mubr.f32.mxu0 0.0
      %2147 = vmatmul.mubr.f32.gmra.mrb[0].mxu0 %v2063
      %v2148 = vpop.f32.mrb[0].mxu0
      %v2149 = vadd.f32 0.0, %v2148
      %v2150 = vpop.f32.mrb[0].mxu0
      %2151 = vmatprep.mubr.f32.mxu0 0.0
      %2152 = vmatmul.mubr.f32.gmra.mrb[0].mxu0 %v2065
      %v2153 = vpop.f32.mrb[0].mxu0
      %v2154 = vadd.f32 0.0, %v2153
      %v2155 = vpop.f32.mrb[0].mxu0
      %2156 = vmatprep.mubr.f32.mxu0 0.0
      %2157 = vmatmul.mubr.f32.gmra.mrb[0].mxu0 %v2067
      %v2158 = vpop.f32.mrb[0].mxu0
      %v2159 = vadd.f32 0.0, %v2158
      %v2160 = vpop.f32.mrb[0].mxu0
      %2161 = vdwg.mxu0
      %v2162 = vmul.f32 %v2144, 0.35355338
      %v2163 = vmul.f32 %v2149, 0.35355338
      %v2164 = vmul.f32 %v2154, 0.35355338
      %v2165 = vmul.f32 %v2159, 0.35355338
      %v2166 = vadd.f32 %v2162, %v753
      %v2167 = vadd.f32 %v2163, %v754
      %v2168 = vadd.f32 %v2164, %v755
      %v2169 = vadd.f32 %v2165, %v756
      %v2170 = vsel %vm815, %v2166, -inf
      %2171 = vmax.xlane.f32.xlu0 %v2170
      %v2172 = vpop.xlane.xlu0 %2171
      %v2173 = vsel %vm815, %v2167, -inf
      %2174 = vmax.xlane.f32.xlu0 %v2173
      %v2175 = vpop.xlane.xlu0 %2174
      %v2176 = vsel %vm815, %v2168, -inf
      %2177 = vmax.xlane.f32.xlu0 %v2176
      %v2178 = vpop.xlane.xlu0 %2177
      %v2179 = vsel %vm815, %v2169, -inf
      %2180 = vmax.xlane.f32.xlu0 %v2179
      %v2181 = vpop.xlane.xlu0 %2180
      %v2182 = vsub.f32 %v2166, %v2172
      %v2183 = vsub.f32 %v2167, %v2175
      %v2184 = vsub.f32 %v2168, %v2178
      %v2185 = vsub.f32 %v2169, %v2181
      %v2186 = vmul.f32 %v2182, 1.442695
      %v2187 = vpow.pop %v2186
      %v2188 = vmul.f32 %v2183, 1.442695
      %v2189 = vpow.pop %v2188
      %v2190 = vmul.f32 %v2184, 1.442695
      %v2191 = vpow.pop %v2190
      %v2192 = vmul.f32 %v2185, 1.442695
      %v2193 = vpow.pop %v2192
      %v2194 = vsel %vm815, %v2187, 0.0
      %2195 = vadd.xlane.f32.xlu0 %v2194
      %v2196 = vpop.xlane.xlu0 %2195
      %v2197 = vsel %vm815, %v2189, 0.0
      %2198 = vadd.xlane.f32.xlu0 %v2197
      %v2199 = vpop.xlane.xlu0 %2198
      %v2200 = vsel %vm815, %v2191, 0.0
      %2201 = vadd.xlane.f32.xlu0 %v2200
      %v2202 = vpop.xlane.xlu0 %2201
      %v2203 = vsel %vm815, %v2193, 0.0
      %2204 = vadd.xlane.f32.xlu0 %v2203
      %v2205 = vpop.xlane.xlu0 %2204
      %v2206 = vrcp.pop %v2196
      %v2207 = vrcp.pop %v2199
      %v2208 = vrcp.pop %v2202
      %v2209 = vrcp.pop %v2205
      %v2210 = vmul.f32 %v2187, %v2206
      %v2211 = vmul.f32 %v2189, %v2207
      %v2212 = vmul.f32 %v2191, %v2208
      %v2213 = vmul.f32 %v2193, %v2209
      %2214 = vrot.lane.b32.xlu0 %v1208, 104
      %v2215 = vpop.permute.xlu0 %2214
      %2216 = vrot.lane.b32.xlu0 %v1213, 104
      %v2217 = vpop.permute.xlu0 %2216
      %2218 = vrot.lane.b32.xlu0 %v1218, 104
      %v2219 = vpop.permute.xlu0 %2218
      %2220 = vrot.lane.b32.xlu0 %v1223, 104
      %v2221 = vpop.permute.xlu0 %2220
      %v2227 = vsel %vm815, %v2210, 0
      %v2230 = vsel %vm815, %v2211, 0
      %v2233 = vsel %vm815, %v2212, 0
      %v2236 = vsel %vm815, %v2213, 0
      %2238 = vmatprep.subr.mxu0 0.0
      %2239 = vmatpush1.msra.mxu0 %v2215
      %2240 = vmatprep.subr.mxu0 0.0
      %2241 = vmatpush1.msra.mxu0 %v2217
      %2242 = vmatprep.subr.mxu0 0.0
      %2243 = vmatpush1.msra.mxu0 %v2219
      %2244 = vmatprep.subr.mxu0 0.0
      %2245 = vmatpush1.msra.mxu0 %v2221
      %2246 = vmatprep.subr.mxu0 0.0
      %2247 = vmatpush1.msra.mxu0 0.0
      %2248 = vmatprep.subr.mxu0 0.0
      %2249 = vmatpush1.msra.mxu0 0.0
      %2250 = vmatprep.subr.mxu0 0.0
      %2251 = vmatpush1.msra.mxu0 0.0
      %2252 = vmatprep.subr.mxu0 0.0
      %2253 = vmatpush1.msra.mxu0 0.0
      %2254 = vmatprep.subr.mxu0 0.0
      %2255 = vmatpush1.msra.mxu0 0.0
      %2256 = vmatprep.subr.mxu0 0.0
      %2257 = vmatpush1.msra.mxu0 0.0
      %2258 = vmatprep.subr.mxu0 0.0
      %2259 = vmatpush1.msra.mxu0 0.0
      %2260 = vmatprep.subr.mxu0 0.0
      %2261 = vmatpush1.msra.mxu0 0.0
      %2262 = vmatprep.subr.mxu0 0.0
      %2263 = vmatpush1.msra.mxu0 0.0
      %2264 = vmatprep.subr.mxu0 0.0
      %2265 = vmatpush1.msra.mxu0 0.0
      %2266 = vmatprep.subr.mxu0 0.0
      %2267 = vmatpush1.msra.mxu0 0.0
      %2268 = vmatprep.subr.mxu0 0.0
      %2269 = vmatpush1.msra.mxu0 0.0
      %2270 = vmatprep.subr.mxu0 0.0
      %2271 = vmatpush1.msra.mxu0 0.0
      %2272 = vmatprep.subr.mxu0 0.0
      %2273 = vmatpush1.msra.mxu0 0.0
      %2274 = vmatprep.subr.mxu0 0.0
      %2275 = vmatpush1.msra.mxu0 0.0
      %2276 = vmatprep.subr.mxu0 0.0
      %2277 = vmatpush1.msra.mxu0 0.0
      %2278 = vmatprep.subr.mxu0 0.0
      %2279 = vmatpush1.msra.mxu0 0.0
      %2280 = vmatprep.subr.mxu0 0.0
      %2281 = vmatpush1.msra.mxu0 0.0
      %2282 = vmatprep.subr.mxu0 0.0
      %2283 = vmatpush1.msra.mxu0 0.0
      %2284 = vmatprep.subr.mxu0 0.0
      %2285 = vmatpush1.msra.mxu0 0.0
      %2286 = vmatprep.subr.mxu0 0.0
      %2287 = vmatpush1.msra.mxu0 0.0
      %2288 = vmatprep.subr.mxu0 0.0
      %2289 = vmatpush1.msra.mxu0 0.0
      %2290 = vmatprep.subr.mxu0 0.0
      %2291 = vmatpush1.msra.mxu0 0.0
      %2292 = vmatprep.subr.mxu0 0.0
      %2293 = vmatpush1.msra.mxu0 0.0
      %2294 = vmatprep.subr.mxu0 0.0
      %2295 = vmatpush1.msra.mxu0 0.0
      %2296 = vmatprep.subr.mxu0 0.0
      %2297 = vmatpush1.msra.mxu0 0.0
      %2298 = vmatprep.subr.mxu0 0.0
      %2299 = vmatpush1.msra.mxu0 0.0
      %2300 = vmatprep.subr.mxu0 0.0
      %2301 = vmatpush1.msra.mxu0 0.0
      %2302 = vmatprep.mubr.f32.mxu0 0.0
      %2303 = vmatmul.mubr.f32.gmra.mrb[0].mxu0 %v2227
      %v2304 = vpop.f32.mrb[0].mxu0
      %v2305 = vadd.f32 0.0, %v2304
      %v2306 = vpop.f32.mrb[0].mxu0
      %2307 = vmatprep.mubr.f32.mxu0 0.0
      %2308 = vmatmul.mubr.f32.gmra.mrb[0].mxu0 %v2230
      %v2309 = vpop.f32.mrb[0].mxu0
      %v2310 = vadd.f32 0.0, %v2309
      %v2311 = vpop.f32.mrb[0].mxu0
      %2312 = vmatprep.mubr.f32.mxu0 0.0
      %2313 = vmatmul.mubr.f32.gmra.mrb[0].mxu0 %v2233
      %v2314 = vpop.f32.mrb[0].mxu0
      %v2315 = vadd.f32 0.0, %v2314
      %v2316 = vpop.f32.mrb[0].mxu0
      %2317 = vmatprep.mubr.f32.mxu0 0.0
      %2318 = vmatmul.mubr.f32.gmra.mrb[0].mxu0 %v2236
      %v2319 = vpop.f32.mrb[0].mxu0
      %v2320 = vadd.f32 0.0, %v2319
      %v2321 = vpop.f32.mrb[0].mxu0
      %2322 = vdwg.mxu0
      %2327 = vrot.lane.b32.xlu0 %v1749, 8
      %v2328 = vpop.permute.xlu0 %2327
      %2329 = vrot.lane.b32.xlu0 %v1754, 8
      %v2330 = vpop.permute.xlu0 %2329
      %2331 = vrot.lane.b32.xlu0 %v1759, 8
      %v2332 = vpop.permute.xlu0 %2331
      %2333 = vrot.lane.b32.xlu0 %v1764, 8
      %v2334 = vpop.permute.xlu0 %2333
      %2343 = vrot.lane.b32.xlu0 %v2027, 16
      %v2344 = vpop.permute.xlu0 %2343
      %2345 = vrot.lane.b32.xlu0 %v2032, 16
      %v2346 = vpop.permute.xlu0 %2345
      %2347 = vrot.lane.b32.xlu0 %v2037, 16
      %v2348 = vpop.permute.xlu0 %2347
      %2349 = vrot.lane.b32.xlu0 %v2042, 16
      %v2350 = vpop.permute.xlu0 %2349
      %2359 = vrot.lane.b32.xlu0 %v2305, 24
      %v2360 = vpop.permute.xlu0 %2359
      %2361 = vrot.lane.b32.xlu0 %v2310, 24
      %v2362 = vpop.permute.xlu0 %2361
      %2363 = vrot.lane.b32.xlu0 %v2315, 24
      %v2364 = vpop.permute.xlu0 %2363
      %2365 = vrot.lane.b32.xlu0 %v2320, 24
      %v2366 = vpop.permute.xlu0 %2365
      %v2371 = vsel %vm1226, %v1467, %v2328
      %v2372 = vsel %vm1226, %v1472, %v2330
      %v2373 = vsel %vm1226, %v1477, %v2332
      %v2374 = vsel %vm1226, %v1482, %v2334
      %vm2375 = vcmask 130048
      %v2376 = vsel %vm2375, %v2371, %v2344
      %v2377 = vsel %vm2375, %v2372, %v2346
      %v2378 = vsel %vm2375, %v2373, %v2348
      %v2379 = vsel %vm2375, %v2374, %v2350
      %vm2380 = vcmask 195584
      %v2381 = vsel %vm2380, %v2376, %v2360
      %v2382 = vsel %vm2380, %v2377, %v2362
      %v2383 = vsel %vm2380, %v2378, %v2364
      %v2384 = vsel %vm2380, %v2379, %v2366
      %v2385 = vld [vmem:[%s721] sm:$0xff]
      %v2386 = vld [vmem:[%s721 + $0x8] sm:$0xff]
      %v2387 = vld [vmem:[%s721 + $0x10] sm:$0xff]
      %v2388 = vld [vmem:[%s721 + $0x18] sm:$0xff]
      %v2389 = vld [vmem:[%s724] sm:$0x1]
      %v2391 = vlaneseq
      %v2392 = vshrl.u32 %v2391, 7
      %v2393 = vsub.s32 0, %v2392
      %v2394 = vrot.slane %v2389, %v2393
      %v2397 = vsel %vm815, %v2381, 0
      %v2400 = vsel %vm815, %v2382, 0
      %v2403 = vsel %vm815, %v2383, 0
      %v2406 = vsel %vm815, %v2384, 0
      %2408 = vmatprep.subr.mxu0 0.0
      %2409 = vmatpush1.msra.mxu0 %v2385
      %2410 = vmatprep.subr.mxu0 0.0
      %2411 = vmatpush1.msra.mxu0 %v2386
      %2412 = vmatprep.subr.mxu0 0.0
      %2413 = vmatpush1.msra.mxu0 %v2387
      %2414 = vmatprep.subr.mxu0 0.0
      %2415 = vmatpush1.msra.mxu0 %v2388
      %2416 = vmatprep.subr.mxu0 0.0
      %2417 = vmatpush1.msra.mxu0 0.0
      %2418 = vmatprep.subr.mxu0 0.0
      %2419 = vmatpush1.msra.mxu0 0.0
      %2420 = vmatprep.subr.mxu0 0.0
      %2421 = vmatpush1.msra.mxu0 0.0
      %2422 = vmatprep.subr.mxu0 0.0
      %2423 = vmatpush1.msra.mxu0 0.0
      %2424 = vmatprep.subr.mxu0 0.0
      %2425 = vmatpush1.msra.mxu0 0.0
      %2426 = vmatprep.subr.mxu0 0.0
      %2427 = vmatpush1.msra.mxu0 0.0
      %2428 = vmatprep.subr.mxu0 0.0
      %2429 = vmatpush1.msra.mxu0 0.0
      %2430 = vmatprep.subr.mxu0 0.0
      %2431 = vmatpush1.msra.mxu0 0.0
      %2432 = vmatprep.subr.mxu0 0.0
      %2433 = vmatpush1.msra.mxu0 0.0
      %2434 = vmatprep.subr.mxu0 0.0
      %2435 = vmatpush1.msra.mxu0 0.0
      %2436 = vmatprep.subr.mxu0 0.0
      %2437 = vmatpush1.msra.mxu0 0.0
      %2438 = vmatprep.subr.mxu0 0.0
      %2439 = vmatpush1.msra.mxu0 0.0
      %2440 = vmatprep.subr.mxu0 0.0
      %2441 = vmatpush1.msra.mxu0 0.0
      %2442 = vmatprep.subr.mxu0 0.0
      %2443 = vmatpush1.msra.mxu0 0.0
      %2444 = vmatprep.subr.mxu0 0.0
      %2445 = vmatpush1.msra.mxu0 0.0
      %2446 = vmatprep.subr.mxu0 0.0
      %2447 = vmatpush1.msra.mxu0 0.0
      %2448 = vmatprep.subr.mxu0 0.0
      %2449 = vmatpush1.msra.mxu0 0.0
      %2450 = vmatprep.subr.mxu0 0.0
      %2451 = vmatpush1.msra.mxu0 0.0
      %2452 = vmatprep.subr.mxu0 0.0
      %2453 = vmatpush1.msra.mxu0 0.0
      %2454 = vmatprep.subr.mxu0 0.0
      %2455 = vmatpush1.msra.mxu0 0.0
      %2456 = vmatprep.subr.mxu0 0.0
      %2457 = vmatpush1.msra.mxu0 0.0
      %2458 = vmatprep.subr.mxu0 0.0
      %2459 = vmatpush1.msra.mxu0 0.0
      %2460 = vmatprep.subr.mxu0 0.0
      %2461 = vmatpush1.msra.mxu0 0.0
      %2462 = vmatprep.subr.mxu0 0.0
      %2463 = vmatpush1.msra.mxu0 0.0
      %2464 = vmatprep.subr.mxu0 0.0
      %2465 = vmatpush1.msra.mxu0 0.0
      %2466 = vmatprep.subr.mxu0 0.0
      %2467 = vmatpush1.msra.mxu0 0.0
      %2468 = vmatprep.subr.mxu0 0.0
      %2469 = vmatpush1.msra.mxu0 0.0
      %2470 = vmatprep.subr.mxu0 0.0
      %2471 = vmatpush1.msra.mxu0 0.0
      %2472 = vmatprep.mubr.f32.mxu0 0.0
      %2473 = vmatmul.mubr.f32.gmra.mrb[0].mxu0 %v2397
      %v2474 = vpop.f32.mrb[0].mxu0
      %v2475 = vadd.f32 %v2394, %v2474
      %v2476 = vpop.f32.mrb[0].mxu0
      %2477 = vmatprep.mubr.f32.mxu0 0.0
      %2478 = vmatmul.mubr.f32.gmra.mrb[0].mxu0 %v2400
      %v2479 = vpop.f32.mrb[0].mxu0
      %v2480 = vadd.f32 %v2394, %v2479
      %v2481 = vpop.f32.mrb[0].mxu0
      %2482 = vmatprep.mubr.f32.mxu0 0.0
      %2483 = vmatmul.mubr.f32.gmra.mrb[0].mxu0 %v2403
      %v2484 = vpop.f32.mrb[0].mxu0
      %v2485 = vadd.f32 %v2394, %v2484
      %v2486 = vpop.f32.mrb[0].mxu0
      %2487 = vmatprep.mubr.f32.mxu0 0.0
      %2488 = vmatmul.mubr.f32.gmra.mrb[0].mxu0 %v2406
      %v2489 = vpop.f32.mrb[0].mxu0
      %v2490 = vadd.f32 %v2394, %v2489
      %v2491 = vpop.f32.mrb[0].mxu0
      %2492 = vdwg.mxu0
      %2493 = vst.msk [vmem:[%s743] sm:$0xff] %vm815, %v2475
      %2494 = vst.msk [vmem:[%s743 + $0x8] sm:$0xff] %vm815, %v2480
      %2495 = vst.msk [vmem:[%s743 + $0x10] sm:$0xff] %vm815, %v2485
      %2496 = vst.msk [vmem:[%s743 + $0x18] sm:$0xff] %vm815, %v2490
      %s2497 = smul.u32 4, %s31
      %p2498 = scmp.lt.s32.totalorder %s29, 1
      %s2499 = scalar_select %p2498, %s29, 1
      %p2500 = scmp.lt.s32.totalorder %s30, 1
      %s2501 = scalar_select %p2500, %s30, 1
      %p2502 = scmp.lt.s32.totalorder %s2497, 3
      %s2503 = scalar_select %p2502, %s2497, 3
      %s2504 = smul.addr %s2501, 4
      %s2505 = sadd.s32 %s2503, %s2504
      %s2506 = smul.addr %s2499, 8
      %s2507 = sadd.s32 %s2505, %s2506
      %s2508 = smul.addr %s2507, 8
      %s2509 = scalar_lea.vmem %s13, %s2508
      // Predicated region
      $region73: #{decoder_forward.2} parent=71 // pred_check
        %p2510 = pneg %p411
      $region74: #{decoder_forward.2} parent=71 // pred_check_branch
        %2512 = sbr.rel (%p2510) target = $region76
      $region75: #{decoder_forward.2} parent=71 // pred_region
        %s2513 = smul.u32 4, %s31
      $region76: #{decoder_forward.2} parent=71 // pred_fallthru
        _
    $region72: #{decoder_forward.2} parent=5 // pred_fallthru
      _
    %p2514 = scmp.le.s32.totalorder 2, %s19
    // Predicated region
    $region77: #{decoder_forward.2} parent=5 // pred_check
      %p2515 = pneg %p2514
    $region78: #{decoder_forward.2} parent=5 // pred_check_branch
      %2517 = sbr.rel (%p2515) target = $region80
    $region79: #{decoder_forward.2} parent=5 // pred_region
      %s2518 = ssub.s32 %s19, 2
      // Predicated region
      $region81: #{decoder_forward.2} parent=79 // pred_check
        %p2519 = pneg %p417
      $region82: #{decoder_forward.2} parent=79 // pred_check_branch
        %2521 = sbr.rel (%p2519) target = $region84
      $region83: #{decoder_forward.2} parent=79 // pred_region
        %s2522 = smul.u32 4, %s34
        %p2523 = scmp.lt.s32.totalorder %s32, 1
        %s2524 = scalar_select %p2523, %s32, 1
        %p2525 = scmp.lt.s32.totalorder %s33, 1
        %s2526 = scalar_select %p2525, %s33, 1
        %p2527 = scmp.lt.s32.totalorder %s2522, 3
        %s2528 = scalar_select %p2527, %s2522, 3
        %s2529 = smul.addr %s2526, 4
        %s2530 = sadd.s32 %s2528, %s2529
        %s2531 = smul.addr %s2524, 8
        %s2532 = sadd.s32 %s2530, %s2531
        %s2533 = smul.addr %s2532, 8
        %s2534 = scalar_lea.vmem %s13, %s2533
      $region84: #{decoder_forward.2} parent=79 // pred_fallthru
        _
    $region80: #{decoder_forward.2} parent=5 // pred_fallthru
      _
  $region6: #{decoder_forward.2} parent=0 // loop_footer
    %s23 = sadd.s32 1, %s19
  $region7: #{decoder_forward.2} parent=0 // loop_footer_branch
    %18 = sbr.rel target = $region3
  $region8: #{decoder_forward.2} parent=0 // loop_exit
    _

// kernel: decoder_forward.3
$region0: #{decoder_forward.3}
  #allocation0 [shape = 'u32[]', space=smem, size = 0x4, offset = 0x4, fixed_abs, tag = 'smem constant byte address 0x4 - core index']
  #allocation1 [shape = 'u32[144,128]{1,0:T(1,128)}', space=vmem, size = 0x12000, scoped, tag = 'internal scratch']
  %s0 = inlined_call_operand.vmem [shape: f32[2,2,32,32], index: 0, kind: input, shape index: {}]
  %s1 = inlined_call_operand.vmem [shape: f32[2,2,32,32], index: 1, kind: input, shape index: {}]
  %s2 = inlined_call_operand.vmem [shape: f32[2,32,32], index: 2, kind: input, shape index: {}]
  %s3 = inlined_call_operand.vmem [shape: f32[2,96,32], index: 3, kind: input, shape index: {}]
  %s4 = inlined_call_operand.vmem [shape: f32[2,1,32], index: 4, kind: input, shape index: {}]
  %s5 = inlined_call_operand.vmem [shape: f32[2,96,32], index: 5, kind: input, shape index: {}]
  %s6 = inlined_call_operand.vmem [shape: f32[2,1,32], index: 6, kind: input, shape index: {}]
  %s7 = inlined_call_operand.vmem [shape: f32[2,32,32], index: 7, kind: input, shape index: {}]
  %s8 = inlined_call_operand.vmem [shape: f32[2,1,32], index: 8, kind: input, shape index: {}]
  %s9 = inlined_call_operand.vmem [shape: f32[2,32,32], index: 9, kind: input, shape index: {}]
  %s10 = inlined_call_operand.vmem [shape: f32[2,1,32], index: 10, kind: input, shape index: {}]
  %s11 = inlined_call_operand.vmem [shape: f32[2,1,32], index: 11, kind: input, shape index: {}]
  %s12 = inlined_call_operand.vmem [shape: f32[2,1,32], index: 12, kind: input, shape index: {}]
  %s13 = inlined_call_operand.vmem [shape: f32[2,2,32,32], index: 13, kind: output, shape index: {}]
  %s14 = sld [smem:[#allocation0]]
  $region85: #{decoder_forward.3} parent=0
    _
  %s16 = ssub.s32 1, %s14
  %s17 = scalar_select 0, %s16, %s14
  loop: start=0, step=1, limit=6
  $region2: #{decoder_forward.3} parent=0 // loop_pre_header
    _
  $region3: #{decoder_forward.3} parent=0 // loop_header
    %s19 = sphi 0, %s23
    %p20 = scmp.ge.s32.totalorder %s19, 6
    %s26 = sphi 0, %s45
    %s27 = sphi 0, %s41
    %s28 = sphi 0, %s37
    %s29 = sphi 0, %s26
    %s30 = sphi 0, %s27
    %s31 = sphi 0, %s28
    %s32 = sphi 0, %s29
    %s33 = sphi 0, %s30
    %s34 = sphi 0, %s31
    %s52 = sphi 0, %s54
    %s55 = sphi 0, %s52
    %s56 = sphi 0, %s55
    %s72 = sphi 0, %s56
    %s82 = sphi 0, %s84
    %s85 = sphi 0, %s82
    %s86 = sphi 0, %s85
    %s102 = sphi 0, %s86
    %s108 = sphi 0, %s110
    %s111 = sphi 0, %s108
    %s112 = sphi 0, %s111
    %s128 = sphi 0, %s112
    %s134 = sphi 0, %s136
    %s137 = sphi 0, %s134
    %s138 = sphi 0, %s137
    %s154 = sphi 0, %s138
    %s160 = sphi 0, %s162
    %s163 = sphi 0, %s160
    %s164 = sphi 0, %s163
    %s180 = sphi 0, %s164
    %s186 = sphi 0, %s188
    %s189 = sphi 0, %s186
    %s190 = sphi 0, %s189
    %s206 = sphi 0, %s190
    %s212 = sphi 0, %s214
    %s215 = sphi 0, %s212
    %s216 = sphi 0, %s215
    %s232 = sphi 0, %s216
    %s238 = sphi 0, %s240
    %s241 = sphi 0, %s238
    %s242 = sphi 0, %s241
    %s258 = sphi 0, %s242
    %s264 = sphi 0, %s266
    %s267 = sphi 0, %s264
    %s268 = sphi 0, %s267
    %s284 = sphi 0, %s268
    %s290 = sphi 0, %s292
    %s293 = sphi 0, %s290
    %s294 = sphi 0, %s293
    %s310 = sphi 0, %s294
    %s316 = sphi 0, %s318
    %s319 = sphi 0, %s316
    %s320 = sphi 0, %s319
    %s336 = sphi 0, %s320
    %s342 = sphi 0, %s344
    %s345 = sphi 0, %s342
    %s346 = sphi 0, %s345
    %s362 = sphi 0, %s346
    %s368 = sphi 0, %s370
    %s371 = sphi 0, %s368
    %s372 = sphi 0, %s371
    %s388 = sphi 0, %s372
    %s398 = sphi 0, %s400
    %s401 = sphi 0, %s398
    %s402 = sphi 0, %s401
    %s418 = sphi 0, %s402
  $region4: #{decoder_forward.3} parent=0 // loop_header_branch
    %22 = sbr.rel (%p20) target = $region8
  $region5: #{decoder_forward.3} parent=0 // loop_body
    %s24 = ssub.s32 %s19, 1
    %s25 = ssub.s32 %s19, 2
    %s35 = sadd.s32 1, %s28
    %p36 = scmp.ge.s32.totalorder %s35, 1
    %s37 = scalar_select %p36, 0, %s35
    %s38 = sadd.s32 1, %s27
    %s39 = scalar_select %p36, %s38, %s27
    %p40 = scmp.ge.s32.totalorder %s39, 2
    %s41 = scalar_select %p40, 0, %s39
    %s42 = sadd.s32 1, %s26
    %s43 = scalar_select %p40, %s42, %s26
    %p44 = scmp.ge.s32.totalorder %s43, 2
    %s45 = scalar_select %p44, 0, %s43
    %s46 = ssub.s32 %s26, %s45
    %s47 = ssub.s32 %s27, %s41
    %s48 = sor.u32 %s46, %s47
    %s49 = ssub.s32 %s28, %s37
    %s50 = sor.u32 %s48, %s49
    %p51 = scmp.eq.s32.totalorder %s50, 0
    %s53 = sadd.s32 %s52, 1
    %s54 = scalar_select %p51, %s52, %s53
    %p57 = pneg %p51
    %p58 = scmp.eq.s32.totalorder %s19, 3
    %p59 = por %p57, %p58
    %p60 = scmp.ne.s32.totalorder %s52, %s55
    %p61 = scmp.eq.s32.totalorder %s19, 0
    %p62 = por %p60, %p61
    %p63 = scmp.ne.s32.totalorder %s52, %s55
    %p64 = scmp.eq.s32.totalorder %s24, 3
    %p65 = por %p63, %p64
    %p66 = scmp.ne.s32.totalorder %s55, %s56
    %p67 = scmp.eq.s32.totalorder %s24, 0
    %p68 = por %p66, %p67
    %p69 = scmp.ne.s32.totalorder %s55, %s56
    %p70 = scmp.eq.s32.totalorder %s25, 3
    %p71 = por %p69, %p70
    %p73 = scmp.ne.s32.totalorder %s56, %s72
    %p74 = scmp.eq.s32.totalorder %s25, 0
    %p75 = por %p73, %p74
    %s76 = ssub.s32 %s26, %s45
    %s77 = ssub.s32 %s27, %s41
    %s78 = sor.u32 %s76, %s77
    %s79 = ssub.s32 %s28, %s37
    %s80 = sor.u32 %s78, %s79
    %p81 = scmp.eq.s32.totalorder %s80, 0
    %s83 = sadd.s32 %s82, 1
    %s84 = scalar_select %p81, %s82, %s83
    %p87 = pneg %p81
    %p88 = scmp.eq.s32.totalorder %s19, 3
    %p89 = por %p87, %p88
    %p90 = scmp.ne.s32.totalorder %s82, %s85
    %p91 = scmp.eq.s32.totalorder %s19, 0
    %p92 = por %p90, %p91
    %p93 = scmp.ne.s32.totalorder %s82, %s85
    %p94 = scmp.eq.s32.totalorder %s24, 3
    %p95 = por %p93, %p94
    %p96 = scmp.ne.s32.totalorder %s85, %s86
    %p97 = scmp.eq.s32.totalorder %s24, 0
    %p98 = por %p96, %p97
    %p99 = scmp.ne.s32.totalorder %s85, %s86
    %p100 = scmp.eq.s32.totalorder %s25, 3
    %p101 = por %p99, %p100
    %p103 = scmp.ne.s32.totalorder %s86, %s102
    %p104 = scmp.eq.s32.totalorder %s25, 0
    %p105 = por %p103, %p104
    %s106 = ssub.s32 %s27, %s41
    %p107 = scmp.eq.s32.totalorder %s106, 0
    %s109 = sadd.s32 %s108, 1
    %s110 = scalar_select %p107, %s108, %s109
    %p113 = pneg %p107
    %p114 = scmp.eq.s32.totalorder %s19, 3
    %p115 = por %p113, %p114
    %p116 = scmp.ne.s32.totalorder %s108, %s111
    %p117 = scmp.eq.s32.totalorder %s19, 0
    %p118 = por %p116, %p117
    %p119 = scmp.ne.s32.totalorder %s108, %s111
    %p120 = scmp.eq.s32.totalorder %s24, 3
    %p121 = por %p119, %p120
    %p122 = scmp.ne.s32.totalorder %s111, %s112
    %p123 = scmp.eq.s32.totalorder %s24, 0
    %p124 = por %p122, %p123
    %p125 = scmp.ne.s32.totalorder %s111, %s112
    %p126 = scmp.eq.s32.totalorder %s25, 3
    %p127 = por %p125, %p126
    %p129 = scmp.ne.s32.totalorder %s112, %s128
    %p130 = scmp.eq.s32.totalorder %s25, 0
    %p131 = por %p129, %p130
    %s132 = ssub.s32 %s26, %s45
    %p133 = scmp.eq.s32.totalorder %s132, 0
    %s135 = sadd.s32 %s134, 1
    %s136 = scalar_select %p133, %s134, %s135
    %p139 = pneg %p133
    %p140 = scmp.eq.s32.totalorder %s19, 3
    %p141 = por %p139, %p140
    %p142 = scmp.ne.s32.totalorder %s134, %s137
    %p143 = scmp.eq.s32.totalorder %s19, 0
    %p144 = por %p142, %p143
    %p145 = scmp.ne.s32.totalorder %s134, %s137
    %p146 = scmp.eq.s32.totalorder %s24, 3
    %p147 = por %p145, %p146
    %p148 = scmp.ne.s32.totalorder %s137, %s138
    %p149 = scmp.eq.s32.totalorder %s24, 0
    %p150 = por %p148, %p149
    %p151 = scmp.ne.s32.totalorder %s137, %s138
    %p152 = scmp.eq.s32.totalorder %s25, 3
    %p153 = por %p151, %p152
    %p155 = scmp.ne.s32.totalorder %s138, %s154
    %p156 = scmp.eq.s32.totalorder %s25, 0
    %p157 = por %p155, %p156
    %s158 = ssub.s32 %s26, %s45
    %p159 = scmp.eq.s32.totalorder %s158, 0
    %s161 = sadd.s32 %s160, 1
    %s162 = scalar_select %p159, %s160, %s161
    %p165 = pneg %p159
    %p166 = scmp.eq.s32.totalorder %s19, 3
    %p167 = por %p165, %p166
    %p168 = scmp.ne.s32.totalorder %s160, %s163
    %p169 = scmp.eq.s32.totalorder %s19, 0
    %p170 = por %p168, %p169
    %p171 = scmp.ne.s32.totalorder %s160, %s163
    %p172 = scmp.eq.s32.totalorder %s24, 3
    %p173 = por %p171, %p172
    %p174 = scmp.ne.s32.totalorder %s163, %s164
    %p175 = scmp.eq.s32.totalorder %s24, 0
    %p176 = por %p174, %p175
    %p177 = scmp.ne.s32.totalorder %s163, %s164
    %p178 = scmp.eq.s32.totalorder %s25, 3
    %p179 = por %p177, %p178
    %p181 = scmp.ne.s32.totalorder %s164, %s180
    %p182 = scmp.eq.s32.totalorder %s25, 0
    %p183 = por %p181, %p182
    %s184 = ssub.s32 %s26, %s45
    %p185 = scmp.eq.s32.totalorder %s184, 0
    %s187 = sadd.s32 %s186, 1
    %s188 = scalar_select %p185, %s186, %s187
    %p191 = pneg %p185
    %p192 = scmp.eq.s32.totalorder %s19, 3
    %p193 = por %p191, %p192
    %p194 = scmp.ne.s32.totalorder %s186, %s189
    %p195 = scmp.eq.s32.totalorder %s19, 0
    %p196 = por %p194, %p195
    %p197 = scmp.ne.s32.totalorder %s186, %s189
    %p198 = scmp.eq.s32.totalorder %s24, 3
    %p199 = por %p197, %p198
    %p200 = scmp.ne.s32.totalorder %s189, %s190
    %p201 = scmp.eq.s32.totalorder %s24, 0
    %p202 = por %p200, %p201
    %p203 = scmp.ne.s32.totalorder %s189, %s190
    %p204 = scmp.eq.s32.totalorder %s25, 3
    %p205 = por %p203, %p204
    %p207 = scmp.ne.s32.totalorder %s190, %s206
    %p208 = scmp.eq.s32.totalorder %s25, 0
    %p209 = por %p207, %p208
    %s210 = ssub.s32 %s26, %s45
    %p211 = scmp.eq.s32.totalorder %s210, 0
    %s213 = sadd.s32 %s212, 1
    %s214 = scalar_select %p211, %s212, %s213
    %p217 = pneg %p211
    %p218 = scmp.eq.s32.totalorder %s19, 3
    %p219 = por %p217, %p218
    %p220 = scmp.ne.s32.totalorder %s212, %s215
    %p221 = scmp.eq.s32.totalorder %s19, 0
    %p222 = por %p220, %p221
    %p223 = scmp.ne.s32.totalorder %s212, %s215
    %p224 = scmp.eq.s32.totalorder %s24, 3
    %p225 = por %p223, %p224
    %p226 = scmp.ne.s32.totalorder %s215, %s216
    %p227 = scmp.eq.s32.totalorder %s24, 0
    %p228 = por %p226, %p227
    %p229 = scmp.ne.s32.totalorder %s215, %s216
    %p230 = scmp.eq.s32.totalorder %s25, 3
    %p231 = por %p229, %p230
    %p233 = scmp.ne.s32.totalorder %s216, %s232
    %p234 = scmp.eq.s32.totalorder %s25, 0
    %p235 = por %p233, %p234
    %s236 = ssub.s32 %s26, %s45
    %p237 = scmp.eq.s32.totalorder %s236, 0
    %s239 = sadd.s32 %s238, 1
    %s240 = scalar_select %p237, %s238, %s239
    %p243 = pneg %p237
    %p244 = scmp.eq.s32.totalorder %s19, 3
    %p245 = por %p243, %p244
    %p246 = scmp.ne.s32.totalorder %s238, %s241
    %p247 = scmp.eq.s32.totalorder %s19, 0
    %p248 = por %p246, %p247
    %p249 = scmp.ne.s32.totalorder %s238, %s241
    %p250 = scmp.eq.s32.totalorder %s24, 3
    %p251 = por %p249, %p250
    %p252 = scmp.ne.s32.totalorder %s241, %s242
    %p253 = scmp.eq.s32.totalorder %s24, 0
    %p254 = por %p252, %p253
    %p255 = scmp.ne.s32.totalorder %s241, %s242
    %p256 = scmp.eq.s32.totalorder %s25, 3
    %p257 = por %p255, %p256
    %p259 = scmp.ne.s32.totalorder %s242, %s258
    %p260 = scmp.eq.s32.totalorder %s25, 0
    %p261 = por %p259, %p260
    %s262 = ssub.s32 %s26, %s45
    %p263 = scmp.eq.s32.totalorder %s262, 0
    %s265 = sadd.s32 %s264, 1
    %s266 = scalar_select %p263, %s264, %s265
    %p269 = pneg %p263
    %p270 = scmp.eq.s32.totalorder %s19, 3
    %p271 = por %p269, %p270
    %p272 = scmp.ne.s32.totalorder %s264, %s267
    %p273 = scmp.eq.s32.totalorder %s19, 0
    %p274 = por %p272, %p273
    %p275 = scmp.ne.s32.totalorder %s264, %s267
    %p276 = scmp.eq.s32.totalorder %s24, 3
    %p277 = por %p275, %p276
    %p278 = scmp.ne.s32.totalorder %s267, %s268
    %p279 = scmp.eq.s32.totalorder %s24, 0
    %p280 = por %p278, %p279
    %p281 = scmp.ne.s32.totalorder %s267, %s268
    %p282 = scmp.eq.s32.totalorder %s25, 3
    %p283 = por %p281, %p282
    %p285 = scmp.ne.s32.totalorder %s268, %s284
    %p286 = scmp.eq.s32.totalorder %s25, 0
    %p287 = por %p285, %p286
    %s288 = ssub.s32 %s26, %s45
    %p289 = scmp.eq.s32.totalorder %s288, 0
    %s291 = sadd.s32 %s290, 1
    %s292 = scalar_select %p289, %s290, %s291
    %p295 = pneg %p289
    %p296 = scmp.eq.s32.totalorder %s19, 3
    %p297 = por %p295, %p296
    %p298 = scmp.ne.s32.totalorder %s290, %s293
    %p299 = scmp.eq.s32.totalorder %s19, 0
    %p300 = por %p298, %p299
    %p301 = scmp.ne.s32.totalorder %s290, %s293
    %p302 = scmp.eq.s32.totalorder %s24, 3
    %p303 = por %p301, %p302
    %p304 = scmp.ne.s32.totalorder %s293, %s294
    %p305 = scmp.eq.s32.totalorder %s24, 0
    %p306 = por %p304, %p305
    %p307 = scmp.ne.s32.totalorder %s293, %s294
    %p308 = scmp.eq.s32.totalorder %s25, 3
    %p309 = por %p307, %p308
    %p311 = scmp.ne.s32.totalorder %s294, %s310
    %p312 = scmp.eq.s32.totalorder %s25, 0
    %p313 = por %p311, %p312
    %s314 = ssub.s32 %s26, %s45
    %p315 = scmp.eq.s32.totalorder %s314, 0
    %s317 = sadd.s32 %s316, 1
    %s318 = scalar_select %p315, %s316, %s317
    %p321 = pneg %p315
    %p322 = scmp.eq.s32.totalorder %s19, 3
    %p323 = por %p321, %p322
    %p324 = scmp.ne.s32.totalorder %s316, %s319
    %p325 = scmp.eq.s32.totalorder %s19, 0
    %p326 = por %p324, %p325
    %p327 = scmp.ne.s32.totalorder %s316, %s319
    %p328 = scmp.eq.s32.totalorder %s24, 3
    %p329 = por %p327, %p328
    %p330 = scmp.ne.s32.totalorder %s319, %s320
    %p331 = scmp.eq.s32.totalorder %s24, 0
    %p332 = por %p330, %p331
    %p333 = scmp.ne.s32.totalorder %s319, %s320
    %p334 = scmp.eq.s32.totalorder %s25, 3
    %p335 = por %p333, %p334
    %p337 = scmp.ne.s32.totalorder %s320, %s336
    %p338 = scmp.eq.s32.totalorder %s25, 0
    %p339 = por %p337, %p338
    %s340 = ssub.s32 %s26, %s45
    %p341 = scmp.eq.s32.totalorder %s340, 0
    %s343 = sadd.s32 %s342, 1
    %s344 = scalar_select %p341, %s342, %s343
    %p347 = pneg %p341
    %p348 = scmp.eq.s32.totalorder %s19, 3
    %p349 = por %p347, %p348
    %p350 = scmp.ne.s32.totalorder %s342, %s345
    %p351 = scmp.eq.s32.totalorder %s19, 0
    %p352 = por %p350, %p351
    %p353 = scmp.ne.s32.totalorder %s342, %s345
    %p354 = scmp.eq.s32.totalorder %s24, 3
    %p355 = por %p353, %p354
    %p356 = scmp.ne.s32.totalorder %s345, %s346
    %p357 = scmp.eq.s32.totalorder %s24, 0
    %p358 = por %p356, %p357
    %p359 = scmp.ne.s32.totalorder %s345, %s346
    %p360 = scmp.eq.s32.totalorder %s25, 3
    %p361 = por %p359, %p360
    %p363 = scmp.ne.s32.totalorder %s346, %s362
    %p364 = scmp.eq.s32.totalorder %s25, 0
    %p365 = por %p363, %p364
    %s366 = ssub.s32 %s26, %s45
    %p367 = scmp.eq.s32.totalorder %s366, 0
    %s369 = sadd.s32 %s368, 1
    %s370 = scalar_select %p367, %s368, %s369
    %p373 = pneg %p367
    %p374 = scmp.eq.s32.totalorder %s19, 3
    %p375 = por %p373, %p374
    %p376 = scmp.ne.s32.totalorder %s368, %s371
    %p377 = scmp.eq.s32.totalorder %s19, 0
    %p378 = por %p376, %p377
    %p379 = scmp.ne.s32.totalorder %s368, %s371
    %p380 = scmp.eq.s32.totalorder %s24, 3
    %p381 = por %p379, %p380
    %p382 = scmp.ne.s32.totalorder %s371, %s372
    %p383 = scmp.eq.s32.totalorder %s24, 0
    %p384 = por %p382, %p383
    %p385 = scmp.ne.s32.totalorder %s371, %s372
    %p386 = scmp.eq.s32.totalorder %s25, 3
    %p387 = por %p385, %p386
    %p389 = scmp.ne.s32.totalorder %s372, %s388
    %p390 = scmp.eq.s32.totalorder %s25, 0
    %p391 = por %p389, %p390
    %s392 = ssub.s32 %s26, %s45
    %s393 = ssub.s32 %s27, %s41
    %s394 = sor.u32 %s392, %s393
    %s395 = ssub.s32 %s28, %s37
    %s396 = sor.u32 %s394, %s395
    %p397 = scmp.eq.s32.totalorder %s396, 0
    %s399 = sadd.s32 %s398, 1
    %s400 = scalar_select %p397, %s398, %s399
    %p403 = pneg %p397
    %p404 = scmp.eq.s32.totalorder %s19, 3
    %p405 = por %p403, %p404
    %p406 = scmp.ne.s32.totalorder %s398, %s401
    %p407 = scmp.eq.s32.totalorder %s19, 0
    %p408 = por %p406, %p407
    %p409 = scmp.ne.s32.totalorder %s398, %s401
    %p410 = scmp.eq.s32.totalorder %s24, 3
    %p411 = por %p409, %p410
    %p412 = scmp.ne.s32.totalorder %s401, %s402
    %p413 = scmp.eq.s32.totalorder %s24, 0
    %p414 = por %p412, %p413
    %p415 = scmp.ne.s32.totalorder %s401, %s402
    %p416 = scmp.eq.s32.totalorder %s25, 3
    %p417 = por %p415, %p416
    %p419 = scmp.ne.s32.totalorder %s402, %s418
    %p420 = scmp.eq.s32.totalorder %s25, 0
    %p421 = por %p419, %p420
    %p422 = scmp.le.s32.totalorder 1, %s19
    %p423 = scmp.lt.s32.totalorder %s19, 5
    %p424 = pnand %p422, %p423
    %p425 = pneg %p424
    // Predicated region
    $region9: #{decoder_forward.3} parent=5 // pred_check
      _
    $region10: #{decoder_forward.3} parent=5 // pred_check_branch
      %427 = sbr.rel (%p424) target = $region12
    $region11: #{decoder_forward.3} parent=5 // pred_region
      %s428 = ssub.s32 %s19, 1
    $region12: #{decoder_forward.3} parent=5 // pred_fallthru
      _
    %p429 = scmp.lt.s32.totalorder %s19, 4
    // Predicated region
    $region13: #{decoder_forward.3} parent=5 // pred_check
      %p430 = pneg %p429
    $region14: #{decoder_forward.3} parent=5 // pred_check_branch
      %432 = sbr.rel (%p430) target = $region16
    $region15: #{decoder_forward.3} parent=5 // pred_region
      // Predicated region
      $region17: #{decoder_forward.3} parent=15 // pred_check
        %p433 = pneg %p62
      $region18: #{decoder_forward.3} parent=15 // pred_check_branch
        %435 = sbr.rel (%p433) target = $region20
      $region19: #{decoder_forward.3} parent=15 // pred_region
        %s436 = smul.u32 4, %s28
        %p437 = scmp.lt.s32.totalorder %s26, 1
        %s438 = scalar_select %p437, %s26, 1
        %p439 = scmp.lt.s32.totalorder %s27, 1
        %s440 = scalar_select %p439, %s27, 1
        %p441 = scmp.lt.s32.totalorder %s436, 3
        %s442 = scalar_select %p441, %s436, 3
        %s443 = smul.addr %s440, 4
        %s444 = sadd.s32 %s442, %s443
        %s445 = smul.addr %s438, 8
        %s446 = sadd.s32 %s444, %s445
        %s447 = smul.addr %s446, 8
        %s448 = scalar_lea.vmem %s0, %s447
        %s449 = smul.u32 4, %s28
      $region20: #{decoder_forward.3} parent=15 // pred_fallthru
        _
      // Predicated region
      $region21: #{decoder_forward.3} parent=15 // pred_check
        %p450 = pneg %p92
      $region22: #{decoder_forward.3} parent=15 // pred_check_branch
        %452 = sbr.rel (%p450) target = $region24
      $region23: #{decoder_forward.3} parent=15 // pred_region
        %s453 = smul.u32 4, %s28
        %p454 = scmp.lt.s32.totalorder %s26, 1
        %s455 = scalar_select %p454, %s26, 1
        %p456 = scmp.lt.s32.totalorder %s27, 1
        %s457 = scalar_select %p456, %s27, 1
        %p458 = scmp.lt.s32.totalorder %s453, 3
        %s459 = scalar_select %p458, %s453, 3
        %s460 = smul.addr %s457, 4
        %s461 = sadd.s32 %s459, %s460
        %s462 = smul.addr %s455, 8
        %s463 = sadd.s32 %s461, %s462
        %s464 = smul.addr %s463, 8
        %s465 = scalar_lea.vmem %s1, %s464
        %s466 = smul.u32 4, %s28
      $region24: #{decoder_forward.3} parent=15 // pred_fallthru
        _
      // Predicated region
      $region25: #{decoder_forward.3} parent=15 // pred_check
        %p467 = pneg %p118
      $region26: #{decoder_forward.3} parent=15 // pred_check_branch
        %469 = sbr.rel (%p467) target = $region28
      $region27: #{decoder_forward.3} parent=15 // pred_region
        %p470 = scmp.lt.s32.totalorder %s27, 1
        %s471 = scalar_select %p470, %s27, 1
        %s472 = smul.addr %s471, 4
        %s473 = smul.addr %s472, 8
        %s474 = scalar_lea.vmem %s2, %s473
      $region28: #{decoder_forward.3} parent=15 // pred_fallthru
        _
      // Predicated region
      $region29: #{decoder_forward.3} parent=15 // pred_check
        %p475 = pneg %p144
      $region30: #{decoder_forward.3} parent=15 // pred_check_branch
        %477 = sbr.rel (%p475) target = $region32
      $region31: #{decoder_forward.3} parent=15 // pred_region
        %p478 = scmp.lt.s32.totalorder %s26, 1
        %s479 = scalar_select %p478, %s26, 1
        %s480 = smul.addr %s479, 12
        %s481 = smul.addr %s480, 8
        %s482 = scalar_lea.vmem %s3, %s481
      $region32: #{decoder_forward.3} parent=15 // pred_fallthru
        _
      // Predicated region
      $region33: #{decoder_forward.3} parent=15 // pred_check
        %p483 = pneg %p170
      $region34: #{decoder_forward.3} parent=15 // pred_check_branch
        %485 = sbr.rel (%p483) target = $region36
      $region35: #{decoder_forward.3} parent=15 // pred_region
        %p486 = scmp.lt.s32.totalorder %s26, 1
        %s487 = scalar_select %p486, %s26, 1
        %s488 = scalar_lea.vmem %s4, %s487
      $region36: #{decoder_forward.3} parent=15 // pred_fallthru
        _
      // Predicated region
      $region37: #{decoder_forward.3} parent=15 // pred_check
        %p489 = pneg %p196
      $region38: #{decoder_forward.3} parent=15 // pred_check_branch
        %491 = sbr.rel (%p489) target = $region40
      $region39: #{decoder_forward.3} parent=15 // pred_region
        %p492 = scmp.lt.s32.totalorder %s26, 1
        %s493 = scalar_select %p492, %s26, 1
        %s494 = smul.addr %s493, 12
        %s495 = smul.addr %s494, 8
        %s496 = scalar_lea.vmem %s5, %s495
      $region40: #{decoder_forward.3} parent=15 // pred_fallthru
        _
      // Predicated region
      $region41: #{decoder_forward.3} parent=15 // pred_check
        %p497 = pneg %p222
      $region42: #{decoder_forward.3} parent=15 // pred_check_branch
        %499 = sbr.rel (%p497) target = $region44
      $region43: #{decoder_forward.3} parent=15 // pred_region
        %p500 = scmp.lt.s32.totalorder %s26, 1
        %s501 = scalar_select %p500, %s26, 1
        %s502 = scalar_lea.vmem %s6, %s501
      $region44: #{decoder_forward.3} parent=15 // pred_fallthru
        _
      // Predicated region
      $region45: #{decoder_forward.3} parent=15 // pred_check
        %p503 = pneg %p248
      $region46: #{decoder_forward.3} parent=15 // pred_check_branch
        %505 = sbr.rel (%p503) target = $region48
      $region47: #{decoder_forward.3} parent=15 // pred_region
        %p506 = scmp.lt.s32.totalorder %s26, 1
        %s507 = scalar_select %p506, %s26, 1
        %s508 = smul.addr %s507, 4
        %s509 = smul.addr %s508, 8
        %s510 = scalar_lea.vmem %s7, %s509
      $region48: #{decoder_forward.3} parent=15 // pred_fallthru
        _
      // Predicated region
      $region49: #{decoder_forward.3} parent=15 // pred_check
        %p511 = pneg %p274
      $region50: #{decoder_forward.3} parent=15 // pred_check_branch
        %513 = sbr.rel (%p511) target = $region52
      $region51: #{decoder_forward.3} parent=15 // pred_region
        %p514 = scmp.lt.s32.totalorder %s26, 1
        %s515 = scalar_select %p514, %s26, 1
        %s516 = scalar_lea.vmem %s8, %s515
      $region52: #{decoder_forward.3} parent=15 // pred_fallthru
        _
      // Predicated region
      $region53: #{decoder_forward.3} parent=15 // pred_check
        %p517 = pneg %p300
      $region54: #{decoder_forward.3} parent=15 // pred_check_branch
        %519 = sbr.rel (%p517) target = $region56
      $region55: #{decoder_forward.3} parent=15 // pred_region
        %p520 = scmp.lt.s32.totalorder %s26, 1
        %s521 = scalar_select %p520, %s26, 1
        %s522 = smul.addr %s521, 4
        %s523 = smul.addr %s522, 8
        %s524 = scalar_lea.vmem %s9, %s523
      $region56: #{decoder_forward.3} parent=15 // pred_fallthru
        _
      // Predicated region
      $region57: #{decoder_forward.3} parent=15 // pred_check
        %p525 = pneg %p326
      $region58: #{decoder_forward.3} parent=15 // pred_check_branch
        %527 = sbr.rel (%p525) target = $region60
      $region59: #{decoder_forward.3} parent=15 // pred_region
        %p528 = scmp.lt.s32.totalorder %s26, 1
        %s529 = scalar_select %p528, %s26, 1
        %s530 = scalar_lea.vmem %s10, %s529
      $region60: #{decoder_forward.3} parent=15 // pred_fallthru
        _
      // Predicated region
      $region61: #{decoder_forward.3} parent=15 // pred_check
        %p531 = pneg %p352
      $region62: #{decoder_forward.3} parent=15 // pred_check_branch
        %533 = sbr.rel (%p531) target = $region64
      $region63: #{decoder_forward.3} parent=15 // pred_region
        %p534 = scmp.lt.s32.totalorder %s26, 1
        %s535 = scalar_select %p534, %s26, 1
        %s536 = scalar_lea.vmem %s11, %s535
      $region64: #{decoder_forward.3} parent=15 // pred_fallthru
        _
      // Predicated region
      $region65: #{decoder_forward.3} parent=15 // pred_check
        %p537 = pneg %p378
      $region66: #{decoder_forward.3} parent=15 // pred_check_branch
        %539 = sbr.rel (%p537) target = $region68
      $region67: #{decoder_forward.3} parent=15 // pred_region
        %p540 = scmp.lt.s32.totalorder %s26, 1
        %s541 = scalar_select %p540, %s26, 1
        %s542 = scalar_lea.vmem %s12, %s541
      $region68: #{decoder_forward.3} parent=15 // pred_fallthru
        _
    $region16: #{decoder_forward.3} parent=5 // pred_fallthru
      _
    %p543 = scmp.le.s32.totalorder 1, %s19
    %p544 = scmp.lt.s32.totalorder %s19, 5
    %p545 = pnand %p543, %p544
    %p546 = pneg %p545
    // Predicated region
    $region69: #{decoder_forward.3} parent=5 // pred_check
      _
    $region70: #{decoder_forward.3} parent=5 // pred_check_branch
      %548 = sbr.rel (%p545) target = $region72
    $region71: #{decoder_forward.3} parent=5 // pred_region
      %s549 = ssub.s32 %s19, 1
      %s550 = smul.u32 4, %s31
      %p551 = scmp.lt.s32.totalorder %s29, 1
      %s552 = scalar_select %p551, %s29, 1
      %p553 = scmp.lt.s32.totalorder %s30, 1
      %s554 = scalar_select %p553, %s30, 1
      %p555 = scmp.lt.s32.totalorder %s550, 3
      %s556 = scalar_select %p555, %s550, 3
      %s557 = smul.addr %s554, 4
      %s558 = sadd.s32 %s556, %s557
      %s559 = smul.addr %s552, 8
      %s560 = sadd.s32 %s558, %s559
      %s561 = smul.addr %s560, 8
      %s562 = scalar_lea.vmem %s0, %s561
      %p563 = pneg %p68
      %p564 = pneg %p65
      %s565 = smul.u32 4, %s31
      %p566 = scmp.lt.s32.totalorder %s29, 1
      %s567 = scalar_select %p566, %s29, 1
      %p568 = scmp.lt.s32.totalorder %s30, 1
      %s569 = scalar_select %p568, %s30, 1
      %p570 = scmp.lt.s32.totalorder %s565, 3
      %s571 = scalar_select %p570, %s565, 3
      %s572 = smul.addr %s569, 4
      %s573 = sadd.s32 %s571, %s572
      %s574 = smul.addr %s567, 8
      %s575 = sadd.s32 %s573, %s574
      %s576 = smul.addr %s575, 8
      %s577 = scalar_lea.vmem %s1, %s576
      %p578 = pneg %p98
      %p579 = pneg %p95
      %p580 = scmp.lt.s32.totalorder %s30, 1
      %s581 = scalar_select %p580, %s30, 1
      %s582 = smul.addr %s581, 4
      %s583 = smul.addr %s582, 8
      %s584 = scalar_lea.vmem %s2, %s583
      %p585 = pneg %p124
      %p586 = pneg %p121
      %p587 = scmp.lt.s32.totalorder %s29, 1
      %s588 = scalar_select %p587, %s29, 1
      %s589 = smul.addr %s588, 12
      %s590 = smul.addr %s589, 8
      %s591 = scalar_lea.vmem %s3, %s590
      %p592 = pneg %p150
      %p593 = pneg %p147
      %p594 = scmp.lt.s32.totalorder %s29, 1
      %s595 = scalar_select %p594, %s29, 1
      %s596 = scalar_lea.vmem %s4, %s595
      %p597 = pneg %p176
      %p598 = pneg %p173
      %p599 = scmp.lt.s32.totalorder %s29, 1
      %s600 = scalar_select %p599, %s29, 1
      %s601 = smul.addr %s600, 12
      %s602 = smul.addr %s601, 8
      %s603 = scalar_lea.vmem %s5, %s602
      %p604 = pneg %p202
      %p605 = pneg %p199
      %p606 = scmp.lt.s32.totalorder %s29, 1
      %s607 = scalar_select %p606, %s29, 1
      %s608 = scalar_lea.vmem %s6, %s607
      %p609 = pneg %p228
      %p610 = pneg %p225
      %p611 = scmp.lt.s32.totalorder %s29, 1
      %s612 = scalar_select %p611, %s29, 1
      %s613 = smul.addr %s612, 4
      %s614 = smul.addr %s613, 8
      %s615 = scalar_lea.vmem %s7, %s614
      %p616 = pneg %p254
      %p617 = pneg %p251
      %p618 = scmp.lt.s32.totalorder %s29, 1
      %s619 = scalar_select %p618, %s29, 1
      %s620 = scalar_lea.vmem %s8, %s619
      %p621 = pneg %p280
      %p622 = pneg %p277
      %p623 = scmp.lt.s32.totalorder %s29, 1
      %s624 = scalar_select %p623, %s29, 1
      %s625 = smul.addr %s624, 4
      %s626 = smul.addr %s625, 8
      %s627 = scalar_lea.vmem %s9, %s626
      %p628 = pneg %p306
      %p629 = pneg %p303
      %p630 = scmp.lt.s32.totalorder %s29, 1
      %s631 = scalar_select %p630, %s29, 1
      %s632 = scalar_lea.vmem %s10, %s631
      %p633 = pneg %p332
      %p634 = pneg %p329
      %p635 = scmp.lt.s32.totalorder %s29, 1
      %s636 = scalar_select %p635, %s29, 1
      %s637 = scalar_lea.vmem %s11, %s636
      %p638 = pneg %p358
      %p639 = pneg %p355
      %p640 = scmp.lt.s32.totalorder %s29, 1
      %s641 = scalar_select %p640, %s29, 1
      %s642 = scalar_lea.vmem %s12, %s641
      %p643 = pneg %p384
      %p644 = pneg %p381
      %p645 = pneg %p414
      %p646 = pneg %p411
      %s647 = smul.u32 4, %s31
      %p648 = scmp.lt.s32.totalorder %s29, 1
      %s649 = scalar_select %p648, %s29, 1
      %p650 = scmp.lt.s32.totalorder %s30, 1
      %s651 = scalar_select %p650, %s30, 1
      %p652 = scmp.lt.s32.totalorder %s647, 3
      %s653 = scalar_select %p652, %s647, 3
      %s654 = smul.addr %s651, 4
      %s655 = sadd.s32 %s653, %s654
      %s656 = smul.addr %s649, 8
      %s657 = sadd.s32 %s655, %s656
      %s658 = smul.addr %s657, 8
      %s659 = scalar_lea.vmem %s13, %s658
      %s660 = smul.u32 4, %s31
      %p661 = scmp.lt.s32.totalorder %s29, 1
      %s662 = scalar_select %p661, %s29, 1
      %p663 = scmp.lt.s32.totalorder %s30, 1
      %s664 = scalar_select %p663, %s30, 1
      %p665 = scmp.lt.s32.totalorder %s660, 3
      %s666 = scalar_select %p665, %s660, 3
      %s667 = smul.addr %s664, 4
      %s668 = sadd.s32 %s666, %s667
      %s669 = smul.addr %s662, 8
      %s670 = sadd.s32 %s668, %s669
      %s671 = smul.addr %s670, 8
      %s672 = scalar_lea.vmem %s0, %s671
      %s673 = smul.u32 4, %s31
      %s674 = smul.u32 4, %s31
      %p675 = scmp.lt.s32.totalorder %s29, 1
      %s676 = scalar_select %p675, %s29, 1
      %p677 = scmp.lt.s32.totalorder %s30, 1
      %s678 = scalar_select %p677, %s30, 1
      %p679 = scmp.lt.s32.totalorder %s674, 3
      %s680 = scalar_select %p679, %s674, 3
      %s681 = smul.addr %s678, 4
      %s682 = sadd.s32 %s680, %s681
      %s683 = smul.addr %s676, 8
      %s684 = sadd.s32 %s682, %s683
      %s685 = smul.addr %s684, 8
      %s686 = scalar_lea.vmem %s1, %s685
      %s687 = smul.u32 4, %s31
      %p688 = scmp.lt.s32.totalorder %s30, 1
      %s689 = scalar_select %p688, %s30, 1
      %s690 = smul.addr %s689, 4
      %s691 = smul.addr %s690, 8
      %s692 = scalar_lea.vmem %s2, %s691
      %p693 = scmp.lt.s32.totalorder %s29, 1
      %s694 = scalar_select %p693, %s29, 1
      %s695 = smul.addr %s694, 12
      %s696 = smul.addr %s695, 8
      %s697 = scalar_lea.vmem %s3, %s696
      %p698 = scmp.lt.s32.totalorder %s29, 1
      %s699 = scalar_select %p698, %s29, 1
      %s700 = scalar_lea.vmem %s4, %s699
      %p701 = scmp.lt.s32.totalorder %s29, 1
      %s702 = scalar_select %p701, %s29, 1
      %s703 = smul.addr %s702, 12
      %s704 = smul.addr %s703, 8
      %s705 = scalar_lea.vmem %s5, %s704
      %p706 = scmp.lt.s32.totalorder %s29, 1
      %s707 = scalar_select %p706, %s29, 1
      %s708 = scalar_lea.vmem %s6, %s707
      %p709 = scmp.lt.s32.totalorder %s29, 1
      %s710 = scalar_select %p709, %s29, 1
      %s711 = smul.addr %s710, 4
      %s712 = smul.addr %s711, 8
      %s713 = scalar_lea.vmem %s7, %s712
      %p714 = scmp.lt.s32.totalorder %s29, 1
      %s715 = scalar_select %p714, %s29, 1
      %s716 = scalar_lea.vmem %s8, %s715
      %p717 = scmp.lt.s32.totalorder %s29, 1
      %s718 = scalar_select %p717, %s29, 1
      %s719 = smul.addr %s718, 4
      %s720 = smul.addr %s719, 8
      %s721 = scalar_lea.vmem %s9, %s720
      %p722 = scmp.lt.s32.totalorder %s29, 1
      %s723 = scalar_select %p722, %s29, 1
      %s724 = scalar_lea.vmem %s10, %s723
      %p725 = scmp.lt.s32.totalorder %s29, 1
      %s726 = scalar_select %p725, %s29, 1
      %s727 = scalar_lea.vmem %s11, %s726
      %p728 = scmp.lt.s32.totalorder %s29, 1
      %s729 = scalar_select %p728, %s29, 1
      %s730 = scalar_lea.vmem %s12, %s729
      %s731 = smul.u32 4, %s31
      %p732 = scmp.lt.s32.totalorder %s29, 1
      %s733 = scalar_select %p732, %s29, 1
      %p734 = scmp.lt.s32.totalorder %s30, 1
      %s735 = scalar_select %p734, %s30, 1
      %p736 = scmp.lt.s32.totalorder %s731, 3
      %s737 = scalar_select %p736, %s731, 3
      %s738 = smul.addr %s735, 4
      %s739 = sadd.s32 %s737, %s738
      %s740 = smul.addr %s733, 8
      %s741 = sadd.s32 %s739, %s740
      %s742 = smul.addr %s741, 8
      %s743 = scalar_lea.vmem %s13, %s742
      %s744 = smul.u32 4, %s31
      %v745 = vld [vmem:[%s672] sm:$0xff]
      %v746 = vld [vmem:[%s672 + $0x8] sm:$0xff]
      %v747 = vld [vmem:[%s672 + $0x10] sm:$0xff]
      %v748 = vld [vmem:[%s672 + $0x18] sm:$0xff]
      %v749 = vld [vmem:[%s686] sm:$0xff]
      %v750 = vld [vmem:[%s686 + $0x8] sm:$0xff]
      %v751 = vld [vmem:[%s686 + $0x10] sm:$0xff]
      %v752 = vld [vmem:[%s686 + $0x18] sm:$0xff]
      %v753 = vld [vmem:[%s692] sm:$0xff]
      %v754 = vld [vmem:[%s692 + $0x8] sm:$0xff]
      %v755 = vld [vmem:[%s692 + $0x10] sm:$0xff]
      %v756 = vld [vmem:[%s692 + $0x18] sm:$0xff]
      %v761 = vrot.slane %v745, 6
      %v762 = vrot.slane %v746, 6
      %v763 = vrot.slane %v747, 6
      %v764 = vrot.slane %v748, 6
      %vm769 = vcmask 1041408
      %v770 = vsel %vm769, 0.0, %v761
      %v771 = vsel %vm769, 0.0, %v762
      %v772 = vsel %vm769, 0.0, %v763
      %v773 = vsel %vm769, 0.0, %v764
      %v774 = vrot.slane %v745, 7
      %v775 = vrot.slane %v746, 7
      %v776 = vrot.slane %v747, 7
      %v777 = vrot.slane %v748, 7
      %vm782 = vcmask 1040384
      %v783 = vsel %vm782, 0.0, %v774
      %v784 = vsel %vm782, 0.0, %v775
      %v785 = vsel %vm782, 0.0, %v776
      %v786 = vsel %vm782, 0.0, %v777
      %791 = vrot.lane.b32.xlu0 %v783, 32
      %v792 = vpop.permute.xlu0 %791
      %793 = vrot.lane.b32.xlu0 %v784, 32
      %v794 = vpop.permute.xlu0 %793
      %795 = vrot.lane.b32.xlu0 %v785, 32
      %v796 = vpop.permute.xlu0 %795
      %797 = vrot.lane.b32.xlu0 %v786, 32
      %v798 = vpop.permute.xlu0 %797
      %803 = vrot.lane.b32.xlu0 %v745, 64
      %v804 = vpop.permute.xlu0 %803
      %805 = vrot.lane.b32.xlu0 %v746, 64
      %v806 = vpop.permute.xlu0 %805
      %807 = vrot.lane.b32.xlu0 %v747, 64
      %v808 = vpop.permute.xlu0 %807
      %809 = vrot.lane.b32.xlu0 %v748, 64
      %v810 = vpop.permute.xlu0 %809
      %vm815 = vcmask 261120
      %v816 = vsel %vm815, %v770, %v792
      %v817 = vsel %vm815, %v771, %v794
      %v818 = vsel %vm815, %v772, %v796
      %v819 = vsel %vm815, %v773, %v798
      %vm820 = vcmask 523264
      %v821 = vsel %vm820, %v816, %v804
      %v822 = vsel %vm820, %v817, %v806
      %v823 = vsel %vm820, %v818, %v808
      %v824 = vsel %vm820, %v819, %v810
      %v825 = vld [vmem:[%s697] sm:$0xff]
      %v826 = vld [vmem:[%s697 + $0x8] sm:$0xff]
      %v827 = vld [vmem:[%s697 + $0x10] sm:$0xff]
      %v828 = vld [vmem:[%s697 + $0x18] sm:$0xff]
      %v829 = vld [vmem:[%s697 + $0x20] sm:$0xff]
      %v830 = vld [vmem:[%s697 + $0x28] sm:$0xff]
      %v831 = vld [vmem:[%s697 + $0x30] sm:$0xff]
      %v832 = vld [vmem:[%s697 + $0x38] sm:$0xff]
      %v833 = vld [vmem:[%s697 + $0x40] sm:$0xff]
      %v834 = vld [vmem:[%s697 + $0x48] sm:$0xff]
      %v835 = vld [vmem:[%s697 + $0x50] sm:$0xff]
      %v836 = vld [vmem:[%s697 + $0x58] sm:$0xff]
      %v837 = vld [vmem:[%s700] sm:$0x1]
      %v839 = vlaneseq
      %v840 = vshrl.u32 %v839, 7
      %v841 = vsub.s32 0, %v840
      %v842 = vrot.slane %v837, %v841
      %vm844 = vcmask 785408
      %v846 = vsel %vm844, %v821, 0
      %v849 = vsel %vm844, %v822, 0
      %v852 = vsel %vm844, %v823, 0
      %v855 = vsel %vm844, %v824, 0
      %857 = vmatprep.subr.mxu0 0.0
      %858 = vmatpush1.msra.mxu0 %v825
      %859 = vmatprep.subr.mxu0 0.0
      %860 = vmatpush1.msra.mxu0 %v826
      %861 = vmatprep.subr.mxu0 0.0
      %862 = vmatpush1.msra.mxu0 %v827
      %863 = vmatprep.subr.mxu0 0.0
      %864 = vmatpush1.msra.mxu0 %v828
      %865 = vmatprep.subr.mxu0 0.0
      %866 = vmatpush1.msra.mxu0 %v829
      %867 = vmatprep.subr.mxu0 0.0
      %868 = vmatpush1.msra.mxu0 %v830
      %869 = vmatprep.subr.mxu0 0.0
      %870 = vmatpush1.msra.mxu0 %v831
      %871 = vmatprep.subr.mxu0 0.0
      %872 = vmatpush1.msra.mxu0 %v832
      %873 = vmatprep.subr.mxu0 0.0
      %874 = vmatpush1.msra.mxu0 %v833
      %875 = vmatprep.subr.mxu0 0.0
      %876 = vmatpush1.msra.mxu0 %v834
      %877 = vmatprep.subr.mxu0 0.0
      %878 = vmatpush1.msra.mxu0 %v835
      %879 = vmatprep.subr.mxu0 0.0
      %880 = vmatpush1.msra.mxu0 %v836
      %881 = vmatprep.subr.mxu0 0.0
      %882 = vmatpush1.msra.mxu0 0.0
      %883 = vmatprep.subr.mxu0 0.0
      %884 = vmatpush1.msra.mxu0 0.0
      %885 = vmatprep.subr.mxu0 0.0
      %886 = vmatpush1.msra.mxu0 0.0
      %887 = vmatprep.subr.mxu0 0.0
      %888 = vmatpush1.msra.mxu0 0.0
      %889 = vmatprep.subr.mxu0 0.0
      %890 = vmatpush1.msra.mxu0 0.0
      %891 = vmatprep.subr.mxu0 0.0
      %892 = vmatpush1.msra.mxu0 0.0
      %893 = vmatprep.subr.mxu0 0.0
      %894 = vmatpush1.msra.mxu0 0.0
      %895 = vmatprep.subr.mxu0 0.0
      %896 = vmatpush1.msra.mxu0 0.0
      %897 = vmatprep.subr.mxu0 0.0
      %898 = vmatpush1.msra.mxu0 0.0
      %899 = vmatprep.subr.mxu0 0.0
      %900 = vmatpush1.msra.mxu0 0.0
      %901 = vmatprep.subr.mxu0 0.0
      %902 = vmatpush1.msra.mxu0 0.0
      %903 = vmatprep.subr.mxu0 0.0
      %904 = vmatpush1.msra.mxu0 0.0
      %905 = vmatprep.subr.mxu0 0.0
      %906 = vmatpush1.msra.mxu0 0.0
      %907 = vmatprep.subr.mxu0 0.0
      %908 = vmatpush1.msra.mxu0 0.0
      %909 = vmatprep.subr.mxu0 0.0
      %910 = vmatpush1.msra.mxu0 0.0
      %911 = vmatprep.subr.mxu0 0.0
      %912 = vmatpush1.msra.mxu0 0.0
      %913 = vmatprep.subr.mxu0 0.0
      %914 = vmatpush1.msra.mxu0 0.0
      %915 = vmatprep.subr.mxu0 0.0
      %916 = vmatpush1.msra.mxu0 0.0
      %917 = vmatprep.subr.mxu0 0.0
      %918 = vmatpush1.msra.mxu0 0.0
      %919 = vmatprep.subr.mxu0 0.0
      %920 = vmatpush1.msra.mxu0 0.0
      %921 = vmatprep.mubr.f32.mxu0 0.0
      %922 = vmatmul.mubr.f32.gmra.mrb[0].mxu0 %v846
      %v923 = vpop.f32.mrb[0].mxu0
      %v924 = vadd.f32 %v842, %v923
      %v925 = vpop.f32.mrb[0].mxu0
      %926 = vmatprep.mubr.f32.mxu0 0.0
      %927 = vmatmul.mubr.f32.gmra.mrb[0].mxu0 %v849
      %v928 = vpop.f32.mrb[0].mxu0
      %v929 = vadd.f32 %v842, %v928
      %v930 = vpop.f32.mrb[0].mxu0
      %931 = vmatprep.mubr.f32.mxu0 0.0
      %932 = vmatmul.mubr.f32.gmra.mrb[0].mxu0 %v852
      %v933 = vpop.f32.mrb[0].mxu0
      %v934 = vadd.f32 %v842, %v933
      %v935 = vpop.f32.mrb[0].mxu0
      %936 = vmatprep.mubr.f32.mxu0 0.0
      %937 = vmatmul.mubr.f32.gmra.mrb[0].mxu0 %v855
      %v938 = vpop.f32.mrb[0].mxu0
      %v939 = vadd.f32 %v842, %v938
      %v940 = vpop.f32.mrb[0].mxu0
      %941 = vdwg.mxu0
      %v946 = vrot.slane %v749, 6
      %v947 = vrot.slane %v750, 6
      %v948 = vrot.slane %v751, 6
      %v949 = vrot.slane %v752, 6
      %v954 = vsel %vm769, 0.0, %v946
      %v955 = vsel %vm769, 0.0, %v947
      %v956 = vsel %vm769, 0.0, %v948
      %v957 = vsel %vm769, 0.0, %v949
      %v958 = vrot.slane %v749, 7
      %v959 = vrot.slane %v750, 7
      %v960 = vrot.slane %v751, 7
      %v961 = vrot.slane %v752, 7
      %v966 = vsel %vm782, 0.0, %v958
      %v967 = vsel %vm782, 0.0, %v959
      %v968 = vsel %vm782, 0.0, %v960
      %v969 = vsel %vm782, 0.0, %v961
      %974 = vrot.lane.b32.xlu0 %v966, 32
      %v975 = vpop.permute.xlu0 %974
      %976 = vrot.lane.b32.xlu0 %v967, 32
      %v977 = vpop.permute.xlu0 %976
      %978 = vrot.lane.b32.xlu0 %v968, 32
      %v979 = vpop.permute.xlu0 %978
      %980 = vrot.lane.b32.xlu0 %v969, 32
      %v981 = vpop.permute.xlu0 %980
      %986 = vrot.lane.b32.xlu0 %v749, 64
      %v987 = vpop.permute.xlu0 %986
      %988 = vrot.lane.b32.xlu0 %v750, 64
      %v989 = vpop.permute.xlu0 %988
      %990 = vrot.lane.b32.xlu0 %v751, 64
      %v991 = vpop.permute.xlu0 %990
      %992 = vrot.lane.b32.xlu0 %v752, 64
      %v993 = vpop.permute.xlu0 %992
      %v998 = vsel %vm815, %v954, %v975
      %v999 = vsel %vm815, %v955, %v977
      %v1000 = vsel %vm815, %v956, %v979
      %v1001 = vsel %vm815, %v957, %v981
      %v1002 = vsel %vm820, %v998, %v987
      %v1003 = vsel %vm820, %v999, %v989
      %v1004 = vsel %vm820, %v1000, %v991
      %v1005 = vsel %vm820, %v1001, %v993
      %v1006 = vld [vmem:[%s705] sm:$0xff]
      %v1007 = vld [vmem:[%s705 + $0x8] sm:$0xff]
      %v1008 = vld [vmem:[%s705 + $0x10] sm:$0xff]
      %v1009 = vld [vmem:[%s705 + $0x18] sm:$0xff]
      %v1010 = vld [vmem:[%s705 + $0x20] sm:$0xff]
      %v1011 = vld [vmem:[%s705 + $0x28] sm:$0xff]
      %v1012 = vld [vmem:[%s705 + $0x30] sm:$0xff]
      %v1013 = vld [vmem:[%s705 + $0x38] sm:$0xff]
      %v1014 = vld [vmem:[%s705 + $0x40] sm:$0xff]
      %v1015 = vld [vmem:[%s705 + $0x48] sm:$0xff]
      %v1016 = vld [vmem:[%s705 + $0x50] sm:$0xff]
      %v1017 = vld [vmem:[%s705 + $0x58] sm:$0xff]
      %v1018 = vld [vmem:[%s708] sm:$0x1]
      %v1020 = vlaneseq
      %v1021 = vshrl.u32 %v1020, 7
      %v1022 = vsub.s32 0, %v1021
      %v1023 = vrot.slane %v1018, %v1022
      %v1026 = vsel %vm844, %v1002, 0
      %v1029 = vsel %vm844, %v1003, 0
      %v1032 = vsel %vm844, %v1004, 0
      %v1035 = vsel %vm844, %v1005, 0
      %1037 = vmatprep.subr.mxu0 0.0
      %1038 = vmatpush1.msra.mxu0 %v1006
      %1039 = vmatprep.subr.mxu0 0.0
      %1040 = vmatpush1.msra.mxu0 %v1007
      %1041 = vmatprep.subr.mxu0 0.0
      %1042 = vmatpush1.msra.mxu0 %v1008
      %1043 = vmatprep.subr.mxu0 0.0
      %1044 = vmatpush1.msra.mxu0 %v1009
      %1045 = vmatprep.subr.mxu0 0.0
      %1046 = vmatpush1.msra.mxu0 %v1010
      %1047 = vmatprep.subr.mxu0 0.0
      %1048 = vmatpush1.msra.mxu0 %v1011
      %1049 = vmatprep.subr.mxu0 0.0
      %1050 = vmatpush1.msra.mxu0 %v1012
      %1051 = vmatprep.subr.mxu0 0.0
      %1052 = vmatpush1.msra.mxu0 %v1013
      %1053 = vmatprep.subr.mxu0 0.0
      %1054 = vmatpush1.msra.mxu0 %v1014
      %1055 = vmatprep.subr.mxu0 0.0
      %1056 = vmatpush1.msra.mxu0 %v1015
      %1057 = vmatprep.subr.mxu0 0.0
      %1058 = vmatpush1.msra.mxu0 %v1016
      %1059 = vmatprep.subr.mxu0 0.0
      %1060 = vmatpush1.msra.mxu0 %v1017
      %1061 = vmatprep.subr.mxu0 0.0
      %1062 = vmatpush1.msra.mxu0 0.0
      %1063 = vmatprep.subr.mxu0 0.0
      %1064 = vmatpush1.msra.mxu0 0.0
      %1065 = vmatprep.subr.mxu0 0.0
      %1066 = vmatpush1.msra.mxu0 0.0
      %1067 = vmatprep.subr.mxu0 0.0
      %1068 = vmatpush1.msra.mxu0 0.0
      %1069 = vmatprep.subr.mxu0 0.0
      %1070 = vmatpush1.msra.mxu0 0.0
      %1071 = vmatprep.subr.mxu0 0.0
      %1072 = vmatpush1.msra.mxu0 0.0
      %1073 = vmatprep.subr.mxu0 0.0
      %1074 = vmatpush1.msra.mxu0 0.0
      %1075 = vmatprep.subr.mxu0 0.0
      %1076 = vmatpush1.msra.mxu0 0.0
      %1077 = vmatprep.subr.mxu0 0.0
      %1078 = vmatpush1.msra.mxu0 0.0
      %1079 = vmatprep.subr.mxu0 0.0
      %1080 = vmatpush1.msra.mxu0 0.0
      %1081 = vmatprep.subr.mxu0 0.0
      %1082 = vmatpush1.msra.mxu0 0.0
      %1083 = vmatprep.subr.mxu0 0.0
      %1084 = vmatpush1.msra.mxu0 0.0
      %1085 = vmatprep.subr.mxu0 0.0
      %1086 = vmatpush1.msra.mxu0 0.0
      %1087 = vmatprep.subr.mxu0 0.0
      %1088 = vmatpush1.msra.mxu0 0.0
      %1089 = vmatprep.subr.mxu0 0.0
      %1090 = vmatpush1.msra.mxu0 0.0
      %1091 = vmatprep.subr.mxu0 0.0
      %1092 = vmatpush1.msra.mxu0 0.0
      %1093 = vmatprep.subr.mxu0 0.0
      %1094 = vmatpush1.msra.mxu0 0.0
      %1095 = vmatprep.subr.mxu0 0.0
      %1096 = vmatpush1.msra.mxu0 0.0
      %1097 = vmatprep.subr.mxu0 0.0
      %1098 = vmatpush1.msra.mxu0 0.0
      %1099 = vmatprep.subr.mxu0 0.0
      %1100 = vmatpush1.msra.mxu0 0.0
      %1101 = vmatprep.mubr.f32.mxu0 0.0
      %1102 = vmatmul.mubr.f32.gmra.mrb[0].mxu0 %v1026
      %v1103 = vpop.f32.mrb[0].mxu0
      %v1104 = vadd.f32 %v1023, %v1103
      %v1105 = vpop.f32.mrb[0].mxu0
      %1106 = vmatprep.mubr.f32.mxu0 0.0
      %1107 = vmatmul.mubr.f32.gmra.mrb[0].mxu0 %v1029
      %v1108 = vpop.f32.mrb[0].mxu0
      %v1109 = vadd.f32 %v1023, %v1108
      %v1110 = vpop.f32.mrb[0].mxu0
      %1111 = vmatprep.mubr.f32.mxu0 0.0
      %1112 = vmatmul.mubr.f32.gmra.mrb[0].mxu0 %v1032
      %v1113 = vpop.f32.mrb[0].mxu0
      %v1114 = vadd.f32 %v1023, %v1113
      %v1115 = vpop.f32.mrb[0].mxu0
      %1116 = vmatprep.mubr.f32.mxu0 0.0
      %1117 = vmatmul.mubr.f32.gmra.mrb[0].mxu0 %v1035
      %v1118 = vpop.f32.mrb[0].mxu0
      %v1119 = vadd.f32 %v1023, %v1118
      %v1120 = vpop.f32.mrb[0].mxu0
      %1121 = vdwg.mxu0
      %v1122 = vld [vmem:[%s713] sm:$0xff]
      %v1123 = vld [vmem:[%s713 + $0x8] sm:$0xff]
      %v1124 = vld [vmem:[%s713 + $0x10] sm:$0xff]
      %v1125 = vld [vmem:[%s713 + $0x18] sm:$0xff]
      %v1126 = vld [vmem:[%s716] sm:$0x1]
      %v1128 = vlaneseq
      %v1129 = vshrl.u32 %v1128, 7
      %v1130 = vsub.s32 0, %v1129
      %v1131 = vrot.slane %v1126, %v1130
      %v1133 = vsel %vm815, %v749, 0
      %v1135 = vsel %vm815, %v750, 0
      %v1137 = vsel %vm815, %v751, 0
      %v1139 = vsel %vm815, %v752, 0
      %1141 = vmatprep.subr.mxu0 0.0
      %1142 = vmatpush1.msra.mxu0 %v1122
      %1143 = vmatprep.subr.mxu0 0.0
      %1144 = vmatpush1.msra.mxu0 %v1123
      %1145 = vmatprep.subr.mxu0 0.0
      %1146 = vmatpush1.msra.mxu0 %v1124
      %1147 = vmatprep.subr.mxu0 0.0
      %1148 = vmatpush1.msra.mxu0 %v1125
      %1149 = vmatprep.subr.mxu0 0.0
      %1150 = vmatpush1.msra.mxu0 0.0
      %1151 = vmatprep.subr.mxu0 0.0
      %1152 = vmatpush1.msra.mxu0 0.0
      %1153 = vmatprep.subr.mxu0 0.0
      %1154 = vmatpush1.msra.mxu0 0.0
      %1155 = vmatprep.subr.mxu0 0.0
      %1156 = vmatpush1.msra.mxu0 0.0
      %1157 = vmatprep.subr.mxu0 0.0
      %1158 = vmatpush1.msra.mxu0 0.0
      %1159 = vmatprep.subr.mxu0 0.0
      %1160 = vmatpush1.msra.mxu0 0.0
      %1161 = vmatprep.subr.mxu0 0.0
      %1162 = vmatpush1.msra.mxu0 0.0
      %1163 = vmatprep.subr.mxu0 0.0
      %1164 = vmatpush1.msra.mxu0 0.0
      %1165 = vmatprep.subr.mxu0 0.0
      %1166 = vmatpush1.msra.mxu0 0.0
      %1167 = vmatprep.subr.mxu0 0.0
      %1168 = vmatpush1.msra.mxu0 0.0
      %1169 = vmatprep.subr.mxu0 0.0
      %1170 = vmatpush1.msra.mxu0 0.0
      %1171 = vmatprep.subr.mxu0 0.0
      %1172 = vmatpush1.msra.mxu0 0.0
      %1173 = vmatprep.subr.mxu0 0.0
      %1174 = vmatpush1.msra.mxu0 0.0
      %1175 = vmatprep.subr.mxu0 0.0
      %1176 = vmatpush1.msra.mxu0 0.0
      %1177 = vmatprep.subr.mxu0 0.0
      %1178 = vmatpush1.msra.mxu0 0.0
      %1179 = vmatprep.subr.mxu0 0.0
      %1180 = vmatpush1.msra.mxu0 0.0
      %1181 = vmatprep.subr.mxu0 0.0
      %1182 = vmatpush1.msra.mxu0 0.0
      %1183 = vmatprep.subr.mxu0 0.0
      %1184 = vmatpush1.msra.mxu0 0.0
      %1185 = vmatprep.subr.mxu0 0.0
      %1186 = vmatpush1.msra.mxu0 0.0
      %1187 = vmatprep.subr.mxu0 0.0
      %1188 = vmatpush1.msra.mxu0 0.0
      %1189 = vmatprep.subr.mxu0 0.0
      %1190 = vmatpush1.msra.mxu0 0.0
      %1191 = vmatprep.subr.mxu0 0.0
      %1192 = vmatpush1.msra.mxu0 0.0
      %1193 = vmatprep.subr.mxu0 0.0
      %1194 = vmatpush1.msra.mxu0 0.0
      %1195 = vmatprep.subr.mxu0 0.0
      %1196 = vmatpush1.msra.mxu0 0.0
      %1197 = vmatprep.subr.mxu0 0.0
      %1198 = vmatpush1.msra.mxu0 0.0
      %1199 = vmatprep.subr.mxu0 0.0
      %1200 = vmatpush1.msra.mxu0 0.0
      %1201 = vmatprep.subr.mxu0 0.0
      %1202 = vmatpush1.msra.mxu0 0.0
      %1203 = vmatprep.subr.mxu0 0.0
      %1204 = vmatpush1.msra.mxu0 0.0
      %1205 = vmatprep.mubr.f32.mxu0 0.0
      %1206 = vmatmul.mubr.f32.gmra.mrb[0].mxu0 %v1133
      %v1207 = vpop.f32.mrb[0].mxu0
      %v1208 = vadd.f32 %v1131, %v1207
      %v1209 = vpop.f32.mrb[0].mxu0
      %1210 = vmatprep.mubr.f32.mxu0 0.0
      %1211 = vmatmul.mubr.f32.gmra.mrb[0].mxu0 %v1135
      %v1212 = vpop.f32.mrb[0].mxu0
      %v1213 = vadd.f32 %v1131, %v1212
      %v1214 = vpop.f32.mrb[0].mxu0
      %1215 = vmatprep.mubr.f32.mxu0 0.0
      %1216 = vmatmul.mubr.f32.gmra.mrb[0].mxu0 %v1137
      %v1217 = vpop.f32.mrb[0].mxu0
      %v1218 = vadd.f32 %v1131, %v1217
      %v1219 = vpop.f32.mrb[0].mxu0
      %1220 = vmatprep.mubr.f32.mxu0 0.0
      %1221 = vmatmul.mubr.f32.gmra.mrb[0].mxu0 %v1139
      %v1222 = vpop.f32.mrb[0].mxu0
      %v1223 = vadd.f32 %v1131, %v1222
      %v1224 = vpop.f32.mrb[0].mxu0
      %1225 = vdwg.mxu0
      %vm1226 = vcmask 64512
      %v1228 = vsel %vm1226, %v924, 0
      %v1231 = vsel %vm1226, %v929, 0
      %v1234 = vsel %vm1226, %v934, 0
      %v1237 = vsel %vm1226, %v939, 0
      %v1240 = vsel %vm1226, %v1104, 0
      %v1243 = vsel %vm1226, %v1109, 0
      %v1246 = vsel %vm1226, %v1114, 0
      %v1249 = vsel %vm1226, %v1119, 0
      %1251 = vmatprep.subr.mxu0 0.0
      %1252 = vmatpush1.xpose.msra.mxu0 %v1240
      %1253 = vmatprep.subr.mxu0 0.0
      %1254 = vmatpush1.xpose.msra.mxu0 %v1243
      %1255 = vmatprep.subr.mxu0 0.0
      %1256 = vmatpush1.xpose.msra.mxu0 %v1246
      %1257 = vmatprep.subr.mxu0 0.0
      %1258 = vmatpush1.xpose.msra.mxu0 %v1249
      %1259 = vmatprep.subr.mxu0 0.0
      %1260 = vmatpush1.xpose.msra.mxu0 0.0
      %1261 = vmatprep.subr.mxu0 0.0
      %1262 = vmatpush1.xpose.msra.mxu0 0.0
      %1263 = vmatprep.subr.mxu0 0.0
      %1264 = vmatpush1.xpose.msra.mxu0 0.0
      %1265 = vmatprep.subr.mxu0 0.0
      %1266 = vmatpush1.xpose.msra.mxu0 0.0
      %1267 = vmatprep.subr.mxu0 0.0
      %1268 = vmatpush1.xpose.msra.mxu0 0.0
      %1269 = vmatprep.subr.mxu0 0.0
      %1270 = vmatpush1.xpose.msra.mxu0 0.0
      %1271 = vmatprep.subr.mxu0 0.0
      %1272 = vmatpush1.xpose.msra.mxu0 0.0
      %1273 = vmatprep.subr.mxu0 0.0
      %1274 = vmatpush1.xpose.msra.mxu0 0.0
      %1275 = vmatprep.subr.mxu0 0.0
      %1276 = vmatpush1.xpose.msra.mxu0 0.0
      %1277 = vmatprep.subr.mxu0 0.0
      %1278 = vmatpush1.xpose.msra.mxu0 0.0
      %1279 = vmatprep.subr.mxu0 0.0
      %1280 = vmatpush1.xpose.msra.mxu0 0.0
      %1281 = vmatprep.subr.mxu0 0.0
      %1282 = vmatpush1.xpose.msra.mxu0 0.0
      %1283 = vmatprep.subr.mxu0 0.0
      %1284 = vmatpush1.xpose.msra.mxu0 0.0
      %1285 = vmatprep.subr.mxu0 0.0
      %1286 = vmatpush1.xpose.msra.mxu0 0.0
      %1287 = vmatprep.subr.mxu0 0.0
      %1288 = vmatpush1.xpose.msra.mxu0 0.0
      %1289 = vmatprep.subr.mxu0 0.0
      %1290 = vmatpush1.xpose.msra.mxu0 0.0
      %1291 = vmatprep.subr.mxu0 0.0
      %1292 = vmatpush1.xpose.msra.mxu0 0.0
      %1293 = vmatprep.subr.mxu0 0.0
      %1294 = vmatpush1.xpose.msra.mxu0 0.0
      %1295 = vmatprep.subr.mxu0 0.0
      %1296 = vmatpush1.xpose.msra.mxu0 0.0
      %1297 = vmatprep.subr.mxu0 0.0
      %1298 = vmatpush1.xpose.msra.mxu0 0.0
      %1299 = vmatprep.subr.mxu0 0.0
      %1300 = vmatpush1.xpose.msra.mxu0 0.0
      %1301 = vmatprep.subr.mxu0 0.0
      %1302 = vmatpush1.xpose.msra.mxu0 0.0
      %1303 = vmatprep.subr.mxu0 0.0
      %1304 = vmatpush1.xpose.msra.mxu0 0.0
      %1305 = vmatprep.subr.mxu0 0.0
      %1306 = vmatpush1.xpose.msra.mxu0 0.0
      %1307 = vmatprep.subr.mxu0 0.0
      %1308 = vmatpush1.xpose.msra.mxu0 0.0
      %1309 = vmatprep.subr.mxu0 0.0
      %1310 = vmatpush1.xpose.msra.mxu0 0.0
      %1311 = vmatprep.subr.mxu0 0.0
      %1312 = vmatpush1.xpose.msra.mxu0 0.0
      %1313 = vmatprep.subr.mxu0 0.0
      %1314 = vmatpush1.xpose.msra.mxu0 0.0
      %1315 = vmatprep.mubr.f32.mxu0 0.0
      %1316 = vmatmul.mubr.f32.gmra.mrb[0].mxu0 %v1228
      %v1317 = vpop.f32.mrb[0].mxu0
      %v1318 = vadd.f32 0.0, %v1317
      %v1319 = vpop.f32.mrb[0].mxu0
      %1320 = vmatprep.mubr.f32.mxu0 0.0
      %1321 = vmatmul.mubr.f32.gmra.mrb[0].mxu0 %v1231
      %v1322 = vpop.f32.mrb[0].mxu0
      %v1323 = vadd.f32 0.0, %v1322
      %v1324 = vpop.f32.mrb[0].mxu0
      %1325 = vmatprep.mubr.f32.mxu0 0.0
      %1326 = vmatmul.mubr.f32.gmra.mrb[0].mxu0 %v1234
      %v1327 = vpop.f32.mrb[0].mxu0
      %v1328 = vadd.f32 0.0, %v1327
      %v1329 = vpop.f32.mrb[0].mxu0
      %1330 = vmatprep.mubr.f32.mxu0 0.0
      %1331 = vmatmul.mubr.f32.gmra.mrb[0].mxu0 %v1237
      %v1332 = vpop.f32.mrb[0].mxu0
      %v1333 = vadd.f32 0.0, %v1332
      %v1334 = vpop.f32.mrb[0].mxu0
      %1335 = vdwg.mxu0
      %v1336 = vmul.f32 %v1318, 0.35355338
      %v1337 = vmul.f32 %v1323, 0.35355338
      %v1338 = vmul.f32 %v1328, 0.35355338
      %v1339 = vmul.f32 %v1333, 0.35355338
      %v1340 = vadd.f32 %v1336, %v753
      %v1341 = vadd.f32 %v1337, %v754
      %v1342 = vadd.f32 %v1338, %v755
      %v1343 = vadd.f32 %v1339, %v756
      %v1344 = vsel %vm815, %v1340, -inf
      %1345 = vmax.xlane.f32.xlu0 %v1344
      %v1346 = vpop.xlane.xlu0 %1345
      %v1347 = vsel %vm815, %v1341, -inf
      %1348 = vmax.xlane.f32.xlu0 %v1347
      %v1349 = vpop.xlane.xlu0 %1348
      %v1350 = vsel %vm815, %v1342, -inf
      %1351 = vmax.xlane.f32.xlu0 %v1350
      %v1352 = vpop.xlane.xlu0 %1351
      %v1353 = vsel %vm815, %v1343, -inf
      %1354 = vmax.xlane.f32.xlu0 %v1353
      %v1355 = vpop.xlane.xlu0 %1354
      %v1356 = vsub.f32 %v1340, %v1346
      %v1357 = vsub.f32 %v1341, %v1349
      %v1358 = vsub.f32 %v1342, %v1352
      %v1359 = vsub.f32 %v1343, %v1355
      %v1360 = vmul.f32 %v1356, 1.442695
      %v1361 = vpow.pop %v1360
      %v1362 = vmul.f32 %v1357, 1.442695
      %v1363 = vpow.pop %v1362
      %v1364 = vmul.f32 %v1358, 1.442695
      %v1365 = vpow.pop %v1364
      %v1366 = vmul.f32 %v1359, 1.442695
      %v1367 = vpow.pop %v1366
      %v1368 = vsel %vm815, %v1361, 0.0
      %1369 = vadd.xlane.f32.xlu0 %v1368
      %v1370 = vpop.xlane.xlu0 %1369
      %v1371 = vsel %vm815, %v1363, 0.0
      %1372 = vadd.xlane.f32.xlu0 %v1371
      %v1373 = vpop.xlane.xlu0 %1372
      %v1374 = vsel %vm815, %v1365, 0.0
      %1375 = vadd.xlane.f32.xlu0 %v1374
      %v1376 = vpop.xlane.xlu0 %1375
      %v1377 = vsel %vm815, %v1367, 0.0
      %1378 = vadd.xlane.f32.xlu0 %v1377
      %v1379 = vpop.xlane.xlu0 %1378
      %v1380 = vrcp.pop %v1370
      %v1381 = vrcp.pop %v1373
      %v1382 = vrcp.pop %v1376
      %v1383 = vrcp.pop %v1379
      %v1384 = vmul.f32 %v1361, %v1380
      %v1385 = vmul.f32 %v1363, %v1381
      %v1386 = vmul.f32 %v1365, %v1382
      %v1387 = vmul.f32 %v1367, %v1383
      %v1389 = vsel %vm815, %v1384, 0
      %v1392 = vsel %vm815, %v1385, 0
      %v1395 = vsel %vm815, %v1386, 0
      %v1398 = vsel %vm815, %v1387, 0
      %1400 = vmatprep.subr.mxu0 0.0
      %1401 = vmatpush1.msra.mxu0 %v1208
      %1402 = vmatprep.subr.mxu0 0.0
      %1403 = vmatpush1.msra.mxu0 %v1213
      %1404 = vmatprep.subr.mxu0 0.0
      %1405 = vmatpush1.msra.mxu0 %v1218
      %1406 = vmatprep.subr.mxu0 0.0
      %1407 = vmatpush1.msra.mxu0 %v1223
      %1408 = vmatprep.subr.mxu0 0.0
      %1409 = vmatpush1.msra.mxu0 0.0
      %1410 = vmatprep.subr.mxu0 0.0
      %1411 = vmatpush1.msra.mxu0 0.0
      %1412 = vmatprep.subr.mxu0 0.0
      %1413 = vmatpush1.msra.mxu0 0.0
      %1414 = vmatprep.subr.mxu0 0.0
      %1415 = vmatpush1.msra.mxu0 0.0
      %1416 = vmatprep.subr.mxu0 0.0
      %1417 = vmatpush1.msra.mxu0 0.0
      %1418 = vmatprep.subr.mxu0 0.0
      %1419 = vmatpush1.msra.mxu0 0.0
      %1420 = vmatprep.subr.mxu0 0.0
      %1421 = vmatpush1.msra.mxu0 0.0
      %1422 = vmatprep.subr.mxu0 0.0
      %1423 = vmatpush1.msra.mxu0 0.0
      %1424 = vmatprep.subr.mxu0 0.0
      %1425 = vmatpush1.msra.mxu0 0.0
      %1426 = vmatprep.subr.mxu0 0.0
      %1427 = vmatpush1.msra.mxu0 0.0
      %1428 = vmatprep.subr.mxu0 0.0
      %1429 = vmatpush1.msra.mxu0 0.0
      %1430 = vmatprep.subr.mxu0 0.0
      %1431 = vmatpush1.msra.mxu0 0.0
      %1432 = vmatprep.subr.mxu0 0.0
      %1433 = vmatpush1.msra.mxu0 0.0
      %1434 = vmatprep.subr.mxu0 0.0
      %1435 = vmatpush1.msra.mxu0 0.0
      %1436 = vmatprep.subr.mxu0 0.0
      %1437 = vmatpush1.msra.mxu0 0.0
      %1438 = vmatprep.subr.mxu0 0.0
      %1439 = vmatpush1.msra.mxu0 0.0
      %1440 = vmatprep.subr.mxu0 0.0
      %1441 = vmatpush1.msra.mxu0 0.0
      %1442 = vmatprep.subr.mxu0 0.0
      %1443 = vmatpush1.msra.mxu0 0.0
      %1444 = vmatprep.subr.mxu0 0.0
      %1445 = vmatpush1.msra.mxu0 0.0
      %1446 = vmatprep.subr.mxu0 0.0
      %1447 = vmatpush1.msra.mxu0 0.0
      %1448 = vmatprep.subr.mxu0 0.0
      %1449 = vmatpush1.msra.mxu0 0.0
      %1450 = vmatprep.subr.mxu0 0.0
      %1451 = vmatpush1.msra.mxu0 0.0
      %1452 = vmatprep.subr.mxu0 0.0
      %1453 = vmatpush1.msra.mxu0 0.0
      %1454 = vmatprep.subr.mxu0 0.0
      %1455 = vmatpush1.msra.mxu0 0.0
      %1456 = vmatprep.subr.mxu0 0.0
      %1457 = vmatpush1.msra.mxu0 0.0
      %1458 = vmatprep.subr.mxu0 0.0
      %1459 = vmatpush1.msra.mxu0 0.0
      %1460 = vmatprep.subr.mxu0 0.0
      %1461 = vmatpush1.msra.mxu0 0.0
      %1462 = vmatprep.subr.mxu0 0.0
      %1463 = vmatpush1.msra.mxu0 0.0
      %1464 = vmatprep.mubr.f32.mxu0 0.0
      %1465 = vmatmul.mubr.f32.gmra.mrb[0].mxu0 %v1389
      %v1466 = vpop.f32.mrb[0].mxu0
      %v1467 = vadd.f32 0.0, %v1466
      %v1468 = vpop.f32.mrb[0].mxu0
      %1469 = vmatprep.mubr.f32.mxu0 0.0
      %1470 = vmatmul.mubr.f32.gmra.mrb[0].mxu0 %v1392
      %v1471 = vpop.f32.mrb[0].mxu0
      %v1472 = vadd.f32 0.0, %v1471
      %v1473 = vpop.f32.mrb[0].mxu0
      %1474 = vmatprep.mubr.f32.mxu0 0.0
      %1475 = vmatmul.mubr.f32.gmra.mrb[0].mxu0 %v1395
      %v1476 = vpop.f32.mrb[0].mxu0
      %v1477 = vadd.f32 0.0, %v1476
      %v1478 = vpop.f32.mrb[0].mxu0
      %1479 = vmatprep.mubr.f32.mxu0 0.0
      %1480 = vmatmul.mubr.f32.gmra.mrb[0].mxu0 %v1398
      %v1481 = vpop.f32.mrb[0].mxu0
      %v1482 = vadd.f32 0.0, %v1481
      %v1483 = vpop.f32.mrb[0].mxu0
      %1484 = vdwg.mxu0
      %1485 = vrot.lane.b32.xlu0 %v924, 120
      %v1486 = vpop.permute.xlu0 %1485
      %1487 = vrot.lane.b32.xlu0 %v929, 120
      %v1488 = vpop.permute.xlu0 %1487
      %1489 = vrot.lane.b32.xlu0 %v934, 120
      %v1490 = vpop.permute.xlu0 %1489
      %1491 = vrot.lane.b32.xlu0 %v939, 120
      %v1492 = vpop.permute.xlu0 %1491
      %1493 = vrot.lane.b32.xlu0 %v1104, 120
      %v1494 = vpop.permute.xlu0 %1493
      %1495 = vrot.lane.b32.xlu0 %v1109, 120
      %v1496 = vpop.permute.xlu0 %1495
      %1497 = vrot.lane.b32.xlu0 %v1114, 120
      %v1498 = vpop.permute.xlu0 %1497
      %1499 = vrot.lane.b32.xlu0 %v1119, 120
      %v1500 = vpop.permute.xlu0 %1499
      %v1501 = vsel %vm1226, %v1486, 0
      %v1503 = vsel %vm1226, %v1488, 0
      %v1505 = vsel %vm1226, %v1490, 0
      %v1507 = vsel %vm1226, %v1492, 0
      %v1509 = vsel %vm1226, %v1494, 0
      %v1511 = vsel %vm1226, %v1496, 0
      %v1513 = vsel %vm1226, %v1498, 0
      %v1515 = vsel %vm1226, %v1500, 0
      %1517 = vmatprep.subr.mxu0 0.0
      %1518 = vmatpush1.xpose.msra.mxu0 %v1509
      %1519 = vmatprep.subr.mxu0 0.0
      %1520 = vmatpush1.xpose.msra.mxu0 %v1511
      %1521 = vmatprep.subr.mxu0 0.0
      %1522 = vmatpush1.xpose.msra.mxu0 %v1513
      %1523 = vmatprep.subr.mxu0 0.0
      %1524 = vmatpush1.xpose.msra.mxu0 %v1515
      %1525 = vmatprep.subr.mxu0 0.0
      %1526 = vmatpush1.xpose.msra.mxu0 0.0
      %1527 = vmatprep.subr.mxu0 0.0
      %1528 = vmatpush1.xpose.msra.mxu0 0.0
      %1529 = vmatprep.subr.mxu0 0.0
      %1530 = vmatpush1.xpose.msra.mxu0 0.0
      %1531 = vmatprep.subr.mxu0 0.0
      %1532 = vmatpush1.xpose.msra.mxu0 0.0
      %1533 = vmatprep.subr.mxu0 0.0
      %1534 = vmatpush1.xpose.msra.mxu0 0.0
      %1535 = vmatprep.subr.mxu0 0.0
      %1536 = vmatpush1.xpose.msra.mxu0 0.0
      %1537 = vmatprep.subr.mxu0 0.0
      %1538 = vmatpush1.xpose.msra.mxu0 0.0
      %1539 = vmatprep.subr.mxu0 0.0
      %1540 = vmatpush1.xpose.msra.mxu0 0.0
      %1541 = vmatprep.subr.mxu0 0.0
      %1542 = vmatpush1.xpose.msra.mxu0 0.0
      %1543 = vmatprep.subr.mxu0 0.0
      %1544 = vmatpush1.xpose.msra.mxu0 0.0
      %1545 = vmatprep.subr.mxu0 0.0
      %1546 = vmatpush1.xpose.msra.mxu0 0.0
      %1547 = vmatprep.subr.mxu0 0.0
      %1548 = vmatpush1.xpose.msra.mxu0 0.0
      %1549 = vmatprep.subr.mxu0 0.0
      %1550 = vmatpush1.xpose.msra.mxu0 0.0
      %1551 = vmatprep.subr.mxu0 0.0
      %1552 = vmatpush1.xpose.msra.mxu0 0.0
      %1553 = vmatprep.subr.mxu0 0.0
      %1554 = vmatpush1.xpose.msra.mxu0 0.0
      %1555 = vmatprep.subr.mxu0 0.0
      %1556 = vmatpush1.xpose.msra.mxu0 0.0
      %1557 = vmatprep.subr.mxu0 0.0
      %1558 = vmatpush1.xpose.msra.mxu0 0.0
      %1559 = vmatprep.subr.mxu0 0.0
      %1560 = vmatpush1.xpose.msra.mxu0 0.0
      %1561 = vmatprep.subr.mxu0 0.0
      %1562 = vmatpush1.xpose.msra.mxu0 0.0
      %1563 = vmatprep.subr.mxu0 0.0
      %1564 = vmatpush1.xpose.msra.mxu0 0.0
      %1565 = vmatprep.subr.mxu0 0.0
      %1566 = vmatpush1.xpose.msra.mxu0 0.0
      %1567 = vmatprep.subr.mxu0 0.0
      %1568 = vmatpush1.xpose.msra.mxu0 0.0
      %1569 = vmatprep.subr.mxu0 0.0
      %1570 = vmatpush1.xpose.msra.mxu0 0.0
      %1571 = vmatprep.subr.mxu0 0.0
      %1572 = vmatpush1.xpose.msra.mxu0 0.0
      %1573 = vmatprep.subr.mxu0 0.0
      %1574 = vmatpush1.xpose.msra.mxu0 0.0
      %1575 = vmatprep.subr.mxu0 0.0
      %1576 = vmatpush1.xpose.msra.mxu0 0.0
      %1577 = vmatprep.subr.mxu0 0.0
      %1578 = vmatpush1.xpose.msra.mxu0 0.0
      %1579 = vmatprep.subr.mxu0 0.0
      %1580 = vmatpush1.xpose.msra.mxu0 0.0
      %1581 = vmatprep.mubr.f32.mxu0 0.0
      %1582 = vmatmul.mubr.f32.gmra.mrb[0].mxu0 %v1501
      %v1583 = vpop.f32.mrb[0].mxu0
      %v1584 = vadd.f32 0.0, %v1583
      %v1585 = vpop.f32.mrb[0].mxu0
      %1586 = vmatprep.mubr.f32.mxu0 0.0
      %1587 = vmatmul.mubr.f32.gmra.mrb[0].mxu0 %v1503
      %v1588 = vpop.f32.mrb[0].mxu0
      %v1589 = vadd.f32 0.0, %v1588
      %v1590 = vpop.f32.mrb[0].mxu0
      %1591 = vmatprep.mubr.f32.mxu0 0.0
      %1592 = vmatmul.mubr.f32.gmra.mrb[0].mxu0 %v1505
      %v1593 = vpop.f32.mrb[0].mxu0
      %v1594 = vadd.f32 0.0, %v1593
      %v1595 = vpop.f32.mrb[0].mxu0
      %1596 = vmatprep.mubr.f32.mxu0 0.0
      %1597 = vmatmul.mubr.f32.gmra.mrb[0].mxu0 %v1507
      %v1598 = vpop.f32.mrb[0].mxu0
      %v1599 = vadd.f32 0.0, %v1598
      %v1600 = vpop.f32.mrb[0].mxu0
      %1601 = vdwg.mxu0
      %v1602 = vmul.f32 %v1584, 0.35355338
      %v1603 = vmul.f32 %v1589, 0.35355338
      %v1604 = vmul.f32 %v1594, 0.35355338
      %v1605 = vmul.f32 %v1599, 0.35355338
      %v1606 = vadd.f32 %v1602, %v753
      %v1607 = vadd.f32 %v1603, %v754
      %v1608 = vadd.f32 %v1604, %v755
      %v1609 = vadd.f32 %v1605, %v756
      %v1610 = vsel %vm815, %v1606, -inf
      %1611 = vmax.xlane.f32.xlu0 %v1610
      %v1612 = vpop.xlane.xlu0 %1611
      %v1613 = vsel %vm815, %v1607, -inf
      %1614 = vmax.xlane.f32.xlu0 %v1613
      %v1615 = vpop.xlane.xlu0 %1614
      %v1616 = vsel %vm815, %v1608, -inf
      %1617 = vmax.xlane.f32.xlu0 %v1616
      %v1618 = vpop.xlane.xlu0 %1617
      %v1619 = vsel %vm815, %v1609, -inf
      %1620 = vmax.xlane.f32.xlu0 %v1619
      %v1621 = vpop.xlane.xlu0 %1620
      %v1622 = vsub.f32 %v1606, %v1612
      %v1623 = vsub.f32 %v1607, %v1615
      %v1624 = vsub.f32 %v1608, %v1618
      %v1625 = vsub.f32 %v1609, %v1621
      %v1626 = vmul.f32 %v1622, 1.442695
      %v1627 = vpow.pop %v1626
      %v1628 = vmul.f32 %v1623, 1.442695
      %v1629 = vpow.pop %v1628
      %v1630 = vmul.f32 %v1624, 1.442695
      %v1631 = vpow.pop %v1630
      %v1632 = vmul.f32 %v1625, 1.442695
      %v1633 = vpow.pop %v1632
      %v1634 = vsel %vm815, %v1627, 0.0
      %1635 = vadd.xlane.f32.xlu0 %v1634
      %v1636 = vpop.xlane.xlu0 %1635
      %v1637 = vsel %vm815, %v1629, 0.0
      %1638 = vadd.xlane.f32.xlu0 %v1637
      %v1639 = vpop.xlane.xlu0 %1638
      %v1640 = vsel %vm815, %v1631, 0.0
      %1641 = vadd.xlane.f32.xlu0 %v1640
      %v1642 = vpop.xlane.xlu0 %1641
      %v1643 = vsel %vm815, %v1633, 0.0
      %1644 = vadd.xlane.f32.xlu0 %v1643
      %v1645 = vpop.xlane.xlu0 %1644
      %v1646 = vrcp.pop %v1636
      %v1647 = vrcp.pop %v1639
      %v1648 = vrcp.pop %v1642
      %v1649 = vrcp.pop %v1645
      %v1650 = vmul.f32 %v1627, %v1646
      %v1651 = vmul.f32 %v1629, %v1647
      %v1652 = vmul.f32 %v1631, %v1648
      %v1653 = vmul.f32 %v1633, %v1649
      %1658 = vrot.lane.b32.xlu0 %v1208, 120
      %v1659 = vpop.permute.xlu0 %1658
      %1660 = vrot.lane.b32.xlu0 %v1213, 120
      %v1661 = vpop.permute.xlu0 %1660
      %1662 = vrot.lane.b32.xlu0 %v1218, 120
      %v1663 = vpop.permute.xlu0 %1662
      %1664 = vrot.lane.b32.xlu0 %v1223, 120
      %v1665 = vpop.permute.xlu0 %1664
      %v1671 = vsel %vm815, %v1650, 0
      %v1674 = vsel %vm815, %v1651, 0
      %v1677 = vsel %vm815, %v1652, 0
      %v1680 = vsel %vm815, %v1653, 0
      %1682 = vmatprep.subr.mxu0 0.0
      %1683 = vmatpush1.msra.mxu0 %v1659
      %1684 = vmatprep.subr.mxu0 0.0
      %1685 = vmatpush1.msra.mxu0 %v1661
      %1686 = vmatprep.subr.mxu0 0.0
      %1687 = vmatpush1.msra.mxu0 %v1663
      %1688 = vmatprep.subr.mxu0 0.0
      %1689 = vmatpush1.msra.mxu0 %v1665
      %1690 = vmatprep.subr.mxu0 0.0
      %1691 = vmatpush1.msra.mxu0 0.0
      %1692 = vmatprep.subr.mxu0 0.0
      %1693 = vmatpush1.msra.mxu0 0.0
      %1694 = vmatprep.subr.mxu0 0.0
      %1695 = vmatpush1.msra.mxu0 0.0
      %1696 = vmatprep.subr.mxu0 0.0
      %1697 = vmatpush1.msra.mxu0 0.0
      %1698 = vmatprep.subr.mxu0 0.0
      %1699 = vmatpush1.msra.mxu0 0.0
      %1700 = vmatprep.subr.mxu0 0.0
      %1701 = vmatpush1.msra.mxu0 0.0
      %1702 = vmatprep.subr.mxu0 0.0
      %1703 = vmatpush1.msra.mxu0 0.0
      %1704 = vmatprep.subr.mxu0 0.0
      %1705 = vmatpush1.msra.mxu0 0.0
      %1706 = vmatprep.subr.mxu0 0.0
      %1707 = vmatpush1.msra.mxu0 0.0
      %1708 = vmatprep.subr.mxu0 0.0
      %1709 = vmatpush1.msra.mxu0 0.0
      %1710 = vmatprep.subr.mxu0 0.0
      %1711 = vmatpush1.msra.mxu0 0.0
      %1712 = vmatprep.subr.mxu0 0.0
      %1713 = vmatpush1.msra.mxu0 0.0
      %1714 = vmatprep.subr.mxu0 0.0
      %1715 = vmatpush1.msra.mxu0 0.0
      %1716 = vmatprep.subr.mxu0 0.0
      %1717 = vmatpush1.msra.mxu0 0.0
      %1718 = vmatprep.subr.mxu0 0.0
      %1719 = vmatpush1.msra.mxu0 0.0
      %1720 = vmatprep.subr.mxu0 0.0
      %1721 = vmatpush1.msra.mxu0 0.0
      %1722 = vmatprep.subr.mxu0 0.0
      %1723 = vmatpush1.msra.mxu0 0.0
      %1724 = vmatprep.subr.mxu0 0.0
      %1725 = vmatpush1.msra.mxu0 0.0
      %1726 = vmatprep.subr.mxu0 0.0
      %1727 = vmatpush1.msra.mxu0 0.0
      %1728 = vmatprep.subr.mxu0 0.0
      %1729 = vmatpush1.msra.mxu0 0.0
      %1730 = vmatprep.subr.mxu0 0.0
      %1731 = vmatpush1.msra.mxu0 0.0
      %1732 = vmatprep.subr.mxu0 0.0
      %1733 = vmatpush1.msra.mxu0 0.0
      %1734 = vmatprep.subr.mxu0 0.0
      %1735 = vmatpush1.msra.mxu0 0.0
      %1736 = vmatprep.subr.mxu0 0.0
      %1737 = vmatpush1.msra.mxu0 0.0
      %1738 = vmatprep.subr.mxu0 0.0
      %1739 = vmatpush1.msra.mxu0 0.0
      %1740 = vmatprep.subr.mxu0 0.0
      %1741 = vmatpush1.msra.mxu0 0.0
      %1742 = vmatprep.subr.mxu0 0.0
      %1743 = vmatpush1.msra.mxu0 0.0
      %1744 = vmatprep.subr.mxu0 0.0
      %1745 = vmatpush1.msra.mxu0 0.0
      %1746 = vmatprep.mubr.f32.mxu0 0.0
      %1747 = vmatmul.mubr.f32.gmra.mrb[0].mxu0 %v1671
      %v1748 = vpop.f32.mrb[0].mxu0
      %v1749 = vadd.f32 0.0, %v1748
      %v1750 = vpop.f32.mrb[0].mxu0
      %1751 = vmatprep.mubr.f32.mxu0 0.0
      %1752 = vmatmul.mubr.f32.gmra.mrb[0].mxu0 %v1674
      %v1753 = vpop.f32.mrb[0].mxu0
      %v1754 = vadd.f32 0.0, %v1753
      %v1755 = vpop.f32.mrb[0].mxu0
      %1756 = vmatprep.mubr.f32.mxu0 0.0
      %1757 = vmatmul.mubr.f32.gmra.mrb[0].mxu0 %v1677
      %v1758 = vpop.f32.mrb[0].mxu0
      %v1759 = vadd.f32 0.0, %v1758
      %v1760 = vpop.f32.mrb[0].mxu0
      %1761 = vmatprep.mubr.f32.mxu0 0.0
      %1762 = vmatmul.mubr.f32.gmra.mrb[0].mxu0 %v1680
      %v1763 = vpop.f32.mrb[0].mxu0
      %v1764 = vadd.f32 0.0, %v1763
      %v1765 = vpop.f32.mrb[0].mxu0
      %1766 = vdwg.mxu0
      %1767 = vrot.lane.b32.xlu0 %v924, 112
      %v1768 = vpop.permute.xlu0 %1767
      %1769 = vrot.lane.b32.xlu0 %v929, 112
      %v1770 = vpop.permute.xlu0 %1769
      %1771 = vrot.lane.b32.xlu0 %v934, 112
      %v1772 = vpop.permute.xlu0 %1771
      %1773 = vrot.lane.b32.xlu0 %v939, 112
      %v1774 = vpop.permute.xlu0 %1773
      %1775 = vrot.lane.b32.xlu0 %v1104, 112
      %v1776 = vpop.permute.xlu0 %1775
      %1777 = vrot.lane.b32.xlu0 %v1109, 112
      %v1778 = vpop.permute.xlu0 %1777
      %1779 = vrot.lane.b32.xlu0 %v1114, 112
      %v1780 = vpop.permute.xlu0 %1779
      %1781 = vrot.lane.b32.xlu0 %v1119, 112
      %v1782 = vpop.permute.xlu0 %1781
      %v1783 = vsel %vm1226, %v1768, 0
      %v1785 = vsel %vm1226, %v1770, 0
      %v1787 = vsel %vm1226, %v1772, 0
      %v1789 = vsel %vm1226, %v1774, 0
      %v1791 = vsel %vm1226, %v1776, 0
      %v1793 = vsel %vm1226, %v1778, 0
      %v1795 = vsel %vm1226, %v1780, 0
      %v1797 = vsel %vm1226, %v1782, 0
      %1799 = vmatprep.subr.mxu0 0.0
      %1800 = vmatpush1.xpose.msra.mxu0 %v1791
      %1801 = vmatprep.subr.mxu0 0.0
      %1802 = vmatpush1.xpose.msra.mxu0 %v1793
      %1803 = vmatprep.subr.mxu0 0.0
      %1804 = vmatpush1.xpose.msra.mxu0 %v1795
      %1805 = vmatprep.subr.mxu0 0.0
      %1806 = vmatpush1.xpose.msra.mxu0 %v1797
      %1807 = vmatprep.subr.mxu0 0.0
      %1808 = vmatpush1.xpose.msra.mxu0 0.0
      %1809 = vmatprep.subr.mxu0 0.0
      %1810 = vmatpush1.xpose.msra.mxu0 0.0
      %1811 = vmatprep.subr.mxu0 0.0
      %1812 = vmatpush1.xpose.msra.mxu0 0.0
      %1813 = vmatprep.subr.mxu0 0.0
      %1814 = vmatpush1.xpose.msra.mxu0 0.0
      %1815 = vmatprep.subr.mxu0 0.0
      %1816 = vmatpush1.xpose.msra.mxu0 0.0
      %1817 = vmatprep.subr.mxu0 0.0
      %1818 = vmatpush1.xpose.msra.mxu0 0.0
      %1819 = vmatprep.subr.mxu0 0.0
      %1820 = vmatpush1.xpose.msra.mxu0 0.0
      %1821 = vmatprep.subr.mxu0 0.0
      %1822 = vmatpush1.xpose.msra.mxu0 0.0
      %1823 = vmatprep.subr.mxu0 0.0
      %1824 = vmatpush1.xpose.msra.mxu0 0.0
      %1825 = vmatprep.subr.mxu0 0.0
      %1826 = vmatpush1.xpose.msra.mxu0 0.0
      %1827 = vmatprep.subr.mxu0 0.0
      %1828 = vmatpush1.xpose.msra.mxu0 0.0
      %1829 = vmatprep.subr.mxu0 0.0
      %1830 = vmatpush1.xpose.msra.mxu0 0.0
      %1831 = vmatprep.subr.mxu0 0.0
      %1832 = vmatpush1.xpose.msra.mxu0 0.0
      %1833 = vmatprep.subr.mxu0 0.0
      %1834 = vmatpush1.xpose.msra.mxu0 0.0
      %1835 = vmatprep.subr.mxu0 0.0
      %1836 = vmatpush1.xpose.msra.mxu0 0.0
      %1837 = vmatprep.subr.mxu0 0.0
      %1838 = vmatpush1.xpose.msra.mxu0 0.0
      %1839 = vmatprep.subr.mxu0 0.0
      %1840 = vmatpush1.xpose.msra.mxu0 0.0
      %1841 = vmatprep.subr.mxu0 0.0
      %1842 = vmatpush1.xpose.msra.mxu0 0.0
      %1843 = vmatprep.subr.mxu0 0.0
      %1844 = vmatpush1.xpose.msra.mxu0 0.0
      %1845 = vmatprep.subr.mxu0 0.0
      %1846 = vmatpush1.xpose.msra.mxu0 0.0
      %1847 = vmatprep.subr.mxu0 0.0
      %1848 = vmatpush1.xpose.msra.mxu0 0.0
      %1849 = vmatprep.subr.mxu0 0.0
      %1850 = vmatpush1.xpose.msra.mxu0 0.0
      %1851 = vmatprep.subr.mxu0 0.0
      %1852 = vmatpush1.xpose.msra.mxu0 0.0
      %1853 = vmatprep.subr.mxu0 0.0
      %1854 = vmatpush1.xpose.msra.mxu0 0.0
      %1855 = vmatprep.subr.mxu0 0.0
      %1856 = vmatpush1.xpose.msra.mxu0 0.0
      %1857 = vmatprep.subr.mxu0 0.0
      %1858 = vmatpush1.xpose.msra.mxu0 0.0
      %1859 = vmatprep.subr.mxu0 0.0
      %1860 = vmatpush1.xpose.msra.mxu0 0.0
      %1861 = vmatprep.subr.mxu0 0.0
      %1862 = vmatpush1.xpose.msra.mxu0 0.0
      %1863 = vmatprep.mubr.f32.mxu0 0.0
      %1864 = vmatmul.mubr.f32.gmra.mrb[0].mxu0 %v1783
      %v1865 = vpop.f32.mrb[0].mxu0
      %v1866 = vadd.f32 0.0, %v1865
      %v1867 = vpop.f32.mrb[0].mxu0
      %1868 = vmatprep.mubr.f32.mxu0 0.0
      %1869 = vmatmul.mubr.f32.gmra.mrb[0].mxu0 %v1785
      %v1870 = vpop.f32.mrb[0].mxu0
      %v1871 = vadd.f32 0.0, %v1870
      %v1872 = vpop.f32.mrb[0].mxu0
      %1873 = vmatprep.mubr.f32.mxu0 0.0
      %1874 = vmatmul.mubr.f32.gmra.mrb[0].mxu0 %v1787
      %v1875 = vpop.f32.mrb[0].mxu0
      %v1876 = vadd.f32 0.0, %v1875
      %v1877 = vpop.f32.mrb[0].mxu0
      %1878 = vmatprep.mubr.f32.mxu0 0.0
      %1879 = vmatmul.mubr.f32.gmra.mrb[0].mxu0 %v1789
      %v1880 = vpop.f32.mrb[0].mxu0
      %v1881 = vadd.f32 0.0, %v1880
      %v1882 = vpop.f32.mrb[0].mxu0
      %1883 = vdwg.mxu0
      %v1884 = vmul.f32 %v1866, 0.35355338
      %v1885 = vmul.f32 %v1871, 0.35355338
      %v1886 = vmul.f32 %v1876, 0.35355338
      %v1887 = vmul.f32 %v1881, 0.35355338
      %v1888 = vadd.f32 %v1884, %v753
      %v1889 = vadd.f32 %v1885, %v754
      %v1890 = vadd.f32 %v1886, %v755
      %v1891 = vadd.f32 %v1887, %v756
      %v1892 = vsel %vm815, %v1888, -inf
      %1893 = vmax.xlane.f32.xlu0 %v1892
      %v1894 = vpop.xlane.xlu0 %1893
      %v1895 = vsel %vm815, %v1889, -inf
      %1896 = vmax.xlane.f32.xlu0 %v1895
      %v1897 = vpop.xlane.xlu0 %1896
      %v1898 = vsel %vm815, %v1890, -inf
      %1899 = vmax.xlane.f32.xlu0 %v1898
      %v1900 = vpop.xlane.xlu0 %1899
      %v1901 = vsel %vm815, %v1891, -inf
      %1902 = vmax.xlane.f32.xlu0 %v1901
      %v1903 = vpop.xlane.xlu0 %1902
      %v1904 = vsub.f32 %v1888, %v1894
      %v1905 = vsub.f32 %v1889, %v1897
      %v1906 = vsub.f32 %v1890, %v1900
      %v1907 = vsub.f32 %v1891, %v1903
      %v1908 = vmul.f32 %v1904, 1.442695
      %v1909 = vpow.pop %v1908
      %v1910 = vmul.f32 %v1905, 1.442695
      %v1911 = vpow.pop %v1910
      %v1912 = vmul.f32 %v1906, 1.442695
      %v1913 = vpow.pop %v1912
      %v1914 = vmul.f32 %v1907, 1.442695
      %v1915 = vpow.pop %v1914
      %v1916 = vsel %vm815, %v1909, 0.0
      %1917 = vadd.xlane.f32.xlu0 %v1916
      %v1918 = vpop.xlane.xlu0 %1917
      %v1919 = vsel %vm815, %v1911, 0.0
      %1920 = vadd.xlane.f32.xlu0 %v1919
      %v1921 = vpop.xlane.xlu0 %1920
      %v1922 = vsel %vm815, %v1913, 0.0
      %1923 = vadd.xlane.f32.xlu0 %v1922
      %v1924 = vpop.xlane.xlu0 %1923
      %v1925 = vsel %vm815, %v1915, 0.0
      %1926 = vadd.xlane.f32.xlu0 %v1925
      %v1927 = vpop.xlane.xlu0 %1926
      %v1928 = vrcp.pop %v1918
      %v1929 = vrcp.pop %v1921
      %v1930 = vrcp.pop %v1924
      %v1931 = vrcp.pop %v1927
      %v1932 = vmul.f32 %v1909, %v1928
      %v1933 = vmul.f32 %v1911, %v1929
      %v1934 = vmul.f32 %v1913, %v1930
      %v1935 = vmul.f32 %v1915, %v1931
      %1936 = vrot.lane.b32.xlu0 %v1208, 112
      %v1937 = vpop.permute.xlu0 %1936
      %1938 = vrot.lane.b32.xlu0 %v1213, 112
      %v1939 = vpop.permute.xlu0 %1938
      %1940 = vrot.lane.b32.xlu0 %v1218, 112
      %v1941 = vpop.permute.xlu0 %1940
      %1942 = vrot.lane.b32.xlu0 %v1223, 112
      %v1943 = vpop.permute.xlu0 %1942
      %v1949 = vsel %vm815, %v1932, 0
      %v1952 = vsel %vm815, %v1933, 0
      %v1955 = vsel %vm815, %v1934, 0
      %v1958 = vsel %vm815, %v1935, 0
      %1960 = vmatprep.subr.mxu0 0.0
      %1961 = vmatpush1.msra.mxu0 %v1937
      %1962 = vmatprep.subr.mxu0 0.0
      %1963 = vmatpush1.msra.mxu0 %v1939
      %1964 = vmatprep.subr.mxu0 0.0
      %1965 = vmatpush1.msra.mxu0 %v1941
      %1966 = vmatprep.subr.mxu0 0.0
      %1967 = vmatpush1.msra.mxu0 %v1943
      %1968 = vmatprep.subr.mxu0 0.0
      %1969 = vmatpush1.msra.mxu0 0.0
      %1970 = vmatprep.subr.mxu0 0.0
      %1971 = vmatpush1.msra.mxu0 0.0
      %1972 = vmatprep.subr.mxu0 0.0
      %1973 = vmatpush1.msra.mxu0 0.0
      %1974 = vmatprep.subr.mxu0 0.0
      %1975 = vmatpush1.msra.mxu0 0.0
      %1976 = vmatprep.subr.mxu0 0.0
      %1977 = vmatpush1.msra.mxu0 0.0
      %1978 = vmatprep.subr.mxu0 0.0
      %1979 = vmatpush1.msra.mxu0 0.0
      %1980 = vmatprep.subr.mxu0 0.0
      %1981 = vmatpush1.msra.mxu0 0.0
      %1982 = vmatprep.subr.mxu0 0.0
      %1983 = vmatpush1.msra.mxu0 0.0
      %1984 = vmatprep.subr.mxu0 0.0
      %1985 = vmatpush1.msra.mxu0 0.0
      %1986 = vmatprep.subr.mxu0 0.0
      %1987 = vmatpush1.msra.mxu0 0.0
      %1988 = vmatprep.subr.mxu0 0.0
      %1989 = vmatpush1.msra.mxu0 0.0
      %1990 = vmatprep.subr.mxu0 0.0
      %1991 = vmatpush1.msra.mxu0 0.0
      %1992 = vmatprep.subr.mxu0 0.0
      %1993 = vmatpush1.msra.mxu0 0.0
      %1994 = vmatprep.subr.mxu0 0.0
      %1995 = vmatpush1.msra.mxu0 0.0
      %1996 = vmatprep.subr.mxu0 0.0
      %1997 = vmatpush1.msra.mxu0 0.0
      %1998 = vmatprep.subr.mxu0 0.0
      %1999 = vmatpush1.msra.mxu0 0.0
      %2000 = vmatprep.subr.mxu0 0.0
      %2001 = vmatpush1.msra.mxu0 0.0
      %2002 = vmatprep.subr.mxu0 0.0
      %2003 = vmatpush1.msra.mxu0 0.0
      %2004 = vmatprep.subr.mxu0 0.0
      %2005 = vmatpush1.msra.mxu0 0.0
      %2006 = vmatprep.subr.mxu0 0.0
      %2007 = vmatpush1.msra.mxu0 0.0
      %2008 = vmatprep.subr.mxu0 0.0
      %2009 = vmatpush1.msra.mxu0 0.0
      %2010 = vmatprep.subr.mxu0 0.0
      %2011 = vmatpush1.msra.mxu0 0.0
      %2012 = vmatprep.subr.mxu0 0.0
      %2013 = vmatpush1.msra.mxu0 0.0
      %2014 = vmatprep.subr.mxu0 0.0
      %2015 = vmatpush1.msra.mxu0 0.0
      %2016 = vmatprep.subr.mxu0 0.0
      %2017 = vmatpush1.msra.mxu0 0.0
      %2018 = vmatprep.subr.mxu0 0.0
      %2019 = vmatpush1.msra.mxu0 0.0
      %2020 = vmatprep.subr.mxu0 0.0
      %2021 = vmatpush1.msra.mxu0 0.0
      %2022 = vmatprep.subr.mxu0 0.0
      %2023 = vmatpush1.msra.mxu0 0.0
      %2024 = vmatprep.mubr.f32.mxu0 0.0
      %2025 = vmatmul.mubr.f32.gmra.mrb[0].mxu0 %v1949
      %v2026 = vpop.f32.mrb[0].mxu0
      %v2027 = vadd.f32 0.0, %v2026
      %v2028 = vpop.f32.mrb[0].mxu0
      %2029 = vmatprep.mubr.f32.mxu0 0.0
      %2030 = vmatmul.mubr.f32.gmra.mrb[0].mxu0 %v1952
      %v2031 = vpop.f32.mrb[0].mxu0
      %v2032 = vadd.f32 0.0, %v2031
      %v2033 = vpop.f32.mrb[0].mxu0
      %2034 = vmatprep.mubr.f32.mxu0 0.0
      %2035 = vmatmul.mubr.f32.gmra.mrb[0].mxu0 %v1955
      %v2036 = vpop.f32.mrb[0].mxu0
      %v2037 = vadd.f32 0.0, %v2036
      %v2038 = vpop.f32.mrb[0].mxu0
      %2039 = vmatprep.mubr.f32.mxu0 0.0
      %2040 = vmatmul.mubr.f32.gmra.mrb[0].mxu0 %v1958
      %v2041 = vpop.f32.mrb[0].mxu0
      %v2042 = vadd.f32 0.0, %v2041
      %v2043 = vpop.f32.mrb[0].mxu0
      %2044 = vdwg.mxu0
      %2045 = vrot.lane.b32.xlu0 %v924, 104
      %v2046 = vpop.permute.xlu0 %2045
      %2047 = vrot.lane.b32.xlu0 %v929, 104
      %v2048 = vpop.permute.xlu0 %2047
      %2049 = vrot.lane.b32.xlu0 %v934, 104
      %v2050 = vpop.permute.xlu0 %2049
      %2051 = vrot.lane.b32.xlu0 %v939, 104
      %v2052 = vpop.permute.xlu0 %2051
      %2053 = vrot.lane.b32.xlu0 %v1104, 104
      %v2054 = vpop.permute.xlu0 %2053
      %2055 = vrot.lane.b32.xlu0 %v1109, 104
      %v2056 = vpop.permute.xlu0 %2055
      %2057 = vrot.lane.b32.xlu0 %v1114, 104
      %v2058 = vpop.permute.xlu0 %2057
      %2059 = vrot.lane.b32.xlu0 %v1119, 104
      %v2060 = vpop.permute.xlu0 %2059
      %v2061 = vsel %vm1226, %v2046, 0
      %v2063 = vsel %vm1226, %v2048, 0
      %v2065 = vsel %vm1226, %v2050, 0
      %v2067 = vsel %vm1226, %v2052, 0
      %v2069 = vsel %vm1226, %v2054, 0
      %v2071 = vsel %vm1226, %v2056, 0
      %v2073 = vsel %vm1226, %v2058, 0
      %v2075 = vsel %vm1226, %v2060, 0
      %2077 = vmatprep.subr.mxu0 0.0
      %2078 = vmatpush1.xpose.msra.mxu0 %v2069
      %2079 = vmatprep.subr.mxu0 0.0
      %2080 = vmatpush1.xpose.msra.mxu0 %v2071
      %2081 = vmatprep.subr.mxu0 0.0
      %2082 = vmatpush1.xpose.msra.mxu0 %v2073
      %2083 = vmatprep.subr.mxu0 0.0
      %2084 = vmatpush1.xpose.msra.mxu0 %v2075
      %2085 = vmatprep.subr.mxu0 0.0
      %2086 = vmatpush1.xpose.msra.mxu0 0.0
      %2087 = vmatprep.subr.mxu0 0.0
      %2088 = vmatpush1.xpose.msra.mxu0 0.0
      %2089 = vmatprep.subr.mxu0 0.0
      %2090 = vmatpush1.xpose.msra.mxu0 0.0
      %2091 = vmatprep.subr.mxu0 0.0
      %2092 = vmatpush1.xpose.msra.mxu0 0.0
      %2093 = vmatprep.subr.mxu0 0.0
      %2094 = vmatpush1.xpose.msra.mxu0 0.0
      %2095 = vmatprep.subr.mxu0 0.0
      %2096 = vmatpush1.xpose.msra.mxu0 0.0
      %2097 = vmatprep.subr.mxu0 0.0
      %2098 = vmatpush1.xpose.msra.mxu0 0.0
      %2099 = vmatprep.subr.mxu0 0.0
      %2100 = vmatpush1.xpose.msra.mxu0 0.0
      %2101 = vmatprep.subr.mxu0 0.0
      %2102 = vmatpush1.xpose.msra.mxu0 0.0
      %2103 = vmatprep.subr.mxu0 0.0
      %2104 = vmatpush1.xpose.msra.mxu0 0.0
      %2105 = vmatprep.subr.mxu0 0.0
      %2106 = vmatpush1.xpose.msra.mxu0 0.0
      %2107 = vmatprep.subr.mxu0 0.0
      %2108 = vmatpush1.xpose.msra.mxu0 0.0
      %2109 = vmatprep.subr.mxu0 0.0
      %2110 = vmatpush1.xpose.msra.mxu0 0.0
      %2111 = vmatprep.subr.mxu0 0.0
      %2112 = vmatpush1.xpose.msra.mxu0 0.0
      %2113 = vmatprep.subr.mxu0 0.0
      %2114 = vmatpush1.xpose.msra.mxu0 0.0
      %2115 = vmatprep.subr.mxu0 0.0
      %2116 = vmatpush1.xpose.msra.mxu0 0.0
      %2117 = vmatprep.subr.mxu0 0.0
      %2118 = vmatpush1.xpose.msra.mxu0 0.0
      %2119 = vmatprep.subr.mxu0 0.0
      %2120 = vmatpush1.xpose.msra.mxu0 0.0
      %2121 = vmatprep.subr.mxu0 0.0
      %2122 = vmatpush1.xpose.msra.mxu0 0.0
      %2123 = vmatprep.subr.mxu0 0.0
      %2124 = vmatpush1.xpose.msra.mxu0 0.0
      %2125 = vmatprep.subr.mxu0 0.0
      %2126 = vmatpush1.xpose.msra.mxu0 0.0
      %2127 = vmatprep.subr.mxu0 0.0
      %2128 = vmatpush1.xpose.msra.mxu0 0.0
      %2129 = vmatprep.subr.mxu0 0.0
      %2130 = vmatpush1.xpose.msra.mxu0 0.0
      %2131 = vmatprep.subr.mxu0 0.0
      %2132 = vmatpush1.xpose.msra.mxu0 0.0
      %2133 = vmatprep.subr.mxu0 0.0
      %2134 = vmatpush1.xpose.msra.mxu0 0.0
      %2135 = vmatprep.subr.mxu0 0.0
      %2136 = vmatpush1.xpose.msra.mxu0 0.0
      %2137 = vmatprep.subr.mxu0 0.0
      %2138 = vmatpush1.xpose.msra.mxu0 0.0
      %2139 = vmatprep.subr.mxu0 0.0
      %2140 = vmatpush1.xpose.msra.mxu0 0.0
      %2141 = vmatprep.mubr.f32.mxu0 0.0
      %2142 = vmatmul.mubr.f32.gmra.mrb[0].mxu0 %v2061
      %v2143 = vpop.f32.mrb[0].mxu0
      %v2144 = vadd.f32 0.0, %v2143
      %v2145 = vpop.f32.mrb[0].mxu0
      %2146 = vmatprep.mubr.f32.mxu0 0.0
      %2147 = vmatmul.mubr.f32.gmra.mrb[0].mxu0 %v2063
      %v2148 = vpop.f32.mrb[0].mxu0
      %v2149 = vadd.f32 0.0, %v2148
      %v2150 = vpop.f32.mrb[0].mxu0
      %2151 = vmatprep.mubr.f32.mxu0 0.0
      %2152 = vmatmul.mubr.f32.gmra.mrb[0].mxu0 %v2065
      %v2153 = vpop.f32.mrb[0].mxu0
      %v2154 = vadd.f32 0.0, %v2153
      %v2155 = vpop.f32.mrb[0].mxu0
      %2156 = vmatprep.mubr.f32.mxu0 0.0
      %2157 = vmatmul.mubr.f32.gmra.mrb[0].mxu0 %v2067
      %v2158 = vpop.f32.mrb[0].mxu0
      %v2159 = vadd.f32 0.0, %v2158
      %v2160 = vpop.f32.mrb[0].mxu0
      %2161 = vdwg.mxu0
      %v2162 = vmul.f32 %v2144, 0.35355338
      %v2163 = vmul.f32 %v2149, 0.35355338
      %v2164 = vmul.f32 %v2154, 0.35355338
      %v2165 = vmul.f32 %v2159, 0.35355338
      %v2166 = vadd.f32 %v2162, %v753
      %v2167 = vadd.f32 %v2163, %v754
      %v2168 = vadd.f32 %v2164, %v755
      %v2169 = vadd.f32 %v2165, %v756
      %v2170 = vsel %vm815, %v2166, -inf
      %2171 = vmax.xlane.f32.xlu0 %v2170
      %v2172 = vpop.xlane.xlu0 %2171
      %v2173 = vsel %vm815, %v2167, -inf
      %2174 = vmax.xlane.f32.xlu0 %v2173
      %v2175 = vpop.xlane.xlu0 %2174
      %v2176 = vsel %vm815, %v2168, -inf
      %2177 = vmax.xlane.f32.xlu0 %v2176
      %v2178 = vpop.xlane.xlu0 %2177
      %v2179 = vsel %vm815, %v2169, -inf
      %2180 = vmax.xlane.f32.xlu0 %v2179
      %v2181 = vpop.xlane.xlu0 %2180
      %v2182 = vsub.f32 %v2166, %v2172
      %v2183 = vsub.f32 %v2167, %v2175
      %v2184 = vsub.f32 %v2168, %v2178
      %v2185 = vsub.f32 %v2169, %v2181
      %v2186 = vmul.f32 %v2182, 1.442695
      %v2187 = vpow.pop %v2186
      %v2188 = vmul.f32 %v2183, 1.442695
      %v2189 = vpow.pop %v2188
      %v2190 = vmul.f32 %v2184, 1.442695
      %v2191 = vpow.pop %v2190
      %v2192 = vmul.f32 %v2185, 1.442695
      %v2193 = vpow.pop %v2192
      %v2194 = vsel %vm815, %v2187, 0.0
      %2195 = vadd.xlane.f32.xlu0 %v2194
      %v2196 = vpop.xlane.xlu0 %2195
      %v2197 = vsel %vm815, %v2189, 0.0
      %2198 = vadd.xlane.f32.xlu0 %v2197
      %v2199 = vpop.xlane.xlu0 %2198
      %v2200 = vsel %vm815, %v2191, 0.0
      %2201 = vadd.xlane.f32.xlu0 %v2200
      %v2202 = vpop.xlane.xlu0 %2201
      %v2203 = vsel %vm815, %v2193, 0.0
      %2204 = vadd.xlane.f32.xlu0 %v2203
      %v2205 = vpop.xlane.xlu0 %2204
      %v2206 = vrcp.pop %v2196
      %v2207 = vrcp.pop %v2199
      %v2208 = vrcp.pop %v2202
      %v2209 = vrcp.pop %v2205
      %v2210 = vmul.f32 %v2187, %v2206
      %v2211 = vmul.f32 %v2189, %v2207
      %v2212 = vmul.f32 %v2191, %v2208
      %v2213 = vmul.f32 %v2193, %v2209
      %2214 = vrot.lane.b32.xlu0 %v1208, 104
      %v2215 = vpop.permute.xlu0 %2214
      %2216 = vrot.lane.b32.xlu0 %v1213, 104
      %v2217 = vpop.permute.xlu0 %2216
      %2218 = vrot.lane.b32.xlu0 %v1218, 104
      %v2219 = vpop.permute.xlu0 %2218
      %2220 = vrot.lane.b32.xlu0 %v1223, 104
      %v2221 = vpop.permute.xlu0 %2220
      %v2227 = vsel %vm815, %v2210, 0
      %v2230 = vsel %vm815, %v2211, 0
      %v2233 = vsel %vm815, %v2212, 0
      %v2236 = vsel %vm815, %v2213, 0
      %2238 = vmatprep.subr.mxu0 0.0
      %2239 = vmatpush1.msra.mxu0 %v2215
      %2240 = vmatprep.subr.mxu0 0.0
      %2241 = vmatpush1.msra.mxu0 %v2217
      %2242 = vmatprep.subr.mxu0 0.0
      %2243 = vmatpush1.msra.mxu0 %v2219
      %2244 = vmatprep.subr.mxu0 0.0
      %2245 = vmatpush1.msra.mxu0 %v2221
      %2246 = vmatprep.subr.mxu0 0.0
      %2247 = vmatpush1.msra.mxu0 0.0
      %2248 = vmatprep.subr.mxu0 0.0
      %2249 = vmatpush1.msra.mxu0 0.0
      %2250 = vmatprep.subr.mxu0 0.0
      %2251 = vmatpush1.msra.mxu0 0.0
      %2252 = vmatprep.subr.mxu0 0.0
      %2253 = vmatpush1.msra.mxu0 0.0
      %2254 = vmatprep.subr.mxu0 0.0
      %2255 = vmatpush1.msra.mxu0 0.0
      %2256 = vmatprep.subr.mxu0 0.0
      %2257 = vmatpush1.msra.mxu0 0.0
      %2258 = vmatprep.subr.mxu0 0.0
      %2259 = vmatpush1.msra.mxu0 0.0
      %2260 = vmatprep.subr.mxu0 0.0
      %2261 = vmatpush1.msra.mxu0 0.0
      %2262 = vmatprep.subr.mxu0 0.0
      %2263 = vmatpush1.msra.mxu0 0.0
      %2264 = vmatprep.subr.mxu0 0.0
      %2265 = vmatpush1.msra.mxu0 0.0
      %2266 = vmatprep.subr.mxu0 0.0
      %2267 = vmatpush1.msra.mxu0 0.0
      %2268 = vmatprep.subr.mxu0 0.0
      %2269 = vmatpush1.msra.mxu0 0.0
      %2270 = vmatprep.subr.mxu0 0.0
      %2271 = vmatpush1.msra.mxu0 0.0
      %2272 = vmatprep.subr.mxu0 0.0
      %2273 = vmatpush1.msra.mxu0 0.0
      %2274 = vmatprep.subr.mxu0 0.0
      %2275 = vmatpush1.msra.mxu0 0.0
      %2276 = vmatprep.subr.mxu0 0.0
      %2277 = vmatpush1.msra.mxu0 0.0
      %2278 = vmatprep.subr.mxu0 0.0
      %2279 = vmatpush1.msra.mxu0 0.0
      %2280 = vmatprep.subr.mxu0 0.0
      %2281 = vmatpush1.msra.mxu0 0.0
      %2282 = vmatprep.subr.mxu0 0.0
      %2283 = vmatpush1.msra.mxu0 0.0
      %2284 = vmatprep.subr.mxu0 0.0
      %2285 = vmatpush1.msra.mxu0 0.0
      %2286 = vmatprep.subr.mxu0 0.0
      %2287 = vmatpush1.msra.mxu0 0.0
      %2288 = vmatprep.subr.mxu0 0.0
      %2289 = vmatpush1.msra.mxu0 0.0
      %2290 = vmatprep.subr.mxu0 0.0
      %2291 = vmatpush1.msra.mxu0 0.0
      %2292 = vmatprep.subr.mxu0 0.0
      %2293 = vmatpush1.msra.mxu0 0.0
      %2294 = vmatprep.subr.mxu0 0.0
      %2295 = vmatpush1.msra.mxu0 0.0
      %2296 = vmatprep.subr.mxu0 0.0
      %2297 = vmatpush1.msra.mxu0 0.0
      %2298 = vmatprep.subr.mxu0 0.0
      %2299 = vmatpush1.msra.mxu0 0.0
      %2300 = vmatprep.subr.mxu0 0.0
      %2301 = vmatpush1.msra.mxu0 0.0
      %2302 = vmatprep.mubr.f32.mxu0 0.0
      %2303 = vmatmul.mubr.f32.gmra.mrb[0].mxu0 %v2227
      %v2304 = vpop.f32.mrb[0].mxu0
      %v2305 = vadd.f32 0.0, %v2304
      %v2306 = vpop.f32.mrb[0].mxu0
      %2307 = vmatprep.mubr.f32.mxu0 0.0
      %2308 = vmatmul.mubr.f32.gmra.mrb[0].mxu0 %v2230
      %v2309 = vpop.f32.mrb[0].mxu0
      %v2310 = vadd.f32 0.0, %v2309
      %v2311 = vpop.f32.mrb[0].mxu0
      %2312 = vmatprep.mubr.f32.mxu0 0.0
      %2313 = vmatmul.mubr.f32.gmra.mrb[0].mxu0 %v2233
      %v2314 = vpop.f32.mrb[0].mxu0
      %v2315 = vadd.f32 0.0, %v2314
      %v2316 = vpop.f32.mrb[0].mxu0
      %2317 = vmatprep.mubr.f32.mxu0 0.0
      %2318 = vmatmul.mubr.f32.gmra.mrb[0].mxu0 %v2236
      %v2319 = vpop.f32.mrb[0].mxu0
      %v2320 = vadd.f32 0.0, %v2319
      %v2321 = vpop.f32.mrb[0].mxu0
      %2322 = vdwg.mxu0
      %2327 = vrot.lane.b32.xlu0 %v1749, 8
      %v2328 = vpop.permute.xlu0 %2327
      %2329 = vrot.lane.b32.xlu0 %v1754, 8
      %v2330 = vpop.permute.xlu0 %2329
      %2331 = vrot.lane.b32.xlu0 %v1759, 8
      %v2332 = vpop.permute.xlu0 %2331
      %2333 = vrot.lane.b32.xlu0 %v1764, 8
      %v2334 = vpop.permute.xlu0 %2333
      %2343 = vrot.lane.b32.xlu0 %v2027, 16
      %v2344 = vpop.permute.xlu0 %2343
      %2345 = vrot.lane.b32.xlu0 %v2032, 16
      %v2346 = vpop.permute.xlu0 %2345
      %2347 = vrot.lane.b32.xlu0 %v2037, 16
      %v2348 = vpop.permute.xlu0 %2347
      %2349 = vrot.lane.b32.xlu0 %v2042, 16
      %v2350 = vpop.permute.xlu0 %2349
      %2359 = vrot.lane.b32.xlu0 %v2305, 24
      %v2360 = vpop.permute.xlu0 %2359
      %2361 = vrot.lane.b32.xlu0 %v2310, 24
      %v2362 = vpop.permute.xlu0 %2361
      %2363 = vrot.lane.b32.xlu0 %v2315, 24
      %v2364 = vpop.permute.xlu0 %2363
      %2365 = vrot.lane.b32.xlu0 %v2320, 24
      %v2366 = vpop.permute.xlu0 %2365
      %v2371 = vsel %vm1226, %v1467, %v2328
      %v2372 = vsel %vm1226, %v1472, %v2330
      %v2373 = vsel %vm1226, %v1477, %v2332
      %v2374 = vsel %vm1226, %v1482, %v2334
      %vm2375 = vcmask 130048
      %v2376 = vsel %vm2375, %v2371, %v2344
      %v2377 = vsel %vm2375, %v2372, %v2346
      %v2378 = vsel %vm2375, %v2373, %v2348
      %v2379 = vsel %vm2375, %v2374, %v2350
      %vm2380 = vcmask 195584
      %v2381 = vsel %vm2380, %v2376, %v2360
      %v2382 = vsel %vm2380, %v2377, %v2362
      %v2383 = vsel %vm2380, %v2378, %v2364
      %v2384 = vsel %vm2380, %v2379, %v2366
      %v2385 = vld [vmem:[%s721] sm:$0xff]
      %v2386 = vld [vmem:[%s721 + $0x8] sm:$0xff]
      %v2387 = vld [vmem:[%s721 + $0x10] sm:$0xff]
      %v2388 = vld [vmem:[%s721 + $0x18] sm:$0xff]
      %v2389 = vld [vmem:[%s724] sm:$0x1]
      %v2391 = vlaneseq
      %v2392 = vshrl.u32 %v2391, 7
      %v2393 = vsub.s32 0, %v2392
      %v2394 = vrot.slane %v2389, %v2393
      %v2397 = vsel %vm815, %v2381, 0
      %v2400 = vsel %vm815, %v2382, 0
      %v2403 = vsel %vm815, %v2383, 0
      %v2406 = vsel %vm815, %v2384, 0
      %2408 = vmatprep.subr.mxu0 0.0
      %2409 = vmatpush1.msra.mxu0 %v2385
      %2410 = vmatprep.subr.mxu0 0.0
      %2411 = vmatpush1.msra.mxu0 %v2386
      %2412 = vmatprep.subr.mxu0 0.0
      %2413 = vmatpush1.msra.mxu0 %v2387
      %2414 = vmatprep.subr.mxu0 0.0
      %2415 = vmatpush1.msra.mxu0 %v2388
      %2416 = vmatprep.subr.mxu0 0.0
      %2417 = vmatpush1.msra.mxu0 0.0
      %2418 = vmatprep.subr.mxu0 0.0
      %2419 = vmatpush1.msra.mxu0 0.0
      %2420 = vmatprep.subr.mxu0 0.0
      %2421 = vmatpush1.msra.mxu0 0.0
      %2422 = vmatprep.subr.mxu0 0.0
      %2423 = vmatpush1.msra.mxu0 0.0
      %2424 = vmatprep.subr.mxu0 0.0
      %2425 = vmatpush1.msra.mxu0 0.0
      %2426 = vmatprep.subr.mxu0 0.0
      %2427 = vmatpush1.msra.mxu0 0.0
      %2428 = vmatprep.subr.mxu0 0.0
      %2429 = vmatpush1.msra.mxu0 0.0
      %2430 = vmatprep.subr.mxu0 0.0
      %2431 = vmatpush1.msra.mxu0 0.0
      %2432 = vmatprep.subr.mxu0 0.0
      %2433 = vmatpush1.msra.mxu0 0.0
      %2434 = vmatprep.subr.mxu0 0.0
      %2435 = vmatpush1.msra.mxu0 0.0
      %2436 = vmatprep.subr.mxu0 0.0
      %2437 = vmatpush1.msra.mxu0 0.0
      %2438 = vmatprep.subr.mxu0 0.0
      %2439 = vmatpush1.msra.mxu0 0.0
      %2440 = vmatprep.subr.mxu0 0.0
      %2441 = vmatpush1.msra.mxu0 0.0
      %2442 = vmatprep.subr.mxu0 0.0
      %2443 = vmatpush1.msra.mxu0 0.0
      %2444 = vmatprep.subr.mxu0 0.0
      %2445 = vmatpush1.msra.mxu0 0.0
      %2446 = vmatprep.subr.mxu0 0.0
      %2447 = vmatpush1.msra.mxu0 0.0
      %2448 = vmatprep.subr.mxu0 0.0
      %2449 = vmatpush1.msra.mxu0 0.0
      %2450 = vmatprep.subr.mxu0 0.0
      %2451 = vmatpush1.msra.mxu0 0.0
      %2452 = vmatprep.subr.mxu0 0.0
      %2453 = vmatpush1.msra.mxu0 0.0
      %2454 = vmatprep.subr.mxu0 0.0
      %2455 = vmatpush1.msra.mxu0 0.0
      %2456 = vmatprep.subr.mxu0 0.0
      %2457 = vmatpush1.msra.mxu0 0.0
      %2458 = vmatprep.subr.mxu0 0.0
      %2459 = vmatpush1.msra.mxu0 0.0
      %2460 = vmatprep.subr.mxu0 0.0
      %2461 = vmatpush1.msra.mxu0 0.0
      %2462 = vmatprep.subr.mxu0 0.0
      %2463 = vmatpush1.msra.mxu0 0.0
      %2464 = vmatprep.subr.mxu0 0.0
      %2465 = vmatpush1.msra.mxu0 0.0
      %2466 = vmatprep.subr.mxu0 0.0
      %2467 = vmatpush1.msra.mxu0 0.0
      %2468 = vmatprep.subr.mxu0 0.0
      %2469 = vmatpush1.msra.mxu0 0.0
      %2470 = vmatprep.subr.mxu0 0.0
      %2471 = vmatpush1.msra.mxu0 0.0
      %2472 = vmatprep.mubr.f32.mxu0 0.0
      %2473 = vmatmul.mubr.f32.gmra.mrb[0].mxu0 %v2397
      %v2474 = vpop.f32.mrb[0].mxu0
      %v2475 = vadd.f32 %v2394, %v2474
      %v2476 = vpop.f32.mrb[0].mxu0
      %2477 = vmatprep.mubr.f32.mxu0 0.0
      %2478 = vmatmul.mubr.f32.gmra.mrb[0].mxu0 %v2400
      %v2479 = vpop.f32.mrb[0].mxu0
      %v2480 = vadd.f32 %v2394, %v2479
      %v2481 = vpop.f32.mrb[0].mxu0
      %2482 = vmatprep.mubr.f32.mxu0 0.0
      %2483 = vmatmul.mubr.f32.gmra.mrb[0].mxu0 %v2403
      %v2484 = vpop.f32.mrb[0].mxu0
      %v2485 = vadd.f32 %v2394, %v2484
      %v2486 = vpop.f32.mrb[0].mxu0
      %2487 = vmatprep.mubr.f32.mxu0 0.0
      %2488 = vmatmul.mubr.f32.gmra.mrb[0].mxu0 %v2406
      %v2489 = vpop.f32.mrb[0].mxu0
      %v2490 = vadd.f32 %v2394, %v2489
      %v2491 = vpop.f32.mrb[0].mxu0
      %2492 = vdwg.mxu0
      %v2493 = vsel %vm815, %v2475, 0.0
      %2494 = vadd.xlane.f32.xlu0 %v2493
      %v2495 = vpop.xlane.xlu0 %2494
      %v2496 = vsel %vm815, %v2480, 0.0
      %2497 = vadd.xlane.f32.xlu0 %v2496
      %v2498 = vpop.xlane.xlu0 %2497
      %v2499 = vsel %vm815, %v2485, 0.0
      %2500 = vadd.xlane.f32.xlu0 %v2499
      %v2501 = vpop.xlane.xlu0 %2500
      %v2502 = vsel %vm815, %v2490, 0.0
      %2503 = vadd.xlane.f32.xlu0 %v2502
      %v2504 = vpop.xlane.xlu0 %2503
      %v2505 = vrcp.pop 32.0
      %v2506 = vmul.f32 %v2495, %v2505
      %v2507 = vmul.f32 %v2498, %v2505
      %v2508 = vmul.f32 %v2501, %v2505
      %v2509 = vmul.f32 %v2504, %v2505
      %v2510 = vsub.f32 %v2475, %v2506
      %v2511 = vsub.f32 %v2480, %v2507
      %v2512 = vsub.f32 %v2485, %v2508
      %v2513 = vsub.f32 %v2490, %v2509
      %v2514 = vmul.f32 %v2510, %v2510
      %v2515 = vmul.f32 %v2511, %v2511
      %v2516 = vmul.f32 %v2512, %v2512
      %v2517 = vmul.f32 %v2513, %v2513
      %v2518 = vsel %vm815, %v2514, 0.0
      %2519 = vadd.xlane.f32.xlu0 %v2518
      %v2520 = vpop.xlane.xlu0 %2519
      %v2521 = vsel %vm815, %v2515, 0.0
      %2522 = vadd.xlane.f32.xlu0 %v2521
      %v2523 = vpop.xlane.xlu0 %2522
      %v2524 = vsel %vm815, %v2516, 0.0
      %2525 = vadd.xlane.f32.xlu0 %v2524
      %v2526 = vpop.xlane.xlu0 %2525
      %v2527 = vsel %vm815, %v2517, 0.0
      %2528 = vadd.xlane.f32.xlu0 %v2527
      %v2529 = vpop.xlane.xlu0 %2528
      %v2530 = vmul.f32 %v2520, %v2505
      %v2531 = vmul.f32 %v2523, %v2505
      %v2532 = vmul.f32 %v2526, %v2505
      %v2533 = vmul.f32 %v2529, %v2505
      %v2534 = vadd.f32 %v2530, 1e-05
      %v2535 = vadd.f32 %v2531, 1e-05
      %v2536 = vadd.f32 %v2532, 1e-05
      %v2537 = vadd.f32 %v2533, 1e-05
      %v2538 = vrsqrt.pop %v2534
      %v2539 = vrsqrt.pop %v2535
      %v2540 = vrsqrt.pop %v2536
      %v2541 = vrsqrt.pop %v2537
      %v2542 = vmul.f32 %v2510, %v2538
      %v2543 = vmul.f32 %v2511, %v2539
      %v2544 = vmul.f32 %v2512, %v2540
      %v2545 = vmul.f32 %v2513, %v2541
      %v2546 = vld [vmem:[%s727] sm:$0x1]
      %v2548 = vlaneseq
      %v2549 = vshrl.u32 %v2548, 7
      %v2550 = vsub.s32 0, %v2549
      %v2551 = vrot.slane %v2546, %v2550
      %v2553 = vmul.f32 %v2542, %v2551
      %v2554 = vmul.f32 %v2543, %v2551
      %v2555 = vmul.f32 %v2544, %v2551
      %v2556 = vmul.f32 %v2545, %v2551
      %v2557 = vld [vmem:[%s730] sm:$0x1]
      %v2559 = vlaneseq
      %v2560 = vshrl.u32 %v2559, 7
      %v2561 = vsub.s32 0, %v2560
      %v2562 = vrot.slane %v2557, %v2561
      %v2564 = vadd.f32 %v2553, %v2562
      %v2565 = vadd.f32 %v2554, %v2562
      %v2566 = vadd.f32 %v2555, %v2562
      %v2567 = vadd.f32 %v2556, %v2562
      %2568 = vst.msk [vmem:[%s743] sm:$0xff] %vm815, %v2564
      %2569 = vst.msk [vmem:[%s743 + $0x8] sm:$0xff] %vm815, %v2565
      %2570 = vst.msk [vmem:[%s743 + $0x10] sm:$0xff] %vm815, %v2566
      %2571 = vst.msk [vmem:[%s743 + $0x18] sm:$0xff] %vm815, %v2567
      %s2572 = smul.u32 4, %s31
      %p2573 = scmp.lt.s32.totalorder %s29, 1
      %s2574 = scalar_select %p2573, %s29, 1
      %p2575 = scmp.lt.s32.totalorder %s30, 1
      %s2576 = scalar_select %p2575, %s30, 1
      %p2577 = scmp.lt.s32.totalorder %s2572, 3
      %s2578 = scalar_select %p2577, %s2572, 3
      %s2579 = smul.addr %s2576, 4
      %s2580 = sadd.s32 %s2578, %s2579
      %s2581 = smul.addr %s2574, 8
      %s2582 = sadd.s32 %s2580, %s2581
      %s2583 = smul.addr %s2582, 8
      %s2584 = scalar_lea.vmem %s13, %s2583
      // Predicated region
      $region73: #{decoder_forward.3} parent=71 // pred_check
        %p2585 = pneg %p411
      $region74: #{decoder_forward.3} parent=71 // pred_check_branch
        %2587 = sbr.rel (%p2585) target = $region76
      $region75: #{decoder_forward.3} parent=71 // pred_region
        %s2588 = smul.u32 4, %s31
      $region76: #{decoder_forward.3} parent=71 // pred_fallthru
        _
    $region72: #{decoder_forward.3} parent=5 // pred_fallthru
      _
    %p2589 = scmp.le.s32.totalorder 2, %s19
    // Predicated region
    $region77: #{decoder_forward.3} parent=5 // pred_check
      %p2590 = pneg %p2589
    $region78: #{decoder_forward.3} parent=5 // pred_check_branch
      %2592 = sbr.rel (%p2590) target = $region80
    $region79: #{decoder_forward.3} parent=5 // pred_region
      %s2593 = ssub.s32 %s19, 2
      // Predicated region
      $region81: #{decoder_forward.3} parent=79 // pred_check
        %p2594 = pneg %p417
      $region82: #{decoder_forward.3} parent=79 // pred_check_branch
        %2596 = sbr.rel (%p2594) target = $region84
      $region83: #{decoder_forward.3} parent=79 // pred_region
        %s2597 = smul.u32 4, %s34
        %p2598 = scmp.lt.s32.totalorder %s32, 1
        %s2599 = scalar_select %p2598, %s32, 1
        %p2600 = scmp.lt.s32.totalorder %s33, 1
        %s2601 = scalar_select %p2600, %s33, 1
        %p2602 = scmp.lt.s32.totalorder %s2597, 3
        %s2603 = scalar_select %p2602, %s2597, 3
        %s2604 = smul.addr %s2601, 4
        %s2605 = sadd.s32 %s2603, %s2604
        %s2606 = smul.addr %s2599, 8
        %s2607 = sadd.s32 %s2605, %s2606
        %s2608 = smul.addr %s2607, 8
        %s2609 = scalar_lea.vmem %s13, %s2608
      $region84: #{decoder_forward.3} parent=79 // pred_fallthru
        _
    $region80: #{decoder_forward.3} parent=5 // pred_fallthru
      _
  $region6: #{decoder_forward.3} parent=0 // loop_footer
    %s23 = sadd.s32 1, %s19
  $region7: #{decoder_forward.3} parent=0 // loop_footer_branch
    %18 = sbr.rel target = $region3
  $region8: #{decoder_forward.3} parent=0 // loop_exit
    _

</llo_original>
